<compile_context>
chip_gen: v6e
topology: v6e:2x2x1
jax: 0.10.0
libtpu: 0.0.40
codegen_flags: <defaults>
</compile_context>

<pallas_src>
import jax
import jax.numpy as jnp
import numpy as np
from jax.experimental import pallas as pl
from jax.experimental.pallas import tpu as pltpu

EPS = 1e-5      # nn.InstanceNorm2d default eps
LANES = 128     # TPU lane width; channels padded to a multiple of this


def _reflect_pad1(x):
    """ReflectionPad2d(1) of an (H, W, C) slab, built from register data."""
    H, W = x.shape[0], x.shape[1]
    xr = jnp.concatenate([x[1:2], x, x[H - 2:H - 1]], axis=0)              # (H+2, W, C)
    return jnp.concatenate([xr[:, 1:2], xr, xr[:, W - 2:W - 1]], axis=1)   # (H+2, W+2, C)


def _conv3x3_in(x_hwc, w_ref, b_ref, g_ref, be_ref):
    """reflect-pad(1) -> 3x3 conv -> instance-norm(affine) for one (H, W, C) slab.

    Conv is a single im2col matmul: (H*W, 9C) @ (9C, C), bf16 operands, f32 acc.
    Returns the normalized activation as an (H*W, C) f32 slab.
    """
    H, W, C = x_hwc.shape
    xp = _reflect_pad1(x_hwc.astype(jnp.bfloat16))                 # (H+2, W+2, C) bf16
    # im2col buffer: tap-major channel blocks, matching the (9*C, C) weight layout.
    cols = jnp.concatenate(
        [xp[di:di + H, dj:dj + W, :] for di in range(3) for dj in range(3)],
        axis=-1).reshape(H * W, 9 * C)
    y = jnp.dot(cols, w_ref[...], preferred_element_type=jnp.float32)     # (H*W, C) f32
    y = y + b_ref[...]                                                     # (1, C) bias
    # Instance norm: single sweep for sum / sum-of-squares (f32, clamped variance).
    inv_n = 1.0 / float(H * W)
    mean = jnp.sum(y, axis=0, keepdims=True) * inv_n
    var = jnp.maximum(jnp.sum(y * y, axis=0, keepdims=True) * inv_n - mean * mean, 0.0)
    y = (y - mean) * jax.lax.rsqrt(var + EPS)
    return y * g_ref[...] + be_ref[...]


def _resblock_kernel(x_ref, w1_ref, b1_ref, g1_ref, be1_ref,
                     w2_ref, b2_ref, g2_ref, be2_ref, o_ref):
    _, H, W, C = x_ref.shape
    x = x_ref[0]                                                   # (H, W, C) f32 residual
    y = _conv3x3_in(x, w1_ref, b1_ref, g1_ref, be1_ref)
    y = jnp.maximum(y, 0.0)                                        # ReLU
    y = _conv3x3_in(y.reshape(H, W, C), w2_ref, b2_ref, g2_ref, be2_ref)
    o_ref[0] = (y.reshape(H, W, C) + x).astype(o_ref.dtype)


def residual_block(x_nchw, w1_oihw, b1, g1, be1, w2_oihw, b2, g2, be2):
    """ResidualBlock forward. Takes/returns PyTorch NCHW; weights are OIHW."""
    B, C, H, W = x_nchw.shape
    Cp = ((C + LANES - 1) // LANES) * LANES   # lane-dense channel count

    def pad_c(a, axes):
        widths = [(0, 0)] * a.ndim
        for ax in axes:
            widths[ax] = (0, Cp - a.shape[ax])
        return jnp.pad(a, widths)

    # NCHW -> NHWC (channels on lanes), zero-pad channels to a lane multiple.
    # Padded channels have zero weights/bias/gamma/beta, so they stay exactly 0
    # through conv, instance norm and the residual add and are sliced off below.
    x_nhwc = pad_c(jnp.transpose(x_nchw, (0, 2, 3, 1)), (3,)).astype(jnp.float32)

    def prep_w(w_oihw):
        w_hwio = jnp.transpose(w_oihw, (2, 3, 1, 0))         # (3, 3, Cin, Cout)
        w_hwio = pad_c(w_hwio, (2, 3))                       # (3, 3, Cp, Cp)
        return w_hwio.reshape(9 * Cp, Cp).astype(jnp.bfloat16)

    def prep_p(p):
        return pad_c(p.reshape(1, C), (1,)).astype(jnp.float32)

    w1_k, w2_k = prep_w(w1_oihw), prep_w(w2_oihw)
    b1_k, g1_k, be1_k = prep_p(b1), prep_p(g1), prep_p(be1)
    b2_k, g2_k, be2_k = prep_p(b2), prep_p(g2), prep_p(be2)

    act_spec = pl.BlockSpec((1, H, W, Cp), lambda b: (b, 0, 0, 0))
    w_spec = pl.BlockSpec((9 * Cp, Cp), lambda b: (0, 0))     # grid-constant block
    p_spec = pl.BlockSpec((1, Cp), lambda b: (0, 0))          # grid-constant block

    out = pl.pallas_call(
        _resblock_kernel,
        out_shape=jax.ShapeDtypeStruct((B, H, W, Cp), jnp.float32),
        grid_spec=pltpu.PrefetchScalarGridSpec(
            num_scalar_prefetch=0,
            grid=(B,),
            in_specs=[act_spec,
                      w_spec, p_spec, p_spec, p_spec,
                      w_spec, p_spec, p_spec, p_spec],
            out_specs=act_spec,
        ),
        compiler_params=pltpu.CompilerParams(
            dimension_semantics=("parallel",),          # batch elems are independent
            vmem_limit_bytes=48 * 1024 * 1024,
        ),
    )(x_nhwc, w1_k, b1_k, g1_k, be1_k, w2_k, b2_k, g2_k, be2_k)

    # Drop channel padding, back to PyTorch NCHW layout.
    return jnp.transpose(out[..., :C], (0, 3, 1, 2))


def _reference(x_nchw, w1_oihw, b1, g1, be1, w2_oihw, b2, g2, be2):
    """Pure-JAX f32 reference of the PyTorch forward pass."""
    x = jnp.transpose(x_nchw, (0, 2, 3, 1))  # NHWC

    def pad(t):
        return jnp.pad(t, ((0, 0), (1, 1), (1, 1), (0, 0)), mode="reflect")

    def conv(t, w_oihw, b):
        w = jnp.transpose(w_oihw, (2, 3, 1, 0))
        y = jax.lax.conv_general_dilated(
            t, w, (1, 1), "VALID",
            dimension_numbers=("NHWC", "HWIO", "NHWC"))
        return y + b.reshape(1, 1, 1, -1)

    def inorm(t, g, be):
        m = jnp.mean(t, axis=(1, 2), keepdims=True)
        v = jnp.mean(jnp.square(t - m), axis=(1, 2), keepdims=True)
        return ((t - m) * jax.lax.rsqrt(v + EPS)
                * g.reshape(1, 1, 1, -1) + be.reshape(1, 1, 1, -1))

    y = jax.nn.relu(inorm(conv(pad(x), w1_oihw, b1), g1, be1))
    y = inorm(conv(pad(y), w2_oihw, b2), g2, be2)
    return jnp.transpose(y + x, (0, 3, 1, 2))


if __name__ == "__main__":
    B, C, H, W = 2, 4, 16, 16

    key = jax.random.PRNGKey(0)
    ks = jax.random.split(key, 9)
    # PyTorch-style NCHW input and OIHW conv weights.
    x = jax.random.normal(ks[0], (B, C, H, W), jnp.float32)
    w1 = 0.1 * jax.random.normal(ks[1], (C, C, 3, 3), jnp.float32)
    b1 = 0.1 * jax.random.normal(ks[2], (C,), jnp.float32)
    g1 = 1.0 + 0.1 * jax.random.normal(ks[3], (C,), jnp.float32)
    be1 = 0.1 * jax.random.normal(ks[4], (C,), jnp.float32)
    w2 = 0.1 * jax.random.normal(ks[5], (C, C, 3, 3), jnp.float32)
    b2 = 0.1 * jax.random.normal(ks[6], (C,), jnp.float32)
    g2 = 1.0 + 0.1 * jax.random.normal(ks[7], (C,), jnp.float32)
    be2 = 0.1 * jax.random.normal(ks[8], (C,), jnp.float32)

    out = residual_block(x, w1, b1, g1, be1, w2, b2, g2, be2)
    out = jax.block_until_ready(out)

    ref = _reference(x, w1, b1, g1, be1, w2, b2, g2, be2)
    # bf16 MXU operands (f32 accumulation) -> loosen tolerance vs. the f32 reference.
    np.testing.assert_allclose(np.asarray(out), np.asarray(ref), rtol=5e-2, atol=5e-2)
    assert out.shape == (B, C, H, W)

    print("KERNEL_OK")
</pallas_src>

<mosaic_0001>
module attributes {stable_mosaic.version = 11 : i64} {
  func.func @_resblock_kernel(%arg0: i32, %arg1: memref<1x16x16x128xf32, #tpu.memory_space<vmem>>, %arg2: memref<1152x128xbf16, #tpu.memory_space<vmem>>, %arg3: memref<1x128xf32, #tpu.memory_space<vmem>>, %arg4: memref<1x128xf32, #tpu.memory_space<vmem>>, %arg5: memref<1x128xf32, #tpu.memory_space<vmem>>, %arg6: memref<1152x128xbf16, #tpu.memory_space<vmem>>, %arg7: memref<1x128xf32, #tpu.memory_space<vmem>>, %arg8: memref<1x128xf32, #tpu.memory_space<vmem>>, %arg9: memref<1x128xf32, #tpu.memory_space<vmem>>, %arg10: memref<1x16x16x128xf32, #tpu.memory_space<vmem>>) attributes {dimension_semantics = [#tpu.dimension_semantics<parallel>], iteration_bounds = array<i64: 2>, scalar_prefetch = 0 : i64, scratch_operands = 0 : i64, tpu.core_type = #tpu.core_type<tc>, window_params = [{transform_indices = @transform_0, window_bounds = array<i64: 1, 16, 16, 128>}, {pipeline_mode = #tpu.pipeline_mode<synchronous>, transform_indices = @transform_1, window_bounds = array<i64: 1152, 128>}, {pipeline_mode = #tpu.pipeline_mode<synchronous>, transform_indices = @transform_2, window_bounds = array<i64: 1, 128>}, {pipeline_mode = #tpu.pipeline_mode<synchronous>, transform_indices = @transform_3, window_bounds = array<i64: 1, 128>}, {pipeline_mode = #tpu.pipeline_mode<synchronous>, transform_indices = @transform_4, window_bounds = array<i64: 1, 128>}, {pipeline_mode = #tpu.pipeline_mode<synchronous>, transform_indices = @transform_5, window_bounds = array<i64: 1152, 128>}, {pipeline_mode = #tpu.pipeline_mode<synchronous>, transform_indices = @transform_6, window_bounds = array<i64: 1, 128>}, {pipeline_mode = #tpu.pipeline_mode<synchronous>, transform_indices = @transform_7, window_bounds = array<i64: 1, 128>}, {pipeline_mode = #tpu.pipeline_mode<synchronous>, transform_indices = @transform_8, window_bounds = array<i64: 1, 128>}, {transform_indices = @transform_9, window_bounds = array<i64: 1, 16, 16, 128>}]} {
    %c0 = arith.constant 0 : index
    %c0_0 = arith.constant 0 : index
    %c0_1 = arith.constant 0 : index
    %c0_2 = arith.constant 0 : index
    %0 = vector.load %arg1[%c0, %c0_0, %c0_1, %c0_2] : memref<1x16x16x128xf32, #tpu.memory_space<vmem>>, vector<1x16x16x128xf32>
    %1 = vector.shape_cast %0 : vector<1x16x16x128xf32> to vector<16x16x128xf32>
    %2 = arith.truncf %1 : vector<16x16x128xf32> to vector<16x16x128xbf16>
    %3 = vector.extract_strided_slice %2 {offsets = [1, 0, 0], sizes = [1, 16, 128], strides = [1, 1, 1]} : vector<16x16x128xbf16> to vector<1x16x128xbf16>
    %4 = vector.extract_strided_slice %2 {offsets = [14, 0, 0], sizes = [1, 16, 128], strides = [1, 1, 1]} : vector<16x16x128xbf16> to vector<1x16x128xbf16>
    %5 = tpu.concatenate %3, %2, %4 in 0 : vector<1x16x128xbf16>, vector<16x16x128xbf16>, vector<1x16x128xbf16> -> vector<18x16x128xbf16>
    %6 = vector.extract_strided_slice %5 {offsets = [0, 1, 0], sizes = [18, 1, 128], strides = [1, 1, 1]} : vector<18x16x128xbf16> to vector<18x1x128xbf16>
    %7 = vector.extract_strided_slice %5 {offsets = [0, 14, 0], sizes = [18, 1, 128], strides = [1, 1, 1]} : vector<18x16x128xbf16> to vector<18x1x128xbf16>
    %8 = tpu.concatenate %6, %5, %7 in 1 : vector<18x1x128xbf16>, vector<18x16x128xbf16>, vector<18x1x128xbf16> -> vector<18x18x128xbf16>
    %9 = vector.extract_strided_slice %8 {offsets = [0, 0, 0], sizes = [16, 16, 128], strides = [1, 1, 1]} : vector<18x18x128xbf16> to vector<16x16x128xbf16>
    %10 = vector.extract_strided_slice %8 {offsets = [0, 1, 0], sizes = [16, 16, 128], strides = [1, 1, 1]} : vector<18x18x128xbf16> to vector<16x16x128xbf16>
    %11 = vector.extract_strided_slice %8 {offsets = [0, 2, 0], sizes = [16, 16, 128], strides = [1, 1, 1]} : vector<18x18x128xbf16> to vector<16x16x128xbf16>
    %12 = vector.extract_strided_slice %8 {offsets = [1, 0, 0], sizes = [16, 16, 128], strides = [1, 1, 1]} : vector<18x18x128xbf16> to vector<16x16x128xbf16>
    %13 = vector.extract_strided_slice %8 {offsets = [1, 1, 0], sizes = [16, 16, 128], strides = [1, 1, 1]} : vector<18x18x128xbf16> to vector<16x16x128xbf16>
    %14 = vector.extract_strided_slice %8 {offsets = [1, 2, 0], sizes = [16, 16, 128], strides = [1, 1, 1]} : vector<18x18x128xbf16> to vector<16x16x128xbf16>
    %15 = vector.extract_strided_slice %8 {offsets = [2, 0, 0], sizes = [16, 16, 128], strides = [1, 1, 1]} : vector<18x18x128xbf16> to vector<16x16x128xbf16>
    %16 = vector.extract_strided_slice %8 {offsets = [2, 1, 0], sizes = [16, 16, 128], strides = [1, 1, 1]} : vector<18x18x128xbf16> to vector<16x16x128xbf16>
    %17 = vector.extract_strided_slice %8 {offsets = [2, 2, 0], sizes = [16, 16, 128], strides = [1, 1, 1]} : vector<18x18x128xbf16> to vector<16x16x128xbf16>
    %18 = tpu.concatenate %9, %10, %11, %12, %13, %14, %15, %16, %17 in 2 : vector<16x16x128xbf16>, vector<16x16x128xbf16>, vector<16x16x128xbf16>, vector<16x16x128xbf16>, vector<16x16x128xbf16>, vector<16x16x128xbf16>, vector<16x16x128xbf16>, vector<16x16x128xbf16>, vector<16x16x128xbf16> -> vector<16x16x1152xbf16>
    %19 = vector.shape_cast %18 : vector<16x16x1152xbf16> to vector<256x1152xbf16>
    %c0_3 = arith.constant 0 : index
    %c0_4 = arith.constant 0 : index
    %20 = vector.load %arg2[%c0_3, %c0_4] : memref<1152x128xbf16, #tpu.memory_space<vmem>>, vector<1152x128xbf16>
    %cst = arith.constant dense<0.000000e+00> : vector<256x128xf32>
    %21 = tpu.matmul %19, %20, %cst {dimension_numbers = #tpu.dot_dimension_numbers<[1], [0], [0], [1], [0, 0, 1, 1], [], []>} : vector<256x1152xbf16>, vector<1152x128xbf16>, vector<256x128xf32> -> vector<256x128xf32>
    %c0_5 = arith.constant 0 : index
    %c0_6 = arith.constant 0 : index
    %22 = vector.load %arg3[%c0_5, %c0_6] : memref<1x128xf32, #tpu.memory_space<vmem>>, vector<1x128xf32>
    %23 = vector.broadcast %22 : vector<1x128xf32> to vector<256x128xf32>
    %24 = arith.addf %21, %23 : vector<256x128xf32>
    %cst_7 = arith.constant dense<0.000000e+00> : vector<128xf32>
    %25 = vector.multi_reduction <add>, %24, %cst_7 [0] : vector<256x128xf32> to vector<128xf32>
    %26 = vector.shape_cast %25 : vector<128xf32> to vector<1x128xf32>
    %cst_8 = arith.constant 3.906250e-03 : f32
    %27 = vector.broadcast %cst_8 : f32 to vector<1x128xf32>
    %28 = arith.mulf %26, %27 : vector<1x128xf32>
    %29 = arith.mulf %24, %24 : vector<256x128xf32>
    %cst_9 = arith.constant dense<0.000000e+00> : vector<128xf32>
    %30 = vector.multi_reduction <add>, %29, %cst_9 [0] : vector<256x128xf32> to vector<128xf32>
    %31 = vector.shape_cast %30 : vector<128xf32> to vector<1x128xf32>
    %cst_10 = arith.constant 3.906250e-03 : f32
    %32 = vector.broadcast %cst_10 : f32 to vector<1x128xf32>
    %33 = arith.mulf %31, %32 : vector<1x128xf32>
    %34 = arith.mulf %28, %28 : vector<1x128xf32>
    %35 = arith.subf %33, %34 : vector<1x128xf32>
    %cst_11 = arith.constant 0.000000e+00 : f32
    %36 = vector.broadcast %cst_11 : f32 to vector<1x128xf32>
    %37 = arith.maximumf %35, %36 : vector<1x128xf32>
    %38 = vector.broadcast %28 : vector<1x128xf32> to vector<256x128xf32>
    %39 = arith.subf %24, %38 : vector<256x128xf32>
    %cst_12 = arith.constant 9.99999974E-6 : f32
    %40 = vector.broadcast %cst_12 : f32 to vector<1x128xf32>
    %41 = arith.addf %37, %40 : vector<1x128xf32>
    %42 = math.rsqrt %41 : vector<1x128xf32>
    %43 = vector.broadcast %42 : vector<1x128xf32> to vector<256x128xf32>
    %44 = arith.mulf %39, %43 : vector<256x128xf32>
    %c0_13 = arith.constant 0 : index
    %c0_14 = arith.constant 0 : index
    %45 = vector.load %arg4[%c0_13, %c0_14] : memref<1x128xf32, #tpu.memory_space<vmem>>, vector<1x128xf32>
    %46 = vector.broadcast %45 : vector<1x128xf32> to vector<256x128xf32>
    %47 = arith.mulf %44, %46 : vector<256x128xf32>
    %c0_15 = arith.constant 0 : index
    %c0_16 = arith.constant 0 : index
    %48 = vector.load %arg5[%c0_15, %c0_16] : memref<1x128xf32, #tpu.memory_space<vmem>>, vector<1x128xf32>
    %49 = vector.broadcast %48 : vector<1x128xf32> to vector<256x128xf32>
    %50 = arith.addf %47, %49 : vector<256x128xf32>
    %cst_17 = arith.constant 0.000000e+00 : f32
    %51 = vector.broadcast %cst_17 : f32 to vector<256x128xf32>
    %52 = arith.maximumf %50, %51 : vector<256x128xf32>
    %53 = vector.shape_cast %52 : vector<256x128xf32> to vector<16x16x128xf32>
    %54 = arith.truncf %53 : vector<16x16x128xf32> to vector<16x16x128xbf16>
    %55 = vector.extract_strided_slice %54 {offsets = [1, 0, 0], sizes = [1, 16, 128], strides = [1, 1, 1]} : vector<16x16x128xbf16> to vector<1x16x128xbf16>
    %56 = vector.extract_strided_slice %54 {offsets = [14, 0, 0], sizes = [1, 16, 128], strides = [1, 1, 1]} : vector<16x16x128xbf16> to vector<1x16x128xbf16>
    %57 = tpu.concatenate %55, %54, %56 in 0 : vector<1x16x128xbf16>, vector<16x16x128xbf16>, vector<1x16x128xbf16> -> vector<18x16x128xbf16>
    %58 = vector.extract_strided_slice %57 {offsets = [0, 1, 0], sizes = [18, 1, 128], strides = [1, 1, 1]} : vector<18x16x128xbf16> to vector<18x1x128xbf16>
    %59 = vector.extract_strided_slice %57 {offsets = [0, 14, 0], sizes = [18, 1, 128], strides = [1, 1, 1]} : vector<18x16x128xbf16> to vector<18x1x128xbf16>
    %60 = tpu.concatenate %58, %57, %59 in 1 : vector<18x1x128xbf16>, vector<18x16x128xbf16>, vector<18x1x128xbf16> -> vector<18x18x128xbf16>
    %61 = vector.extract_strided_slice %60 {offsets = [0, 0, 0], sizes = [16, 16, 128], strides = [1, 1, 1]} : vector<18x18x128xbf16> to vector<16x16x128xbf16>
    %62 = vector.extract_strided_slice %60 {offsets = [0, 1, 0], sizes = [16, 16, 128], strides = [1, 1, 1]} : vector<18x18x128xbf16> to vector<16x16x128xbf16>
    %63 = vector.extract_strided_slice %60 {offsets = [0, 2, 0], sizes = [16, 16, 128], strides = [1, 1, 1]} : vector<18x18x128xbf16> to vector<16x16x128xbf16>
    %64 = vector.extract_strided_slice %60 {offsets = [1, 0, 0], sizes = [16, 16, 128], strides = [1, 1, 1]} : vector<18x18x128xbf16> to vector<16x16x128xbf16>
    %65 = vector.extract_strided_slice %60 {offsets = [1, 1, 0], sizes = [16, 16, 128], strides = [1, 1, 1]} : vector<18x18x128xbf16> to vector<16x16x128xbf16>
    %66 = vector.extract_strided_slice %60 {offsets = [1, 2, 0], sizes = [16, 16, 128], strides = [1, 1, 1]} : vector<18x18x128xbf16> to vector<16x16x128xbf16>
    %67 = vector.extract_strided_slice %60 {offsets = [2, 0, 0], sizes = [16, 16, 128], strides = [1, 1, 1]} : vector<18x18x128xbf16> to vector<16x16x128xbf16>
    %68 = vector.extract_strided_slice %60 {offsets = [2, 1, 0], sizes = [16, 16, 128], strides = [1, 1, 1]} : vector<18x18x128xbf16> to vector<16x16x128xbf16>
    %69 = vector.extract_strided_slice %60 {offsets = [2, 2, 0], sizes = [16, 16, 128], strides = [1, 1, 1]} : vector<18x18x128xbf16> to vector<16x16x128xbf16>
    %70 = tpu.concatenate %61, %62, %63, %64, %65, %66, %67, %68, %69 in 2 : vector<16x16x128xbf16>, vector<16x16x128xbf16>, vector<16x16x128xbf16>, vector<16x16x128xbf16>, vector<16x16x128xbf16>, vector<16x16x128xbf16>, vector<16x16x128xbf16>, vector<16x16x128xbf16>, vector<16x16x128xbf16> -> vector<16x16x1152xbf16>
    %71 = vector.shape_cast %70 : vector<16x16x1152xbf16> to vector<256x1152xbf16>
    %c0_18 = arith.constant 0 : index
    %c0_19 = arith.constant 0 : index
    %72 = vector.load %arg6[%c0_18, %c0_19] : memref<1152x128xbf16, #tpu.memory_space<vmem>>, vector<1152x128xbf16>
    %cst_20 = arith.constant dense<0.000000e+00> : vector<256x128xf32>
    %73 = tpu.matmul %71, %72, %cst_20 {dimension_numbers = #tpu.dot_dimension_numbers<[1], [0], [0], [1], [0, 0, 1, 1], [], []>} : vector<256x1152xbf16>, vector<1152x128xbf16>, vector<256x128xf32> -> vector<256x128xf32>
    %c0_21 = arith.constant 0 : index
    %c0_22 = arith.constant 0 : index
    %74 = vector.load %arg7[%c0_21, %c0_22] : memref<1x128xf32, #tpu.memory_space<vmem>>, vector<1x128xf32>
    %75 = vector.broadcast %74 : vector<1x128xf32> to vector<256x128xf32>
    %76 = arith.addf %73, %75 : vector<256x128xf32>
    %cst_23 = arith.constant dense<0.000000e+00> : vector<128xf32>
    %77 = vector.multi_reduction <add>, %76, %cst_23 [0] : vector<256x128xf32> to vector<128xf32>
    %78 = vector.shape_cast %77 : vector<128xf32> to vector<1x128xf32>
    %cst_24 = arith.constant 3.906250e-03 : f32
    %79 = vector.broadcast %cst_24 : f32 to vector<1x128xf32>
    %80 = arith.mulf %78, %79 : vector<1x128xf32>
    %81 = arith.mulf %76, %76 : vector<256x128xf32>
    %cst_25 = arith.constant dense<0.000000e+00> : vector<128xf32>
    %82 = vector.multi_reduction <add>, %81, %cst_25 [0] : vector<256x128xf32> to vector<128xf32>
    %83 = vector.shape_cast %82 : vector<128xf32> to vector<1x128xf32>
    %cst_26 = arith.constant 3.906250e-03 : f32
    %84 = vector.broadcast %cst_26 : f32 to vector<1x128xf32>
    %85 = arith.mulf %83, %84 : vector<1x128xf32>
    %86 = arith.mulf %80, %80 : vector<1x128xf32>
    %87 = arith.subf %85, %86 : vector<1x128xf32>
    %cst_27 = arith.constant 0.000000e+00 : f32
    %88 = vector.broadcast %cst_27 : f32 to vector<1x128xf32>
    %89 = arith.maximumf %87, %88 : vector<1x128xf32>
    %90 = vector.broadcast %80 : vector<1x128xf32> to vector<256x128xf32>
    %91 = arith.subf %76, %90 : vector<256x128xf32>
    %cst_28 = arith.constant 9.99999974E-6 : f32
    %92 = vector.broadcast %cst_28 : f32 to vector<1x128xf32>
    %93 = arith.addf %89, %92 : vector<1x128xf32>
    %94 = math.rsqrt %93 : vector<1x128xf32>
    %95 = vector.broadcast %94 : vector<1x128xf32> to vector<256x128xf32>
    %96 = arith.mulf %91, %95 : vector<256x128xf32>
    %c0_29 = arith.constant 0 : index
    %c0_30 = arith.constant 0 : index
    %97 = vector.load %arg8[%c0_29, %c0_30] : memref<1x128xf32, #tpu.memory_space<vmem>>, vector<1x128xf32>
    %98 = vector.broadcast %97 : vector<1x128xf32> to vector<256x128xf32>
    %99 = arith.mulf %96, %98 : vector<256x128xf32>
    %c0_31 = arith.constant 0 : index
    %c0_32 = arith.constant 0 : index
    %100 = vector.load %arg9[%c0_31, %c0_32] : memref<1x128xf32, #tpu.memory_space<vmem>>, vector<1x128xf32>
    %101 = vector.broadcast %100 : vector<1x128xf32> to vector<256x128xf32>
    %102 = arith.addf %99, %101 : vector<256x128xf32>
    %103 = vector.shape_cast %102 : vector<256x128xf32> to vector<16x16x128xf32>
    %104 = arith.addf %103, %1 : vector<16x16x128xf32>
    %c0_33 = arith.constant 0 : index
    %c0_34 = arith.constant 0 : index
    %c0_35 = arith.constant 0 : index
    %c0_36 = arith.constant 0 : index
    %105 = vector.load %arg10[%c0_33, %c0_34, %c0_35, %c0_36] : memref<1x16x16x128xf32, #tpu.memory_space<vmem>>, vector<1x16x16x128xf32>
    %106 = vector.shape_cast %105 : vector<1x16x16x128xf32> to vector<16x16x128xf32>
    %107 = vector.shape_cast %104 : vector<16x16x128xf32> to vector<1x16x16x128xf32>
    tpu.vector_store %arg10[%c0_33, %c0_34, %c0_35, %c0_36], %107 {strides = array<i32>} : memref<1x16x16x128xf32, #tpu.memory_space<vmem>>, vector<1x16x16x128xf32>,
    return
  }
  func.func @transform_0(%arg0: i32) -> (i32, i32, i32, i32) {
    %c0_i32 = arith.constant 0 : i32
    %c0_i32_0 = arith.constant 0 : i32
    %c0_i32_1 = arith.constant 0 : i32
    %c0_i32_2 = arith.constant 0 : i32
    return %arg0, %c0_i32, %c0_i32_0, %c0_i32_1 : i32, i32, i32, i32
  }
  func.func @transform_1(%arg0: i32) -> (i32, i32) {
    %c0_i32 = arith.constant 0 : i32
    %c0_i32_0 = arith.constant 0 : i32
    %c0_i32_1 = arith.constant 0 : i32
    return %c0_i32, %c0_i32_0 : i32, i32
  }
  func.func @transform_2(%arg0: i32) -> (i32, i32) {
    %c0_i32 = arith.constant 0 : i32
    %c0_i32_0 = arith.constant 0 : i32
    %c0_i32_1 = arith.constant 0 : i32
    return %c0_i32, %c0_i32_0 : i32, i32
  }
  func.func @transform_3(%arg0: i32) -> (i32, i32) {
    %c0_i32 = arith.constant 0 : i32
    %c0_i32_0 = arith.constant 0 : i32
    %c0_i32_1 = arith.constant 0 : i32
    return %c0_i32, %c0_i32_0 : i32, i32
  }
  func.func @transform_4(%arg0: i32) -> (i32, i32) {
    %c0_i32 = arith.constant 0 : i32
    %c0_i32_0 = arith.constant 0 : i32
    %c0_i32_1 = arith.constant 0 : i32
    return %c0_i32, %c0_i32_0 : i32, i32
  }
  func.func @transform_5(%arg0: i32) -> (i32, i32) {
    %c0_i32 = arith.constant 0 : i32
    %c0_i32_0 = arith.constant 0 : i32
    %c0_i32_1 = arith.constant 0 : i32
    return %c0_i32, %c0_i32_0 : i32, i32
  }
  func.func @transform_6(%arg0: i32) -> (i32, i32) {
    %c0_i32 = arith.constant 0 : i32
    %c0_i32_0 = arith.constant 0 : i32
    %c0_i32_1 = arith.constant 0 : i32
    return %c0_i32, %c0_i32_0 : i32, i32
  }
  func.func @transform_7(%arg0: i32) -> (i32, i32) {
    %c0_i32 = arith.constant 0 : i32
    %c0_i32_0 = arith.constant 0 : i32
    %c0_i32_1 = arith.constant 0 : i32
    return %c0_i32, %c0_i32_0 : i32, i32
  }
  func.func @transform_8(%arg0: i32) -> (i32, i32) {
    %c0_i32 = arith.constant 0 : i32
    %c0_i32_0 = arith.constant 0 : i32
    %c0_i32_1 = arith.constant 0 : i32
    return %c0_i32, %c0_i32_0 : i32, i32
  }
  func.func @transform_9(%arg0: i32) -> (i32, i32, i32, i32) {
    %c0_i32 = arith.constant 0 : i32
    %c0_i32_0 = arith.constant 0 : i32
    %c0_i32_1 = arith.constant 0 : i32
    %c0_i32_2 = arith.constant 0 : i32
    return %arg0, %c0_i32, %c0_i32_0, %c0_i32_1 : i32, i32, i32, i32
  }
}

</mosaic_0001>

<llo_original>
// kernel: tpu_custom_call.1
$region0: #{tpu_custom_call.1}
  #allocation0 [shape = 'u32[]', space=smem, size = 0x4, offset = 0x4, fixed_abs, tag = 'smem constant byte address 0x4 - core index']
  #allocation1 [shape = 'u32[144,128]{1,0:T(1,128)}', space=vmem, size = 0x12000, scoped, tag = 'internal scratch']
  %s0 = inlined_call_operand.hbm [shape: f32[2,16,16,128], index: 0, kind: input, shape index: {}]
  %s1 = inlined_call_operand.hbm [shape: bf16[1152,128], index: 1, kind: input, shape index: {}]
  %s2 = inlined_call_operand.vmem [shape: f32[1,128], index: 2, kind: input, shape index: {}]
  %s3 = inlined_call_operand.vmem [shape: f32[1,128], index: 3, kind: input, shape index: {}]
  %s4 = inlined_call_operand.vmem [shape: f32[1,128], index: 4, kind: input, shape index: {}]
  %s5 = inlined_call_operand.hbm [shape: bf16[1152,128], index: 5, kind: input, shape index: {}]
  %s6 = inlined_call_operand.vmem [shape: f32[1,128], index: 6, kind: input, shape index: {}]
  %s7 = inlined_call_operand.vmem [shape: f32[1,128], index: 7, kind: input, shape index: {}]
  %s8 = inlined_call_operand.vmem [shape: f32[1,128], index: 8, kind: input, shape index: {}]
  %s9 = inlined_call_operand.hbm [shape: f32[2,16,16,128], index: 9, kind: output, shape index: {}]
  %s10 = sld [smem:[#allocation0]]
  $region81: #{tpu_custom_call.1} parent=0
    _
  %s12 = ssub.s32 1, %s10
  %s13 = scalar_select 0, %s12, %s10
  $region1: #{tpu_custom_call.1} parent=0
    #allocation2 [shape = 'u8[262144]{0}', space=vmem, size = 0x40000, scoped, tag = 'input window, operand 0']
    #allocation3 [shape = 's32[2]{0}', space=sflag, size = 0x8, scoped, tag = 'scoped memory for tpu_custom_call.1']
    #allocation4 [shape = 's32[2]{0}', space=sflag, size = 0x8, scoped, tag = 'scoped memory for tpu_custom_call.1']
    #allocation5 [shape = 'u8[294912]{0}', space=vmem, size = 0x48000, scoped, tag = 'input window, operand 1, single buffered']
    #allocation6 [shape = 's32[1]{0}', space=sflag, size = 0x4, scoped, tag = 'scoped memory for tpu_custom_call.1']
    #allocation7 [shape = 'u8[294912]{0}', space=vmem, size = 0x48000, scoped, tag = 'input window, operand 5, single buffered']
    #allocation8 [shape = 'u8[262144]{0}', space=vmem, size = 0x40000, scoped, tag = 'output window, operand 0']
    %14 = vsyncpa [#allocation3], 0
    %s15 = scalar_lea.sflag [#allocation3], 1
    %16 = vsyncpa %s15, 0
    %17 = vsyncpa [#allocation6], 0
    %18 = vsyncpa [#allocation4], 0
    %s19 = scalar_lea.sflag [#allocation4], 1
    %20 = vsyncpa %s19, 0
    loop: start=0, step=1, limit=4
    $region2: #{tpu_custom_call.1} parent=1 // loop_pre_header
      _
    $region3: #{tpu_custom_call.1} parent=1 // loop_header
      %s22 = sphi 0, %s26
      %p23 = scmp.ge.s32.totalorder %s22, 4
      %s32 = sphi 0, %s34
      %s35 = sphi 0, %s32
      %s36 = sphi 0, %s35
      %s52 = sphi 0, %s36
      %s56 = sphi 0, %s56
      %s58 = sphi 0, %s56
      %s59 = sphi 0, %s58
      %s73 = sphi 0, %s59
      %s77 = sphi 0, %s77
      %s79 = sphi 0, %s77
      %s80 = sphi 0, %s79
      %s94 = sphi 0, %s80
      %s98 = sphi 0, %s98
      %s100 = sphi 0, %s98
      %s101 = sphi 0, %s100
      %s115 = sphi 0, %s101
      %s119 = sphi 0, %s119
      %s121 = sphi 0, %s119
      %s122 = sphi 0, %s121
      %s136 = sphi 0, %s122
      %s140 = sphi 0, %s140
      %s142 = sphi 0, %s140
      %s143 = sphi 0, %s142
      %s157 = sphi 0, %s143
      %s161 = sphi 0, %s161
      %s163 = sphi 0, %s161
      %s164 = sphi 0, %s163
      %s178 = sphi 0, %s164
      %s182 = sphi 0, %s182
      %s184 = sphi 0, %s182
      %s185 = sphi 0, %s184
      %s199 = sphi 0, %s185
      %s203 = sphi 0, %s203
      %s205 = sphi 0, %s203
      %s206 = sphi 0, %s205
      %s220 = sphi 0, %s206
      %s226 = sphi 0, %s228
      %s229 = sphi 0, %s226
      %s230 = sphi 0, %s229
      %s246 = sphi 0, %s230
    $region4: #{tpu_custom_call.1} parent=1 // loop_header_branch
      %25 = sbr.rel (%p23) target = $region8
    $region5: #{tpu_custom_call.1} parent=1 // loop_body
      %s27 = ssub.s32 %s22, 1
      %s28 = ssub.s32 %s22, 2
      %s29 = sadd.s32 %s22, 1
      %s30 = ssub.s32 %s22, %s29
      %p31 = scmp.eq.s32.totalorder %s30, 0
      %s33 = sadd.s32 %s32, 1
      %s34 = scalar_select %p31, %s32, %s33
      %p37 = pneg %p31
      %p38 = scmp.eq.s32.totalorder %s22, 1
      %p39 = por %p37, %p38
      %p40 = scmp.ne.s32.totalorder %s32, %s35
      %p41 = scmp.eq.s32.totalorder %s22, 0
      %p42 = por %p40, %p41
      %p43 = scmp.ne.s32.totalorder %s32, %s35
      %p44 = scmp.eq.s32.totalorder %s27, 1
      %p45 = por %p43, %p44
      %p46 = scmp.ne.s32.totalorder %s35, %s36
      %p47 = scmp.eq.s32.totalorder %s27, 0
      %p48 = por %p46, %p47
      %p49 = scmp.ne.s32.totalorder %s35, %s36
      %p50 = scmp.eq.s32.totalorder %s28, 1
      %p51 = por %p49, %p50
      %p53 = scmp.ne.s32.totalorder %s36, %s52
      %p54 = scmp.eq.s32.totalorder %s28, 0
      %p55 = por %p53, %p54
      %s57 = sadd.s32 %s56, 1
      %p60 = scmp.eq.s32.totalorder %s22, 1
      %p61 = scmp.ne.s32.totalorder %s56, %s58
      %p62 = scmp.eq.s32.totalorder %s22, 0
      %p63 = por %p61, %p62
      %p64 = scmp.ne.s32.totalorder %s56, %s58
      %p65 = scmp.eq.s32.totalorder %s27, 1
      %p66 = por %p64, %p65
      %p67 = scmp.ne.s32.totalorder %s58, %s59
      %p68 = scmp.eq.s32.totalorder %s27, 0
      %p69 = por %p67, %p68
      %p70 = scmp.ne.s32.totalorder %s58, %s59
      %p71 = scmp.eq.s32.totalorder %s28, 1
      %p72 = por %p70, %p71
      %p74 = scmp.ne.s32.totalorder %s59, %s73
      %p75 = scmp.eq.s32.totalorder %s28, 0
      %p76 = por %p74, %p75
      %s78 = sadd.s32 %s77, 1
      %p81 = scmp.eq.s32.totalorder %s22, 1
      %p82 = scmp.ne.s32.totalorder %s77, %s79
      %p83 = scmp.eq.s32.totalorder %s22, 0
      %p84 = por %p82, %p83
      %p85 = scmp.ne.s32.totalorder %s77, %s79
      %p86 = scmp.eq.s32.totalorder %s27, 1
      %p87 = por %p85, %p86
      %p88 = scmp.ne.s32.totalorder %s79, %s80
      %p89 = scmp.eq.s32.totalorder %s27, 0
      %p90 = por %p88, %p89
      %p91 = scmp.ne.s32.totalorder %s79, %s80
      %p92 = scmp.eq.s32.totalorder %s28, 1
      %p93 = por %p91, %p92
      %p95 = scmp.ne.s32.totalorder %s80, %s94
      %p96 = scmp.eq.s32.totalorder %s28, 0
      %p97 = por %p95, %p96
      %s99 = sadd.s32 %s98, 1
      %p102 = scmp.eq.s32.totalorder %s22, 1
      %p103 = scmp.ne.s32.totalorder %s98, %s100
      %p104 = scmp.eq.s32.totalorder %s22, 0
      %p105 = por %p103, %p104
      %p106 = scmp.ne.s32.totalorder %s98, %s100
      %p107 = scmp.eq.s32.totalorder %s27, 1
      %p108 = por %p106, %p107
      %p109 = scmp.ne.s32.totalorder %s100, %s101
      %p110 = scmp.eq.s32.totalorder %s27, 0
      %p111 = por %p109, %p110
      %p112 = scmp.ne.s32.totalorder %s100, %s101
      %p113 = scmp.eq.s32.totalorder %s28, 1
      %p114 = por %p112, %p113
      %p116 = scmp.ne.s32.totalorder %s101, %s115
      %p117 = scmp.eq.s32.totalorder %s28, 0
      %p118 = por %p116, %p117
      %s120 = sadd.s32 %s119, 1
      %p123 = scmp.eq.s32.totalorder %s22, 1
      %p124 = scmp.ne.s32.totalorder %s119, %s121
      %p125 = scmp.eq.s32.totalorder %s22, 0
      %p126 = por %p124, %p125
      %p127 = scmp.ne.s32.totalorder %s119, %s121
      %p128 = scmp.eq.s32.totalorder %s27, 1
      %p129 = por %p127, %p128
      %p130 = scmp.ne.s32.totalorder %s121, %s122
      %p131 = scmp.eq.s32.totalorder %s27, 0
      %p132 = por %p130, %p131
      %p133 = scmp.ne.s32.totalorder %s121, %s122
      %p134 = scmp.eq.s32.totalorder %s28, 1
      %p135 = por %p133, %p134
      %p137 = scmp.ne.s32.totalorder %s122, %s136
      %p138 = scmp.eq.s32.totalorder %s28, 0
      %p139 = por %p137, %p138
      %s141 = sadd.s32 %s140, 1
      %p144 = scmp.eq.s32.totalorder %s22, 1
      %p145 = scmp.ne.s32.totalorder %s140, %s142
      %p146 = scmp.eq.s32.totalorder %s22, 0
      %p147 = por %p145, %p146
      %p148 = scmp.ne.s32.totalorder %s140, %s142
      %p149 = scmp.eq.s32.totalorder %s27, 1
      %p150 = por %p148, %p149
      %p151 = scmp.ne.s32.totalorder %s142, %s143
      %p152 = scmp.eq.s32.totalorder %s27, 0
      %p153 = por %p151, %p152
      %p154 = scmp.ne.s32.totalorder %s142, %s143
      %p155 = scmp.eq.s32.totalorder %s28, 1
      %p156 = por %p154, %p155
      %p158 = scmp.ne.s32.totalorder %s143, %s157
      %p159 = scmp.eq.s32.totalorder %s28, 0
      %p160 = por %p158, %p159
      %s162 = sadd.s32 %s161, 1
      %p165 = scmp.eq.s32.totalorder %s22, 1
      %p166 = scmp.ne.s32.totalorder %s161, %s163
      %p167 = scmp.eq.s32.totalorder %s22, 0
      %p168 = por %p166, %p167
      %p169 = scmp.ne.s32.totalorder %s161, %s163
      %p170 = scmp.eq.s32.totalorder %s27, 1
      %p171 = por %p169, %p170
      %p172 = scmp.ne.s32.totalorder %s163, %s164
      %p173 = scmp.eq.s32.totalorder %s27, 0
      %p174 = por %p172, %p173
      %p175 = scmp.ne.s32.totalorder %s163, %s164
      %p176 = scmp.eq.s32.totalorder %s28, 1
      %p177 = por %p175, %p176
      %p179 = scmp.ne.s32.totalorder %s164, %s178
      %p180 = scmp.eq.s32.totalorder %s28, 0
      %p181 = por %p179, %p180
      %s183 = sadd.s32 %s182, 1
      %p186 = scmp.eq.s32.totalorder %s22, 1
      %p187 = scmp.ne.s32.totalorder %s182, %s184
      %p188 = scmp.eq.s32.totalorder %s22, 0
      %p189 = por %p187, %p188
      %p190 = scmp.ne.s32.totalorder %s182, %s184
      %p191 = scmp.eq.s32.totalorder %s27, 1
      %p192 = por %p190, %p191
      %p193 = scmp.ne.s32.totalorder %s184, %s185
      %p194 = scmp.eq.s32.totalorder %s27, 0
      %p195 = por %p193, %p194
      %p196 = scmp.ne.s32.totalorder %s184, %s185
      %p197 = scmp.eq.s32.totalorder %s28, 1
      %p198 = por %p196, %p197
      %p200 = scmp.ne.s32.totalorder %s185, %s199
      %p201 = scmp.eq.s32.totalorder %s28, 0
      %p202 = por %p200, %p201
      %s204 = sadd.s32 %s203, 1
      %p207 = scmp.eq.s32.totalorder %s22, 1
      %p208 = scmp.ne.s32.totalorder %s203, %s205
      %p209 = scmp.eq.s32.totalorder %s22, 0
      %p210 = por %p208, %p209
      %p211 = scmp.ne.s32.totalorder %s203, %s205
      %p212 = scmp.eq.s32.totalorder %s27, 1
      %p213 = por %p211, %p212
      %p214 = scmp.ne.s32.totalorder %s205, %s206
      %p215 = scmp.eq.s32.totalorder %s27, 0
      %p216 = por %p214, %p215
      %p217 = scmp.ne.s32.totalorder %s205, %s206
      %p218 = scmp.eq.s32.totalorder %s28, 1
      %p219 = por %p217, %p218
      %p221 = scmp.ne.s32.totalorder %s206, %s220
      %p222 = scmp.eq.s32.totalorder %s28, 0
      %p223 = por %p221, %p222
      %s224 = ssub.s32 %s22, %s29
      %p225 = scmp.eq.s32.totalorder %s224, 0
      %s227 = sadd.s32 %s226, 1
      %s228 = scalar_select %p225, %s226, %s227
      %p231 = pneg %p225
      %p232 = scmp.eq.s32.totalorder %s22, 1
      %p233 = por %p231, %p232
      %p234 = scmp.ne.s32.totalorder %s226, %s229
      %p235 = scmp.eq.s32.totalorder %s22, 0
      %p236 = por %p234, %p235
      %p237 = scmp.ne.s32.totalorder %s226, %s229
      %p238 = scmp.eq.s32.totalorder %s27, 1
      %p239 = por %p237, %p238
      %p240 = scmp.ne.s32.totalorder %s229, %s230
      %p241 = scmp.eq.s32.totalorder %s27, 0
      %p242 = por %p240, %p241
      %p243 = scmp.ne.s32.totalorder %s229, %s230
      %p244 = scmp.eq.s32.totalorder %s28, 1
      %p245 = por %p243, %p244
      %p247 = scmp.ne.s32.totalorder %s230, %s246
      %p248 = scmp.eq.s32.totalorder %s28, 0
      %p249 = por %p247, %p248
      %p250 = scmp.le.s32.totalorder 1, %s22
      %p251 = scmp.lt.s32.totalorder %s22, 3
      %p252 = pnand %p250, %p251
      %p253 = pneg %p252
      // Predicated region
      $region9: #{tpu_custom_call.1} parent=5 // pred_check
        _
      $region10: #{tpu_custom_call.1} parent=5 // pred_check_branch
        %255 = sbr.rel (%p252) target = $region12
      $region11: #{tpu_custom_call.1} parent=5 // pred_region
        %s256 = ssub.s32 %s22, 1
        // Predicated region
        $region13: #{tpu_custom_call.1} parent=11 // pred_check
          %p257 = pneg %p69
        $region14: #{tpu_custom_call.1} parent=11 // pred_check_branch
          %259 = sbr.rel (%p257) target = $region16
        $region15: #{tpu_custom_call.1} parent=11 // pred_region
          %s261 = ssub.s32 9216, 9216
          %262 = vsyncadd [#allocation6], %s261
          %s263 = sshll.u32 [#allocation5], 4
          %s264 = int_to_ptr.vmem [resolvable:$true] %s263
          %269 = dma.hbm_to_vmem [thread:$0]  %s1, 9216, %s264, [#allocation6], 64, 64, 4
        $region16: #{tpu_custom_call.1} parent=11 // pred_fallthru
          _
        // Predicated region
        $region17: #{tpu_custom_call.1} parent=11 // pred_check
          %p270 = pneg %p90
        $region18: #{tpu_custom_call.1} parent=11 // pred_check_branch
          %272 = sbr.rel (%p270) target = $region20
        $region19: #{tpu_custom_call.1} parent=11 // pred_region
          _
        $region20: #{tpu_custom_call.1} parent=11 // pred_fallthru
          _
        // Predicated region
        $region21: #{tpu_custom_call.1} parent=11 // pred_check
          %p273 = pneg %p111
        $region22: #{tpu_custom_call.1} parent=11 // pred_check_branch
          %275 = sbr.rel (%p273) target = $region24
        $region23: #{tpu_custom_call.1} parent=11 // pred_region
          _
        $region24: #{tpu_custom_call.1} parent=11 // pred_fallthru
          _
        // Predicated region
        $region25: #{tpu_custom_call.1} parent=11 // pred_check
          %p276 = pneg %p132
        $region26: #{tpu_custom_call.1} parent=11 // pred_check_branch
          %278 = sbr.rel (%p276) target = $region28
        $region27: #{tpu_custom_call.1} parent=11 // pred_region
          _
        $region28: #{tpu_custom_call.1} parent=11 // pred_fallthru
          _
        // Predicated region
        $region29: #{tpu_custom_call.1} parent=11 // pred_check
          %p279 = pneg %p153
        $region30: #{tpu_custom_call.1} parent=11 // pred_check_branch
          %281 = sbr.rel (%p279) target = $region32
        $region31: #{tpu_custom_call.1} parent=11 // pred_region
          %s283 = ssub.s32 9216, 9216
          %284 = vsyncadd [#allocation6], %s283
          %s285 = sshll.u32 [#allocation7], 4
          %s286 = int_to_ptr.vmem [resolvable:$true] %s285
          %291 = dma.hbm_to_vmem [thread:$0]  %s5, 9216, %s286, [#allocation6], 64, 64, 4
        $region32: #{tpu_custom_call.1} parent=11 // pred_fallthru
          _
        // Predicated region
        $region33: #{tpu_custom_call.1} parent=11 // pred_check
          %p292 = pneg %p174
        $region34: #{tpu_custom_call.1} parent=11 // pred_check_branch
          %294 = sbr.rel (%p292) target = $region36
        $region35: #{tpu_custom_call.1} parent=11 // pred_region
          _
        $region36: #{tpu_custom_call.1} parent=11 // pred_fallthru
          _
        // Predicated region
        $region37: #{tpu_custom_call.1} parent=11 // pred_check
          %p295 = pneg %p195
        $region38: #{tpu_custom_call.1} parent=11 // pred_check_branch
          %297 = sbr.rel (%p295) target = $region40
        $region39: #{tpu_custom_call.1} parent=11 // pred_region
          _
        $region40: #{tpu_custom_call.1} parent=11 // pred_fallthru
          _
        // Predicated region
        $region41: #{tpu_custom_call.1} parent=11 // pred_check
          %p298 = pneg %p216
        $region42: #{tpu_custom_call.1} parent=11 // pred_check_branch
          %300 = sbr.rel (%p298) target = $region44
        $region43: #{tpu_custom_call.1} parent=11 // pred_region
          _
        $region44: #{tpu_custom_call.1} parent=11 // pred_fallthru
          _
      $region12: #{tpu_custom_call.1} parent=5 // pred_fallthru
        _
      %p301 = scmp.lt.s32.totalorder %s22, 2
      // Predicated region
      $region45: #{tpu_custom_call.1} parent=5 // pred_check
        %p302 = pneg %p301
      $region46: #{tpu_custom_call.1} parent=5 // pred_check_branch
        %304 = sbr.rel (%p302) target = $region48
      $region47: #{tpu_custom_call.1} parent=5 // pred_region
        // Predicated region
        $region49: #{tpu_custom_call.1} parent=47 // pred_check
          %p305 = pneg %p42
        $region50: #{tpu_custom_call.1} parent=47 // pred_check_branch
          %307 = sbr.rel (%p305) target = $region52
        $region51: #{tpu_custom_call.1} parent=47 // pred_region
          %s308 = sand.u32 %s32, 1
          %s309 = scalar_lea.sflag [#allocation3], %s308
          %s310 = sand.u32 %s32, 1
          %s311 = smul.addr %s310, 256
          %s312 = scalar_lea.vmem [#allocation2], %s311
          %s314 = ssub.s32 4096, 4096
          %315 = vsyncadd %s309, %s314
          %s316 = smul.addr %s22, 32
          %s317 = smul.addr %s316, 128
          %s318 = scalar_lea.hbm %s0, %s317
          %s319 = sshll.u32 %s312, 4
          %s320 = int_to_ptr.vmem [resolvable:$true] %s319
          %325 = dma.hbm_to_vmem [thread:$0]  %s318, 4096, %s320, %s309, 128, 128, 8
        $region52: #{tpu_custom_call.1} parent=47 // pred_fallthru
          _
      $region48: #{tpu_custom_call.1} parent=5 // pred_fallthru
        _
      %p326 = scmp.le.s32.totalorder 1, %s22
      %p327 = scmp.lt.s32.totalorder %s22, 3
      %p328 = pnand %p326, %p327
      %p329 = pneg %p328
      // Predicated region
      $region53: #{tpu_custom_call.1} parent=5 // pred_check
        _
      $region54: #{tpu_custom_call.1} parent=5 // pred_check_branch
        %331 = sbr.rel (%p328) target = $region56
      $region55: #{tpu_custom_call.1} parent=5 // pred_region
        %s332 = ssub.s32 %s22, 1
        %s333 = sand.u32 %s35, 1
        %s334 = scalar_lea.sflag [#allocation3], %s333
        %s335 = sand.u32 %s35, 1
        %s336 = smul.addr %s335, 256
        %s337 = scalar_lea.vmem [#allocation2], %s336
        // Predicated region
        $region57: #{tpu_custom_call.1} parent=55 // pred_check
          %p338 = pneg %p48
        $region58: #{tpu_custom_call.1} parent=55 // pred_check_branch
          %340 = sbr.rel (%p338) target = $region60
        $region59: #{tpu_custom_call.1} parent=55 // pred_region
          %341 = dma.done %s334, 4096
        $region60: #{tpu_custom_call.1} parent=55 // pred_fallthru
          _
        // Predicated region
        $region61: #{tpu_custom_call.1} parent=55 // pred_check
          %p342 = pneg %p69
        $region62: #{tpu_custom_call.1} parent=55 // pred_check_branch
          %344 = sbr.rel (%p342) target = $region64
        $region63: #{tpu_custom_call.1} parent=55 // pred_region
          %345 = dma.done [#allocation6], 9216
        $region64: #{tpu_custom_call.1} parent=55 // pred_fallthru
          _
        // Predicated region
        $region65: #{tpu_custom_call.1} parent=55 // pred_check
          %p346 = pneg %p153
        $region66: #{tpu_custom_call.1} parent=55 // pred_check_branch
          %348 = sbr.rel (%p346) target = $region68
        $region67: #{tpu_custom_call.1} parent=55 // pred_region
          %349 = dma.done [#allocation6], 9216
        $region68: #{tpu_custom_call.1} parent=55 // pred_fallthru
          _
        %s350 = sand.u32 %s35, 1
        %s351 = scalar_lea.sflag [#allocation3], %s350
        %s352 = sand.u32 %s35, 1
        %s353 = smul.addr %s352, 256
        %s354 = scalar_lea.vmem [#allocation2], %s353
        %p355 = pneg %p48
        %p356 = pneg %p45
        %p357 = pneg %p69
        %p358 = pneg %p66
        %p359 = pneg %p90
        %p360 = pneg %p87
        %p361 = pneg %p111
        %p362 = pneg %p108
        %p363 = pneg %p132
        %p364 = pneg %p129
        %p365 = pneg %p153
        %p366 = pneg %p150
        %p367 = pneg %p174
        %p368 = pneg %p171
        %p369 = pneg %p195
        %p370 = pneg %p192
        %p371 = pneg %p216
        %p372 = pneg %p213
        %p373 = pneg %p242
        %p374 = pneg %p239
        %s375 = sand.u32 %s229, 1
        %s376 = scalar_lea.sflag [#allocation4], %s375
        %s377 = sand.u32 %s229, 1
        %s378 = smul.addr %s377, 256
        %s379 = scalar_lea.vmem [#allocation8], %s378
        %v381 = vld [vmem:[%s337] sm:$0xff]
        %v382 = vld [vmem:[%s337 + $0x8] sm:$0xff]
        %v383 = vld [vmem:[%s337 + $0x10] sm:$0xff]
        %v384 = vld [vmem:[%s337 + $0x18] sm:$0xff]
        %v385 = vld [vmem:[%s337 + $0x20] sm:$0xff]
        %v386 = vld [vmem:[%s337 + $0x28] sm:$0xff]
        %v387 = vld [vmem:[%s337 + $0x30] sm:$0xff]
        %v388 = vld [vmem:[%s337 + $0x38] sm:$0xff]
        %v389 = vld [vmem:[%s337 + $0x40] sm:$0xff]
        %v390 = vld [vmem:[%s337 + $0x48] sm:$0xff]
        %v391 = vld [vmem:[%s337 + $0x50] sm:$0xff]
        %v392 = vld [vmem:[%s337 + $0x58] sm:$0xff]
        %v393 = vld [vmem:[%s337 + $0x60] sm:$0xff]
        %v394 = vld [vmem:[%s337 + $0x68] sm:$0xff]
        %v395 = vld [vmem:[%s337 + $0x70] sm:$0xff]
        %v396 = vld [vmem:[%s337 + $0x78] sm:$0xff]
        %v397 = vld [vmem:[%s337 + $0x80] sm:$0xff]
        %v398 = vld [vmem:[%s337 + $0x88] sm:$0xff]
        %v399 = vld [vmem:[%s337 + $0x90] sm:$0xff]
        %v400 = vld [vmem:[%s337 + $0x98] sm:$0xff]
        %v401 = vld [vmem:[%s337 + $0xa0] sm:$0xff]
        %v402 = vld [vmem:[%s337 + $0xa8] sm:$0xff]
        %v403 = vld [vmem:[%s337 + $0xb0] sm:$0xff]
        %v404 = vld [vmem:[%s337 + $0xb8] sm:$0xff]
        %v405 = vld [vmem:[%s337 + $0xc0] sm:$0xff]
        %v406 = vld [vmem:[%s337 + $0xc8] sm:$0xff]
        %v407 = vld [vmem:[%s337 + $0xd0] sm:$0xff]
        %v408 = vld [vmem:[%s337 + $0xd8] sm:$0xff]
        %v409 = vld [vmem:[%s337 + $0xe0] sm:$0xff]
        %v410 = vld [vmem:[%s337 + $0xe8] sm:$0xff]
        %v411 = vld [vmem:[%s337 + $0xf0] sm:$0xff]
        %v412 = vld [vmem:[%s337 + $0xf8] sm:$0xff]
        %v413 = vpack.c.bf16 %v382, %v381
        %v414 = vpack.c.bf16 %v384, %v383
        %v415 = vpack.c.bf16 %v386, %v385
        %v416 = vpack.c.bf16 %v388, %v387
        %v417 = vpack.c.bf16 %v390, %v389
        %v418 = vpack.c.bf16 %v392, %v391
        %v419 = vpack.c.bf16 %v394, %v393
        %v420 = vpack.c.bf16 %v396, %v395
        %v421 = vpack.c.bf16 %v398, %v397
        %v422 = vpack.c.bf16 %v400, %v399
        %v423 = vpack.c.bf16 %v402, %v401
        %v424 = vpack.c.bf16 %v404, %v403
        %v425 = vpack.c.bf16 %v406, %v405
        %v426 = vpack.c.bf16 %v408, %v407
        %v427 = vpack.c.bf16 %v410, %v409
        %v428 = vpack.c.bf16 %v412, %v411
        %v430 = vshrl.u32 %v414, 16
        %v433 = vshrl.u32 %v413, 16
        %v436 = vshrl.u32 %v415, 16
        %v439 = vshrl.u32 %v416, 16
        %v442 = vshrl.u32 %v417, 16
        %v445 = vshrl.u32 %v418, 16
        %v448 = vshrl.u32 %v419, 16
        %v451 = vshrl.u32 %v420, 16
        %v454 = vshrl.u32 %v421, 16
        %v457 = vshrl.u32 %v422, 16
        %v460 = vshrl.u32 %v423, 16
        %v463 = vshrl.u32 %v424, 16
        %v466 = vshrl.u32 %v425, 16
        %v469 = vshrl.u32 %v426, 16
        %v472 = vshrl.u32 %v427, 16
        %v475 = vshrl.u32 %v428, 16
        %v493 = vrot.slane %v430, 7
        %v494 = vshll.u32 %v414, 16
        %v496 = vor.u32 %v493, %v494
        %v497 = vrot.slane %v433, 7
        %v498 = vshll.u32 %v413, 16
        %v500 = vor.u32 %v497, %v498
        %v501 = vrot.slane %v436, 7
        %v502 = vshll.u32 %v415, 16
        %v504 = vor.u32 %v501, %v502
        %v505 = vrot.slane %v439, 7
        %v506 = vshll.u32 %v416, 16
        %v508 = vor.u32 %v505, %v506
        %v509 = vrot.slane %v442, 7
        %v510 = vshll.u32 %v417, 16
        %v512 = vor.u32 %v509, %v510
        %v513 = vrot.slane %v445, 7
        %v514 = vshll.u32 %v418, 16
        %v516 = vor.u32 %v513, %v514
        %v517 = vrot.slane %v448, 7
        %v518 = vshll.u32 %v419, 16
        %v520 = vor.u32 %v517, %v518
        %v521 = vrot.slane %v451, 7
        %v522 = vshll.u32 %v420, 16
        %v524 = vor.u32 %v521, %v522
        %v525 = vrot.slane %v454, 7
        %v526 = vshll.u32 %v421, 16
        %v528 = vor.u32 %v525, %v526
        %v529 = vrot.slane %v457, 7
        %v530 = vshll.u32 %v422, 16
        %v532 = vor.u32 %v529, %v530
        %v533 = vrot.slane %v460, 7
        %v534 = vshll.u32 %v423, 16
        %v536 = vor.u32 %v533, %v534
        %v537 = vrot.slane %v463, 7
        %v538 = vshll.u32 %v424, 16
        %v540 = vor.u32 %v537, %v538
        %v541 = vrot.slane %v466, 7
        %v542 = vshll.u32 %v425, 16
        %v544 = vor.u32 %v541, %v542
        %v545 = vrot.slane %v469, 7
        %v546 = vshll.u32 %v426, 16
        %v548 = vor.u32 %v545, %v546
        %v549 = vrot.slane %v472, 7
        %v550 = vshll.u32 %v427, 16
        %v552 = vor.u32 %v549, %v550
        %v553 = vrot.slane %v475, 7
        %v554 = vshll.u32 %v428, 16
        %v556 = vor.u32 %v553, %v554
        %v589 = vrot.slane %v494, 7
        %v590 = vrot.slane %v498, 7
        %v591 = vrot.slane %v502, 7
        %v592 = vrot.slane %v506, 7
        %v593 = vrot.slane %v510, 7
        %v594 = vrot.slane %v514, 7
        %v595 = vrot.slane %v518, 7
        %v596 = vrot.slane %v522, 7
        %v597 = vrot.slane %v526, 7
        %v598 = vrot.slane %v530, 7
        %v599 = vrot.slane %v534, 7
        %v600 = vrot.slane %v538, 7
        %v601 = vrot.slane %v542, 7
        %v602 = vrot.slane %v546, 7
        %v603 = vrot.slane %v550, 7
        %v604 = vrot.slane %v554, 7
        %vm621 = vcmask 1040384
        %vm622 = vsmask.f32 256
        %vm623 = vmand %vm621, %vm622
        %v624 = vsel %vm623, %v430, %v496
        %v625 = vsel %vm623, %v433, %v500
        %v626 = vsel %vm623, %v436, %v504
        %v627 = vsel %vm623, %v439, %v508
        %v628 = vsel %vm623, %v442, %v512
        %v629 = vsel %vm623, %v445, %v516
        %v630 = vsel %vm623, %v448, %v520
        %v631 = vsel %vm623, %v451, %v524
        %v632 = vsel %vm623, %v454, %v528
        %v633 = vsel %vm623, %v457, %v532
        %v634 = vsel %vm623, %v460, %v536
        %v635 = vsel %vm623, %v463, %v540
        %v636 = vsel %vm623, %v466, %v544
        %v637 = vsel %vm623, %v469, %v548
        %v638 = vsel %vm623, %v472, %v552
        %v639 = vsel %vm623, %v475, %v556
        %v640 = vsel %vm623, %v493, %v589
        %v641 = vsel %vm623, %v497, %v590
        %v642 = vsel %vm623, %v501, %v591
        %v643 = vsel %vm623, %v505, %v592
        %v644 = vsel %vm623, %v509, %v593
        %v645 = vsel %vm623, %v513, %v594
        %v646 = vsel %vm623, %v517, %v595
        %v647 = vsel %vm623, %v521, %v596
        %v648 = vsel %vm623, %v525, %v597
        %v649 = vsel %vm623, %v529, %v598
        %v650 = vsel %vm623, %v533, %v599
        %v651 = vsel %vm623, %v537, %v600
        %v652 = vsel %vm623, %v541, %v601
        %v653 = vsel %vm623, %v545, %v602
        %v654 = vsel %vm623, %v549, %v603
        %v655 = vsel %vm623, %v553, %v604
        %vm656 = vsmask.f32 7424
        %v658 = vshrl.u32 %v624, 16
        %v660 = vshll.u32 %v624, 16
        %v662 = vrot.slane %v660, 1
        %v663 = vor.u32 %v658, %v662
        %v665 = vshll.u32 %v640, 16
        %v667 = vrot.slane %v665, 1
        %v668 = vsel %vm656, %v663, %v667
        %v670 = vshrl.u32 %v625, 16
        %v672 = vshll.u32 %v625, 16
        %v674 = vrot.slane %v672, 1
        %v675 = vor.u32 %v670, %v674
        %v677 = vshll.u32 %v641, 16
        %v679 = vrot.slane %v677, 1
        %v680 = vsel %vm656, %v675, %v679
        %v682 = vshrl.u32 %v626, 16
        %v684 = vshll.u32 %v626, 16
        %v686 = vrot.slane %v684, 1
        %v687 = vor.u32 %v682, %v686
        %v689 = vshll.u32 %v642, 16
        %v691 = vrot.slane %v689, 1
        %v692 = vsel %vm656, %v687, %v691
        %v694 = vshrl.u32 %v627, 16
        %v696 = vshll.u32 %v627, 16
        %v698 = vrot.slane %v696, 1
        %v699 = vor.u32 %v694, %v698
        %v701 = vshll.u32 %v643, 16
        %v703 = vrot.slane %v701, 1
        %v704 = vsel %vm656, %v699, %v703
        %v706 = vshrl.u32 %v628, 16
        %v708 = vshll.u32 %v628, 16
        %v710 = vrot.slane %v708, 1
        %v711 = vor.u32 %v706, %v710
        %v713 = vshll.u32 %v644, 16
        %v715 = vrot.slane %v713, 1
        %v716 = vsel %vm656, %v711, %v715
        %v718 = vshrl.u32 %v629, 16
        %v720 = vshll.u32 %v629, 16
        %v722 = vrot.slane %v720, 1
        %v723 = vor.u32 %v718, %v722
        %v725 = vshll.u32 %v645, 16
        %v727 = vrot.slane %v725, 1
        %v728 = vsel %vm656, %v723, %v727
        %v730 = vshrl.u32 %v630, 16
        %v732 = vshll.u32 %v630, 16
        %v734 = vrot.slane %v732, 1
        %v735 = vor.u32 %v730, %v734
        %v737 = vshll.u32 %v646, 16
        %v739 = vrot.slane %v737, 1
        %v740 = vsel %vm656, %v735, %v739
        %v742 = vshrl.u32 %v631, 16
        %v744 = vshll.u32 %v631, 16
        %v746 = vrot.slane %v744, 1
        %v747 = vor.u32 %v742, %v746
        %v749 = vshll.u32 %v647, 16
        %v751 = vrot.slane %v749, 1
        %v752 = vsel %vm656, %v747, %v751
        %v754 = vshrl.u32 %v632, 16
        %v756 = vshll.u32 %v632, 16
        %v758 = vrot.slane %v756, 1
        %v759 = vor.u32 %v754, %v758
        %v761 = vshll.u32 %v648, 16
        %v763 = vrot.slane %v761, 1
        %v764 = vsel %vm656, %v759, %v763
        %v766 = vshrl.u32 %v633, 16
        %v768 = vshll.u32 %v633, 16
        %v770 = vrot.slane %v768, 1
        %v771 = vor.u32 %v766, %v770
        %v773 = vshll.u32 %v649, 16
        %v775 = vrot.slane %v773, 1
        %v776 = vsel %vm656, %v771, %v775
        %v778 = vshrl.u32 %v634, 16
        %v780 = vshll.u32 %v634, 16
        %v782 = vrot.slane %v780, 1
        %v783 = vor.u32 %v778, %v782
        %v785 = vshll.u32 %v650, 16
        %v787 = vrot.slane %v785, 1
        %v788 = vsel %vm656, %v783, %v787
        %v790 = vshrl.u32 %v635, 16
        %v792 = vshll.u32 %v635, 16
        %v794 = vrot.slane %v792, 1
        %v795 = vor.u32 %v790, %v794
        %v797 = vshll.u32 %v651, 16
        %v799 = vrot.slane %v797, 1
        %v800 = vsel %vm656, %v795, %v799
        %v802 = vshrl.u32 %v636, 16
        %v804 = vshll.u32 %v636, 16
        %v806 = vrot.slane %v804, 1
        %v807 = vor.u32 %v802, %v806
        %v809 = vshll.u32 %v652, 16
        %v811 = vrot.slane %v809, 1
        %v812 = vsel %vm656, %v807, %v811
        %v814 = vshrl.u32 %v637, 16
        %v816 = vshll.u32 %v637, 16
        %v818 = vrot.slane %v816, 1
        %v819 = vor.u32 %v814, %v818
        %v821 = vshll.u32 %v653, 16
        %v823 = vrot.slane %v821, 1
        %v824 = vsel %vm656, %v819, %v823
        %v826 = vshrl.u32 %v638, 16
        %v828 = vshll.u32 %v638, 16
        %v830 = vrot.slane %v828, 1
        %v831 = vor.u32 %v826, %v830
        %v833 = vshll.u32 %v654, 16
        %v835 = vrot.slane %v833, 1
        %v836 = vsel %vm656, %v831, %v835
        %vm882 = vcmask 1046528
        %v883 = vrot.slane %v624, 1
        %v884 = vrot.slane %v640, 1
        %v885 = vsel %vm882, %v883, %v884
        %v886 = vrot.slane %v625, 1
        %v887 = vrot.slane %v641, 1
        %v888 = vsel %vm882, %v886, %v887
        %v889 = vrot.slane %v626, 1
        %v890 = vrot.slane %v642, 1
        %v891 = vsel %vm882, %v889, %v890
        %v892 = vrot.slane %v627, 1
        %v893 = vrot.slane %v643, 1
        %v894 = vsel %vm882, %v892, %v893
        %v895 = vrot.slane %v628, 1
        %v896 = vrot.slane %v644, 1
        %v897 = vsel %vm882, %v895, %v896
        %v898 = vrot.slane %v629, 1
        %v899 = vrot.slane %v645, 1
        %v900 = vsel %vm882, %v898, %v899
        %v901 = vrot.slane %v630, 1
        %v902 = vrot.slane %v646, 1
        %v903 = vsel %vm882, %v901, %v902
        %v904 = vrot.slane %v631, 1
        %v905 = vrot.slane %v647, 1
        %v906 = vsel %vm882, %v904, %v905
        %v907 = vrot.slane %v632, 1
        %v908 = vrot.slane %v648, 1
        %v909 = vsel %vm882, %v907, %v908
        %v910 = vrot.slane %v633, 1
        %v911 = vrot.slane %v649, 1
        %v912 = vsel %vm882, %v910, %v911
        %v913 = vrot.slane %v634, 1
        %v914 = vrot.slane %v650, 1
        %v915 = vsel %vm882, %v913, %v914
        %v916 = vrot.slane %v635, 1
        %v917 = vrot.slane %v651, 1
        %v918 = vsel %vm882, %v916, %v917
        %v919 = vrot.slane %v636, 1
        %v920 = vrot.slane %v652, 1
        %v921 = vsel %vm882, %v919, %v920
        %v922 = vrot.slane %v637, 1
        %v923 = vrot.slane %v653, 1
        %v924 = vsel %vm882, %v922, %v923
        %v925 = vrot.slane %v638, 1
        %v926 = vrot.slane %v654, 1
        %v927 = vsel %vm882, %v925, %v926
        %v944 = vshrl.u32 %v639, 16
        %v946 = vshll.u32 %v639, 16
        %v948 = vrot.slane %v946, 1
        %v949 = vor.u32 %v944, %v948
        %v951 = vshll.u32 %v655, 16
        %v953 = vrot.slane %v951, 1
        %v954 = vsel %vm656, %v949, %v953
        %v958 = vrot.slane %v639, 1
        %v959 = vrot.slane %v655, 1
        %v960 = vsel %vm882, %v958, %v959
        %v962 = vld [vmem:[#allocation5] sm:$0xf]
        %v963 = vld [vmem:[#allocation5 + $0x4] sm:$0xf]
        %v964 = vld [vmem:[#allocation5 + $0x8] sm:$0xf]
        %v965 = vld [vmem:[#allocation5 + $0xc] sm:$0xf]
        %v966 = vld [vmem:[#allocation5 + $0x10] sm:$0xf]
        %v967 = vld [vmem:[#allocation5 + $0x14] sm:$0xf]
        %v968 = vld [vmem:[#allocation5 + $0x18] sm:$0xf]
        %v969 = vld [vmem:[#allocation5 + $0x1c] sm:$0xf]
        %v970 = vld [vmem:[#allocation5 + $0x20] sm:$0xf]
        %v971 = vld [vmem:[#allocation5 + $0x24] sm:$0xf]
        %v972 = vld [vmem:[#allocation5 + $0x28] sm:$0xf]
        %v973 = vld [vmem:[#allocation5 + $0x2c] sm:$0xf]
        %v974 = vld [vmem:[#allocation5 + $0x30] sm:$0xf]
        %v975 = vld [vmem:[#allocation5 + $0x34] sm:$0xf]
        %v976 = vld [vmem:[#allocation5 + $0x38] sm:$0xf]
        %v977 = vld [vmem:[#allocation5 + $0x3c] sm:$0xf]
        %v978 = vld [vmem:[#allocation5 + $0x40] sm:$0xf]
        %v979 = vld [vmem:[#allocation5 + $0x44] sm:$0xf]
        %v980 = vld [vmem:[#allocation5 + $0x48] sm:$0xf]
        %v981 = vld [vmem:[#allocation5 + $0x4c] sm:$0xf]
        %v982 = vld [vmem:[#allocation5 + $0x50] sm:$0xf]
        %v983 = vld [vmem:[#allocation5 + $0x54] sm:$0xf]
        %v984 = vld [vmem:[#allocation5 + $0x58] sm:$0xf]
        %v985 = vld [vmem:[#allocation5 + $0x5c] sm:$0xf]
        %v986 = vld [vmem:[#allocation5 + $0x60] sm:$0xf]
        %v987 = vld [vmem:[#allocation5 + $0x64] sm:$0xf]
        %v988 = vld [vmem:[#allocation5 + $0x68] sm:$0xf]
        %v989 = vld [vmem:[#allocation5 + $0x6c] sm:$0xf]
        %v990 = vld [vmem:[#allocation5 + $0x70] sm:$0xf]
        %v991 = vld [vmem:[#allocation5 + $0x74] sm:$0xf]
        %v992 = vld [vmem:[#allocation5 + $0x78] sm:$0xf]
        %v993 = vld [vmem:[#allocation5 + $0x7c] sm:$0xf]
        %v994 = vld [vmem:[#allocation5 + $0x80] sm:$0xf]
        %v995 = vld [vmem:[#allocation5 + $0x84] sm:$0xf]
        %v996 = vld [vmem:[#allocation5 + $0x88] sm:$0xf]
        %v997 = vld [vmem:[#allocation5 + $0x8c] sm:$0xf]
        %v998 = vld [vmem:[#allocation5 + $0x90] sm:$0xf]
        %v999 = vld [vmem:[#allocation5 + $0x94] sm:$0xf]
        %v1000 = vld [vmem:[#allocation5 + $0x98] sm:$0xf]
        %v1001 = vld [vmem:[#allocation5 + $0x9c] sm:$0xf]
        %v1002 = vld [vmem:[#allocation5 + $0xa0] sm:$0xf]
        %v1003 = vld [vmem:[#allocation5 + $0xa4] sm:$0xf]
        %v1004 = vld [vmem:[#allocation5 + $0xa8] sm:$0xf]
        %v1005 = vld [vmem:[#allocation5 + $0xac] sm:$0xf]
        %v1006 = vld [vmem:[#allocation5 + $0xb0] sm:$0xf]
        %v1007 = vld [vmem:[#allocation5 + $0xb4] sm:$0xf]
        %v1008 = vld [vmem:[#allocation5 + $0xb8] sm:$0xf]
        %v1009 = vld [vmem:[#allocation5 + $0xbc] sm:$0xf]
        %v1010 = vld [vmem:[#allocation5 + $0xc0] sm:$0xf]
        %v1011 = vld [vmem:[#allocation5 + $0xc4] sm:$0xf]
        %v1012 = vld [vmem:[#allocation5 + $0xc8] sm:$0xf]
        %v1013 = vld [vmem:[#allocation5 + $0xcc] sm:$0xf]
        %v1014 = vld [vmem:[#allocation5 + $0xd0] sm:$0xf]
        %v1015 = vld [vmem:[#allocation5 + $0xd4] sm:$0xf]
        %v1016 = vld [vmem:[#allocation5 + $0xd8] sm:$0xf]
        %v1017 = vld [vmem:[#allocation5 + $0xdc] sm:$0xf]
        %v1018 = vld [vmem:[#allocation5 + $0xe0] sm:$0xf]
        %v1019 = vld [vmem:[#allocation5 + $0xe4] sm:$0xf]
        %v1020 = vld [vmem:[#allocation5 + $0xe8] sm:$0xf]
        %v1021 = vld [vmem:[#allocation5 + $0xec] sm:$0xf]
        %v1022 = vld [vmem:[#allocation5 + $0xf0] sm:$0xf]
        %v1023 = vld [vmem:[#allocation5 + $0xf4] sm:$0xf]
        %v1024 = vld [vmem:[#allocation5 + $0xf8] sm:$0xf]
        %v1025 = vld [vmem:[#allocation5 + $0xfc] sm:$0xf]
        %v1026 = vld [vmem:[#allocation5 + $0x100] sm:$0xf]
        %v1027 = vld [vmem:[#allocation5 + $0x104] sm:$0xf]
        %v1028 = vld [vmem:[#allocation5 + $0x108] sm:$0xf]
        %v1029 = vld [vmem:[#allocation5 + $0x10c] sm:$0xf]
        %v1030 = vld [vmem:[#allocation5 + $0x110] sm:$0xf]
        %v1031 = vld [vmem:[#allocation5 + $0x114] sm:$0xf]
        %v1032 = vld [vmem:[#allocation5 + $0x118] sm:$0xf]
        %v1033 = vld [vmem:[#allocation5 + $0x11c] sm:$0xf]
        %v1034 = vld [vmem:[#allocation5 + $0x120] sm:$0xf]
        %v1035 = vld [vmem:[#allocation5 + $0x124] sm:$0xf]
        %v1036 = vld [vmem:[#allocation5 + $0x128] sm:$0xf]
        %v1037 = vld [vmem:[#allocation5 + $0x12c] sm:$0xf]
        %v1038 = vld [vmem:[#allocation5 + $0x130] sm:$0xf]
        %v1039 = vld [vmem:[#allocation5 + $0x134] sm:$0xf]
        %v1040 = vld [vmem:[#allocation5 + $0x138] sm:$0xf]
        %v1041 = vld [vmem:[#allocation5 + $0x13c] sm:$0xf]
        %v1042 = vld [vmem:[#allocation5 + $0x140] sm:$0xf]
        %v1043 = vld [vmem:[#allocation5 + $0x144] sm:$0xf]
        %v1044 = vld [vmem:[#allocation5 + $0x148] sm:$0xf]
        %v1045 = vld [vmem:[#allocation5 + $0x14c] sm:$0xf]
        %v1046 = vld [vmem:[#allocation5 + $0x150] sm:$0xf]
        %v1047 = vld [vmem:[#allocation5 + $0x154] sm:$0xf]
        %v1048 = vld [vmem:[#allocation5 + $0x158] sm:$0xf]
        %v1049 = vld [vmem:[#allocation5 + $0x15c] sm:$0xf]
        %v1050 = vld [vmem:[#allocation5 + $0x160] sm:$0xf]
        %v1051 = vld [vmem:[#allocation5 + $0x164] sm:$0xf]
        %v1052 = vld [vmem:[#allocation5 + $0x168] sm:$0xf]
        %v1053 = vld [vmem:[#allocation5 + $0x16c] sm:$0xf]
        %v1054 = vld [vmem:[#allocation5 + $0x170] sm:$0xf]
        %v1055 = vld [vmem:[#allocation5 + $0x174] sm:$0xf]
        %v1056 = vld [vmem:[#allocation5 + $0x178] sm:$0xf]
        %v1057 = vld [vmem:[#allocation5 + $0x17c] sm:$0xf]
        %v1058 = vld [vmem:[#allocation5 + $0x180] sm:$0xf]
        %v1059 = vld [vmem:[#allocation5 + $0x184] sm:$0xf]
        %v1060 = vld [vmem:[#allocation5 + $0x188] sm:$0xf]
        %v1061 = vld [vmem:[#allocation5 + $0x18c] sm:$0xf]
        %v1062 = vld [vmem:[#allocation5 + $0x190] sm:$0xf]
        %v1063 = vld [vmem:[#allocation5 + $0x194] sm:$0xf]
        %v1064 = vld [vmem:[#allocation5 + $0x198] sm:$0xf]
        %v1065 = vld [vmem:[#allocation5 + $0x19c] sm:$0xf]
        %v1066 = vld [vmem:[#allocation5 + $0x1a0] sm:$0xf]
        %v1067 = vld [vmem:[#allocation5 + $0x1a4] sm:$0xf]
        %v1068 = vld [vmem:[#allocation5 + $0x1a8] sm:$0xf]
        %v1069 = vld [vmem:[#allocation5 + $0x1ac] sm:$0xf]
        %v1070 = vld [vmem:[#allocation5 + $0x1b0] sm:$0xf]
        %v1071 = vld [vmem:[#allocation5 + $0x1b4] sm:$0xf]
        %v1072 = vld [vmem:[#allocation5 + $0x1b8] sm:$0xf]
        %v1073 = vld [vmem:[#allocation5 + $0x1bc] sm:$0xf]
        %v1074 = vld [vmem:[#allocation5 + $0x1c0] sm:$0xf]
        %v1075 = vld [vmem:[#allocation5 + $0x1c4] sm:$0xf]
        %v1076 = vld [vmem:[#allocation5 + $0x1c8] sm:$0xf]
        %v1077 = vld [vmem:[#allocation5 + $0x1cc] sm:$0xf]
        %v1078 = vld [vmem:[#allocation5 + $0x1d0] sm:$0xf]
        %v1079 = vld [vmem:[#allocation5 + $0x1d4] sm:$0xf]
        %v1080 = vld [vmem:[#allocation5 + $0x1d8] sm:$0xf]
        %v1081 = vld [vmem:[#allocation5 + $0x1dc] sm:$0xf]
        %v1082 = vld [vmem:[#allocation5 + $0x1e0] sm:$0xf]
        %v1083 = vld [vmem:[#allocation5 + $0x1e4] sm:$0xf]
        %v1084 = vld [vmem:[#allocation5 + $0x1e8] sm:$0xf]
        %v1085 = vld [vmem:[#allocation5 + $0x1ec] sm:$0xf]
        %v1086 = vld [vmem:[#allocation5 + $0x1f0] sm:$0xf]
        %v1087 = vld [vmem:[#allocation5 + $0x1f4] sm:$0xf]
        %v1088 = vld [vmem:[#allocation5 + $0x1f8] sm:$0xf]
        %v1089 = vld [vmem:[#allocation5 + $0x1fc] sm:$0xf]
        %v1090 = vld [vmem:[#allocation5 + $0x200] sm:$0xf]
        %v1091 = vld [vmem:[#allocation5 + $0x204] sm:$0xf]
        %v1092 = vld [vmem:[#allocation5 + $0x208] sm:$0xf]
        %v1093 = vld [vmem:[#allocation5 + $0x20c] sm:$0xf]
        %v1094 = vld [vmem:[#allocation5 + $0x210] sm:$0xf]
        %v1095 = vld [vmem:[#allocation5 + $0x214] sm:$0xf]
        %v1096 = vld [vmem:[#allocation5 + $0x218] sm:$0xf]
        %v1097 = vld [vmem:[#allocation5 + $0x21c] sm:$0xf]
        %v1098 = vld [vmem:[#allocation5 + $0x220] sm:$0xf]
        %v1099 = vld [vmem:[#allocation5 + $0x224] sm:$0xf]
        %v1100 = vld [vmem:[#allocation5 + $0x228] sm:$0xf]
        %v1101 = vld [vmem:[#allocation5 + $0x22c] sm:$0xf]
        %v1102 = vld [vmem:[#allocation5 + $0x230] sm:$0xf]
        %v1103 = vld [vmem:[#allocation5 + $0x234] sm:$0xf]
        %v1104 = vld [vmem:[#allocation5 + $0x238] sm:$0xf]
        %v1105 = vld [vmem:[#allocation5 + $0x23c] sm:$0xf]
        %v1106 = vld [vmem:[%s2] sm:$0x1]
        %v1108 = vlaneseq
        %v1109 = vshrl.u32 %v1108, 7
        %v1110 = vsub.s32 0, %v1109
        %v1111 = vrot.slane %v1106, %v1110
        %v1257 = vunpack.c.l.b16 %v962
        %v1258 = vunpack.c.l.b16 %v963
        %v1259 = vunpack.c.l.b16 %v964
        %v1260 = vunpack.c.l.b16 %v965
        %v1261 = vunpack.c.l.b16 %v966
        %v1262 = vunpack.c.l.b16 %v967
        %v1263 = vunpack.c.l.b16 %v968
        %v1264 = vunpack.c.l.b16 %v969
        %v1265 = vunpack.c.l.b16 %v970
        %v1266 = vunpack.c.l.b16 %v971
        %v1267 = vunpack.c.l.b16 %v972
        %v1268 = vunpack.c.l.b16 %v973
        %v1269 = vunpack.c.l.b16 %v974
        %v1270 = vunpack.c.l.b16 %v975
        %v1271 = vunpack.c.l.b16 %v976
        %v1272 = vunpack.c.l.b16 %v977
        %v1273 = vunpack.c.l.b16 %v978
        %v1274 = vunpack.c.l.b16 %v979
        %v1275 = vunpack.c.l.b16 %v980
        %v1276 = vunpack.c.l.b16 %v981
        %v1277 = vunpack.c.l.b16 %v982
        %v1278 = vunpack.c.l.b16 %v983
        %v1279 = vunpack.c.l.b16 %v984
        %v1280 = vunpack.c.l.b16 %v985
        %v1281 = vunpack.c.l.b16 %v986
        %v1282 = vunpack.c.l.b16 %v987
        %v1283 = vunpack.c.l.b16 %v988
        %v1284 = vunpack.c.l.b16 %v989
        %v1285 = vunpack.c.l.b16 %v990
        %v1286 = vunpack.c.l.b16 %v991
        %v1287 = vunpack.c.l.b16 %v992
        %v1288 = vunpack.c.l.b16 %v993
        %v1289 = vunpack.c.l.b16 %v994
        %v1290 = vunpack.c.l.b16 %v995
        %v1291 = vunpack.c.l.b16 %v996
        %v1292 = vunpack.c.l.b16 %v997
        %v1293 = vunpack.c.l.b16 %v998
        %v1294 = vunpack.c.l.b16 %v999
        %v1295 = vunpack.c.l.b16 %v1000
        %v1296 = vunpack.c.l.b16 %v1001
        %v1297 = vunpack.c.l.b16 %v1002
        %v1298 = vunpack.c.l.b16 %v1003
        %v1299 = vunpack.c.l.b16 %v1004
        %v1300 = vunpack.c.l.b16 %v1005
        %v1301 = vunpack.c.l.b16 %v1006
        %v1302 = vunpack.c.l.b16 %v1007
        %v1303 = vunpack.c.l.b16 %v1008
        %v1304 = vunpack.c.l.b16 %v1009
        %v1305 = vunpack.c.l.b16 %v1010
        %v1306 = vunpack.c.l.b16 %v1011
        %v1307 = vunpack.c.l.b16 %v1012
        %v1308 = vunpack.c.l.b16 %v1013
        %v1309 = vunpack.c.l.b16 %v1014
        %v1310 = vunpack.c.l.b16 %v1015
        %v1311 = vunpack.c.l.b16 %v1016
        %v1312 = vunpack.c.l.b16 %v1017
        %v1313 = vunpack.c.l.b16 %v1018
        %v1314 = vunpack.c.l.b16 %v1019
        %v1315 = vunpack.c.l.b16 %v1020
        %v1316 = vunpack.c.l.b16 %v1021
        %v1317 = vunpack.c.l.b16 %v1022
        %v1318 = vunpack.c.l.b16 %v1023
        %v1319 = vunpack.c.l.b16 %v1024
        %v1320 = vunpack.c.l.b16 %v1025
        %v1321 = vunpack.c.l.b16 %v1026
        %v1322 = vunpack.c.l.b16 %v1027
        %v1323 = vunpack.c.l.b16 %v1028
        %v1324 = vunpack.c.l.b16 %v1029
        %v1325 = vunpack.c.l.b16 %v1030
        %v1326 = vunpack.c.l.b16 %v1031
        %v1327 = vunpack.c.l.b16 %v1032
        %v1328 = vunpack.c.l.b16 %v1033
        %v1329 = vunpack.c.l.b16 %v1034
        %v1330 = vunpack.c.l.b16 %v1035
        %v1331 = vunpack.c.l.b16 %v1036
        %v1332 = vunpack.c.l.b16 %v1037
        %v1333 = vunpack.c.l.b16 %v1038
        %v1334 = vunpack.c.l.b16 %v1039
        %v1335 = vunpack.c.l.b16 %v1040
        %v1336 = vunpack.c.l.b16 %v1041
        %v1337 = vunpack.c.l.b16 %v1042
        %v1338 = vunpack.c.l.b16 %v1043
        %v1339 = vunpack.c.l.b16 %v1044
        %v1340 = vunpack.c.l.b16 %v1045
        %v1341 = vunpack.c.l.b16 %v1046
        %v1342 = vunpack.c.l.b16 %v1047
        %v1343 = vunpack.c.l.b16 %v1048
        %v1344 = vunpack.c.l.b16 %v1049
        %v1345 = vunpack.c.l.b16 %v1050
        %v1346 = vunpack.c.l.b16 %v1051
        %v1347 = vunpack.c.l.b16 %v1052
        %v1348 = vunpack.c.l.b16 %v1053
        %v1349 = vunpack.c.l.b16 %v1054
        %v1350 = vunpack.c.l.b16 %v1055
        %v1351 = vunpack.c.l.b16 %v1056
        %v1352 = vunpack.c.l.b16 %v1057
        %v1353 = vunpack.c.l.b16 %v1058
        %v1354 = vunpack.c.l.b16 %v1059
        %v1355 = vunpack.c.l.b16 %v1060
        %v1356 = vunpack.c.l.b16 %v1061
        %v1357 = vunpack.c.l.b16 %v1062
        %v1358 = vunpack.c.l.b16 %v1063
        %v1359 = vunpack.c.l.b16 %v1064
        %v1360 = vunpack.c.l.b16 %v1065
        %v1361 = vunpack.c.l.b16 %v1066
        %v1362 = vunpack.c.l.b16 %v1067
        %v1363 = vunpack.c.l.b16 %v1068
        %v1364 = vunpack.c.l.b16 %v1069
        %v1365 = vunpack.c.l.b16 %v1070
        %v1366 = vunpack.c.l.b16 %v1071
        %v1367 = vunpack.c.l.b16 %v1072
        %v1368 = vunpack.c.l.b16 %v1073
        %v1369 = vunpack.c.l.b16 %v1074
        %v1370 = vunpack.c.l.b16 %v1075
        %v1371 = vunpack.c.l.b16 %v1076
        %v1372 = vunpack.c.l.b16 %v1077
        %v1373 = vunpack.c.l.b16 %v1078
        %v1374 = vunpack.c.l.b16 %v1079
        %v1375 = vunpack.c.l.b16 %v1080
        %v1376 = vunpack.c.l.b16 %v1081
        %v1377 = vunpack.c.l.b16 %v1082
        %v1378 = vunpack.c.l.b16 %v1083
        %v1379 = vunpack.c.l.b16 %v1084
        %v1380 = vunpack.c.l.b16 %v1085
        %v1381 = vunpack.c.l.b16 %v1086
        %v1382 = vunpack.c.l.b16 %v1087
        %v1383 = vunpack.c.l.b16 %v1088
        %v1384 = vunpack.c.l.b16 %v1089
        %v1385 = vunpack.c.l.b16 %v1090
        %v1386 = vunpack.c.l.b16 %v1091
        %v1387 = vunpack.c.l.b16 %v1092
        %v1388 = vunpack.c.l.b16 %v1093
        %v1389 = vunpack.c.l.b16 %v1094
        %v1390 = vunpack.c.l.b16 %v1095
        %v1391 = vunpack.c.l.b16 %v1096
        %v1392 = vunpack.c.l.b16 %v1097
        %v1393 = vunpack.c.l.b16 %v1098
        %v1394 = vunpack.c.l.b16 %v1099
        %v1395 = vunpack.c.l.b16 %v1100
        %v1396 = vunpack.c.l.b16 %v1101
        %v1397 = vunpack.c.l.b16 %v1102
        %v1398 = vunpack.c.l.b16 %v1103
        %v1399 = vunpack.c.l.b16 %v1104
        %v1400 = vunpack.c.l.b16 %v1105
        %v1401 = vpack.c.b16 %v1258, %v1257
        %v1402 = vpack.c.b16 %v1260, %v1259
        %v1403 = vpack.c.b16 %v1262, %v1261
        %v1404 = vpack.c.b16 %v1264, %v1263
        %v1405 = vpack.c.b16 %v1266, %v1265
        %v1406 = vpack.c.b16 %v1268, %v1267
        %v1407 = vpack.c.b16 %v1270, %v1269
        %v1408 = vpack.c.b16 %v1272, %v1271
        %v1409 = vpack.c.b16 %v1274, %v1273
        %v1410 = vpack.c.b16 %v1276, %v1275
        %v1411 = vpack.c.b16 %v1278, %v1277
        %v1412 = vpack.c.b16 %v1280, %v1279
        %v1413 = vpack.c.b16 %v1282, %v1281
        %v1414 = vpack.c.b16 %v1284, %v1283
        %v1415 = vpack.c.b16 %v1286, %v1285
        %v1416 = vpack.c.b16 %v1288, %v1287
        %v1417 = vpack.c.b16 %v1290, %v1289
        %v1418 = vpack.c.b16 %v1292, %v1291
        %v1419 = vpack.c.b16 %v1294, %v1293
        %v1420 = vpack.c.b16 %v1296, %v1295
        %v1421 = vpack.c.b16 %v1298, %v1297
        %v1422 = vpack.c.b16 %v1300, %v1299
        %v1423 = vpack.c.b16 %v1302, %v1301
        %v1424 = vpack.c.b16 %v1304, %v1303
        %v1425 = vpack.c.b16 %v1306, %v1305
        %v1426 = vpack.c.b16 %v1308, %v1307
        %v1427 = vpack.c.b16 %v1310, %v1309
        %v1428 = vpack.c.b16 %v1312, %v1311
        %v1429 = vpack.c.b16 %v1314, %v1313
        %v1430 = vpack.c.b16 %v1316, %v1315
        %v1431 = vpack.c.b16 %v1318, %v1317
        %v1432 = vpack.c.b16 %v1320, %v1319
        %v1433 = vpack.c.b16 %v1322, %v1321
        %v1434 = vpack.c.b16 %v1324, %v1323
        %v1435 = vpack.c.b16 %v1326, %v1325
        %v1436 = vpack.c.b16 %v1328, %v1327
        %v1437 = vpack.c.b16 %v1330, %v1329
        %v1438 = vpack.c.b16 %v1332, %v1331
        %v1439 = vpack.c.b16 %v1334, %v1333
        %v1440 = vpack.c.b16 %v1336, %v1335
        %v1441 = vpack.c.b16 %v1338, %v1337
        %v1442 = vpack.c.b16 %v1340, %v1339
        %v1443 = vpack.c.b16 %v1342, %v1341
        %v1444 = vpack.c.b16 %v1344, %v1343
        %v1445 = vpack.c.b16 %v1346, %v1345
        %v1446 = vpack.c.b16 %v1348, %v1347
        %v1447 = vpack.c.b16 %v1350, %v1349
        %v1448 = vpack.c.b16 %v1352, %v1351
        %v1449 = vpack.c.b16 %v1354, %v1353
        %v1450 = vpack.c.b16 %v1356, %v1355
        %v1451 = vpack.c.b16 %v1358, %v1357
        %v1452 = vpack.c.b16 %v1360, %v1359
        %v1453 = vpack.c.b16 %v1362, %v1361
        %v1454 = vpack.c.b16 %v1364, %v1363
        %v1455 = vpack.c.b16 %v1366, %v1365
        %v1456 = vpack.c.b16 %v1368, %v1367
        %v1457 = vpack.c.b16 %v1370, %v1369
        %v1458 = vpack.c.b16 %v1372, %v1371
        %v1459 = vpack.c.b16 %v1374, %v1373
        %v1460 = vpack.c.b16 %v1376, %v1375
        %v1461 = vpack.c.b16 %v1378, %v1377
        %v1462 = vpack.c.b16 %v1380, %v1379
        %v1463 = vpack.c.b16 %v1382, %v1381
        %v1464 = vpack.c.b16 %v1384, %v1383
        %v1465 = vpack.c.b16 %v1386, %v1385
        %v1466 = vpack.c.b16 %v1388, %v1387
        %v1467 = vpack.c.b16 %v1390, %v1389
        %v1468 = vpack.c.b16 %v1392, %v1391
        %v1469 = vpack.c.b16 %v1394, %v1393
        %v1470 = vpack.c.b16 %v1396, %v1395
        %v1471 = vpack.c.b16 %v1398, %v1397
        %v1472 = vpack.c.b16 %v1400, %v1399
        %1545 = vmatprep.subr.bf16.mxu0 0
        %1546 = vmatpush1.bf16.msra.mxu0 %v1408
        %1547 = vmatprep.subr.bf16.mxu0 0
        %1548 = vmatpush1.bf16.msra.mxu0 %v1407
        %1549 = vmatprep.subr.bf16.mxu0 0
        %1550 = vmatpush1.bf16.msra.mxu0 %v1406
        %1551 = vmatprep.subr.bf16.mxu0 0
        %1552 = vmatpush1.bf16.msra.mxu0 %v1405
        %1553 = vmatprep.subr.bf16.mxu0 0
        %1554 = vmatpush1.bf16.msra.mxu0 %v1404
        %1555 = vmatprep.subr.bf16.mxu0 0
        %1556 = vmatpush1.bf16.msra.mxu0 %v1403
        %1557 = vmatprep.subr.bf16.mxu0 0
        %1558 = vmatpush1.bf16.msra.mxu0 %v1402
        %1559 = vmatprep.subr.bf16.mxu0 0
        %1560 = vmatpush1.bf16.msra.mxu0 %v1401
        %1561 = vmatprep.subr.bf16.mxu0 0
        %1562 = vmatpush2.bf16.msra.mxu0 %v1416
        %1563 = vmatprep.subr.bf16.mxu0 0
        %1564 = vmatpush2.bf16.msra.mxu0 %v1415
        %1565 = vmatprep.subr.bf16.mxu0 0
        %1566 = vmatpush2.bf16.msra.mxu0 %v1414
        %1567 = vmatprep.subr.bf16.mxu0 0
        %1568 = vmatpush2.bf16.msra.mxu0 %v1413
        %1569 = vmatprep.subr.bf16.mxu0 0
        %1570 = vmatpush2.bf16.msra.mxu0 %v1412
        %1571 = vmatprep.subr.bf16.mxu0 0
        %1572 = vmatpush2.bf16.msra.mxu0 %v1411
        %1573 = vmatprep.subr.bf16.mxu0 0
        %1574 = vmatpush2.bf16.msra.mxu0 %v1410
        %1575 = vmatprep.subr.bf16.mxu0 0
        %1576 = vmatpush2.bf16.msra.mxu0 %v1409
        %1577 = vmatprep.mubr.bf16.mxu0 %v668
        %1578 = vmatmul.mubr.bf16.gmra.mxu0 %v624
        %v1579 = vpop.f32.mrf.mxu0
        %v1580 = vadd.f32 %v1111, %v1579
        %v1581 = vpop.f32.mrf.mxu0
        %v1582 = vpop.f32.mrf.mxu0
        %v1583 = vadd.f32 %v1111, %v1582
        %v1584 = vpop.f32.mrf.mxu0
        %1585 = vmatprep.mubr.bf16.mxu0 %v680
        %1586 = vmatmul.mubr.bf16.gmra.mxu0 %v625
        %v1587 = vpop.f32.mrf.mxu0
        %v1588 = vadd.f32 %v1111, %v1587
        %v1589 = vpop.f32.mrf.mxu0
        %v1590 = vpop.f32.mrf.mxu0
        %v1591 = vadd.f32 %v1111, %v1590
        %v1592 = vpop.f32.mrf.mxu0
        %1593 = vmatprep.mubr.bf16.mxu0 %v668
        %1594 = vmatmul.mubr.bf16.gmra.mxu0 %v624
        %v1595 = vpop.f32.mrf.mxu0
        %v1596 = vadd.f32 %v1111, %v1595
        %v1597 = vpop.f32.mrf.mxu0
        %v1598 = vpop.f32.mrf.mxu0
        %v1599 = vadd.f32 %v1111, %v1598
        %v1600 = vpop.f32.mrf.mxu0
        %1601 = vmatprep.mubr.bf16.mxu0 %v692
        %1602 = vmatmul.mubr.bf16.gmra.mxu0 %v626
        %v1603 = vpop.f32.mrf.mxu0
        %v1604 = vadd.f32 %v1111, %v1603
        %v1605 = vpop.f32.mrf.mxu0
        %v1606 = vpop.f32.mrf.mxu0
        %v1607 = vadd.f32 %v1111, %v1606
        %v1608 = vpop.f32.mrf.mxu0
        %1609 = vmatprep.mubr.bf16.mxu0 %v704
        %1610 = vmatmul.mubr.bf16.gmra.mxu0 %v627
        %v1611 = vpop.f32.mrf.mxu0
        %v1612 = vadd.f32 %v1111, %v1611
        %v1613 = vpop.f32.mrf.mxu0
        %v1614 = vpop.f32.mrf.mxu0
        %v1615 = vadd.f32 %v1111, %v1614
        %v1616 = vpop.f32.mrf.mxu0
        %1617 = vmatprep.mubr.bf16.mxu0 %v716
        %1618 = vmatmul.mubr.bf16.gmra.mxu0 %v628
        %v1619 = vpop.f32.mrf.mxu0
        %v1620 = vadd.f32 %v1111, %v1619
        %v1621 = vpop.f32.mrf.mxu0
        %v1622 = vpop.f32.mrf.mxu0
        %v1623 = vadd.f32 %v1111, %v1622
        %v1624 = vpop.f32.mrf.mxu0
        %1625 = vmatprep.mubr.bf16.mxu0 %v728
        %1626 = vmatmul.mubr.bf16.gmra.mxu0 %v629
        %v1627 = vpop.f32.mrf.mxu0
        %v1628 = vadd.f32 %v1111, %v1627
        %v1629 = vpop.f32.mrf.mxu0
        %v1630 = vpop.f32.mrf.mxu0
        %v1631 = vadd.f32 %v1111, %v1630
        %v1632 = vpop.f32.mrf.mxu0
        %1633 = vmatprep.mubr.bf16.mxu0 %v740
        %1634 = vmatmul.mubr.bf16.gmra.mxu0 %v630
        %v1635 = vpop.f32.mrf.mxu0
        %v1636 = vadd.f32 %v1111, %v1635
        %v1637 = vpop.f32.mrf.mxu0
        %v1638 = vpop.f32.mrf.mxu0
        %v1639 = vadd.f32 %v1111, %v1638
        %v1640 = vpop.f32.mrf.mxu0
        %1641 = vmatprep.mubr.bf16.mxu0 %v752
        %1642 = vmatmul.mubr.bf16.gmra.mxu0 %v631
        %v1643 = vpop.f32.mrf.mxu0
        %v1644 = vadd.f32 %v1111, %v1643
        %v1645 = vpop.f32.mrf.mxu0
        %v1646 = vpop.f32.mrf.mxu0
        %v1647 = vadd.f32 %v1111, %v1646
        %v1648 = vpop.f32.mrf.mxu0
        %1649 = vmatprep.mubr.bf16.mxu0 %v764
        %1650 = vmatmul.mubr.bf16.gmra.mxu0 %v632
        %v1651 = vpop.f32.mrf.mxu0
        %v1652 = vadd.f32 %v1111, %v1651
        %v1653 = vpop.f32.mrf.mxu0
        %v1654 = vpop.f32.mrf.mxu0
        %v1655 = vadd.f32 %v1111, %v1654
        %v1656 = vpop.f32.mrf.mxu0
        %1657 = vmatprep.mubr.bf16.mxu0 %v776
        %1658 = vmatmul.mubr.bf16.gmra.mxu0 %v633
        %v1659 = vpop.f32.mrf.mxu0
        %v1660 = vadd.f32 %v1111, %v1659
        %v1661 = vpop.f32.mrf.mxu0
        %v1662 = vpop.f32.mrf.mxu0
        %v1663 = vadd.f32 %v1111, %v1662
        %v1664 = vpop.f32.mrf.mxu0
        %1665 = vmatprep.mubr.bf16.mxu0 %v788
        %1666 = vmatmul.mubr.bf16.gmra.mxu0 %v634
        %v1667 = vpop.f32.mrf.mxu0
        %v1668 = vadd.f32 %v1111, %v1667
        %v1669 = vpop.f32.mrf.mxu0
        %v1670 = vpop.f32.mrf.mxu0
        %v1671 = vadd.f32 %v1111, %v1670
        %v1672 = vpop.f32.mrf.mxu0
        %1673 = vmatprep.mubr.bf16.mxu0 %v800
        %1674 = vmatmul.mubr.bf16.gmra.mxu0 %v635
        %v1675 = vpop.f32.mrf.mxu0
        %v1676 = vadd.f32 %v1111, %v1675
        %v1677 = vpop.f32.mrf.mxu0
        %v1678 = vpop.f32.mrf.mxu0
        %v1679 = vadd.f32 %v1111, %v1678
        %v1680 = vpop.f32.mrf.mxu0
        %1681 = vmatprep.mubr.bf16.mxu0 %v812
        %1682 = vmatmul.mubr.bf16.gmra.mxu0 %v636
        %v1683 = vpop.f32.mrf.mxu0
        %v1684 = vadd.f32 %v1111, %v1683
        %v1685 = vpop.f32.mrf.mxu0
        %v1686 = vpop.f32.mrf.mxu0
        %v1687 = vadd.f32 %v1111, %v1686
        %v1688 = vpop.f32.mrf.mxu0
        %1689 = vmatprep.mubr.bf16.mxu0 %v824
        %1690 = vmatmul.mubr.bf16.gmra.mxu0 %v637
        %v1691 = vpop.f32.mrf.mxu0
        %v1692 = vadd.f32 %v1111, %v1691
        %v1693 = vpop.f32.mrf.mxu0
        %v1694 = vpop.f32.mrf.mxu0
        %v1695 = vadd.f32 %v1111, %v1694
        %v1696 = vpop.f32.mrf.mxu0
        %1697 = vmatprep.mubr.bf16.mxu0 %v836
        %1698 = vmatmul.mubr.bf16.gmra.mxu0 %v638
        %v1699 = vpop.f32.mrf.mxu0
        %v1700 = vadd.f32 %v1111, %v1699
        %v1701 = vpop.f32.mrf.mxu0
        %v1702 = vpop.f32.mrf.mxu0
        %v1703 = vadd.f32 %v1111, %v1702
        %v1704 = vpop.f32.mrf.mxu0
        %1705 = vdwg.mxu0
        %1706 = vmatprep.subr.bf16.mxu0 0
        %1707 = vmatpush1.bf16.msra.mxu0 %v1424
        %1708 = vmatprep.subr.bf16.mxu0 0
        %1709 = vmatpush1.bf16.msra.mxu0 %v1423
        %1710 = vmatprep.subr.bf16.mxu0 0
        %1711 = vmatpush1.bf16.msra.mxu0 %v1422
        %1712 = vmatprep.subr.bf16.mxu0 0
        %1713 = vmatpush1.bf16.msra.mxu0 %v1421
        %1714 = vmatprep.subr.bf16.mxu0 0
        %1715 = vmatpush1.bf16.msra.mxu0 %v1420
        %1716 = vmatprep.subr.bf16.mxu0 0
        %1717 = vmatpush1.bf16.msra.mxu0 %v1419
        %1718 = vmatprep.subr.bf16.mxu0 0
        %1719 = vmatpush1.bf16.msra.mxu0 %v1418
        %1720 = vmatprep.subr.bf16.mxu0 0
        %1721 = vmatpush1.bf16.msra.mxu0 %v1417
        %1722 = vmatprep.subr.bf16.mxu0 0
        %1723 = vmatpush2.bf16.msra.mxu0 %v1432
        %1724 = vmatprep.subr.bf16.mxu0 0
        %1725 = vmatpush2.bf16.msra.mxu0 %v1431
        %1726 = vmatprep.subr.bf16.mxu0 0
        %1727 = vmatpush2.bf16.msra.mxu0 %v1430
        %1728 = vmatprep.subr.bf16.mxu0 0
        %1729 = vmatpush2.bf16.msra.mxu0 %v1429
        %1730 = vmatprep.subr.bf16.mxu0 0
        %1731 = vmatpush2.bf16.msra.mxu0 %v1428
        %1732 = vmatprep.subr.bf16.mxu0 0
        %1733 = vmatpush2.bf16.msra.mxu0 %v1427
        %1734 = vmatprep.subr.bf16.mxu0 0
        %1735 = vmatpush2.bf16.msra.mxu0 %v1426
        %1736 = vmatprep.subr.bf16.mxu0 0
        %1737 = vmatpush2.bf16.msra.mxu0 %v1425
        %1738 = vmatprep.mubr.bf16.mxu0 %v625
        %1739 = vmatmul.mubr.bf16.gmra.mxu0 %v885
        %v1740 = vpop.f32.mrf.mxu0
        %v1741 = vadd.f32 %v1580, %v1740
        %v1742 = vpop.f32.mrf.mxu0
        %v1743 = vpop.f32.mrf.mxu0
        %v1744 = vadd.f32 %v1583, %v1743
        %v1745 = vpop.f32.mrf.mxu0
        %1746 = vmatprep.mubr.bf16.mxu0 %v624
        %1747 = vmatmul.mubr.bf16.gmra.mxu0 %v888
        %v1748 = vpop.f32.mrf.mxu0
        %v1749 = vadd.f32 %v1588, %v1748
        %v1750 = vpop.f32.mrf.mxu0
        %v1751 = vpop.f32.mrf.mxu0
        %v1752 = vadd.f32 %v1591, %v1751
        %v1753 = vpop.f32.mrf.mxu0
        %1754 = vmatprep.mubr.bf16.mxu0 %v626
        %1755 = vmatmul.mubr.bf16.gmra.mxu0 %v885
        %v1756 = vpop.f32.mrf.mxu0
        %v1757 = vadd.f32 %v1596, %v1756
        %v1758 = vpop.f32.mrf.mxu0
        %v1759 = vpop.f32.mrf.mxu0
        %v1760 = vadd.f32 %v1599, %v1759
        %v1761 = vpop.f32.mrf.mxu0
        %1762 = vmatprep.mubr.bf16.mxu0 %v627
        %1763 = vmatmul.mubr.bf16.gmra.mxu0 %v891
        %v1764 = vpop.f32.mrf.mxu0
        %v1765 = vadd.f32 %v1604, %v1764
        %v1766 = vpop.f32.mrf.mxu0
        %v1767 = vpop.f32.mrf.mxu0
        %v1768 = vadd.f32 %v1607, %v1767
        %v1769 = vpop.f32.mrf.mxu0
        %1770 = vmatprep.mubr.bf16.mxu0 %v628
        %1771 = vmatmul.mubr.bf16.gmra.mxu0 %v894
        %v1772 = vpop.f32.mrf.mxu0
        %v1773 = vadd.f32 %v1612, %v1772
        %v1774 = vpop.f32.mrf.mxu0
        %v1775 = vpop.f32.mrf.mxu0
        %v1776 = vadd.f32 %v1615, %v1775
        %v1777 = vpop.f32.mrf.mxu0
        %1778 = vmatprep.mubr.bf16.mxu0 %v629
        %1779 = vmatmul.mubr.bf16.gmra.mxu0 %v897
        %v1780 = vpop.f32.mrf.mxu0
        %v1781 = vadd.f32 %v1620, %v1780
        %v1782 = vpop.f32.mrf.mxu0
        %v1783 = vpop.f32.mrf.mxu0
        %v1784 = vadd.f32 %v1623, %v1783
        %v1785 = vpop.f32.mrf.mxu0
        %1786 = vmatprep.mubr.bf16.mxu0 %v630
        %1787 = vmatmul.mubr.bf16.gmra.mxu0 %v900
        %v1788 = vpop.f32.mrf.mxu0
        %v1789 = vadd.f32 %v1628, %v1788
        %v1790 = vpop.f32.mrf.mxu0
        %v1791 = vpop.f32.mrf.mxu0
        %v1792 = vadd.f32 %v1631, %v1791
        %v1793 = vpop.f32.mrf.mxu0
        %1794 = vmatprep.mubr.bf16.mxu0 %v631
        %1795 = vmatmul.mubr.bf16.gmra.mxu0 %v903
        %v1796 = vpop.f32.mrf.mxu0
        %v1797 = vadd.f32 %v1636, %v1796
        %v1798 = vpop.f32.mrf.mxu0
        %v1799 = vpop.f32.mrf.mxu0
        %v1800 = vadd.f32 %v1639, %v1799
        %v1801 = vpop.f32.mrf.mxu0
        %1802 = vmatprep.mubr.bf16.mxu0 %v632
        %1803 = vmatmul.mubr.bf16.gmra.mxu0 %v906
        %v1804 = vpop.f32.mrf.mxu0
        %v1805 = vadd.f32 %v1644, %v1804
        %v1806 = vpop.f32.mrf.mxu0
        %v1807 = vpop.f32.mrf.mxu0
        %v1808 = vadd.f32 %v1647, %v1807
        %v1809 = vpop.f32.mrf.mxu0
        %1810 = vmatprep.mubr.bf16.mxu0 %v633
        %1811 = vmatmul.mubr.bf16.gmra.mxu0 %v909
        %v1812 = vpop.f32.mrf.mxu0
        %v1813 = vadd.f32 %v1652, %v1812
        %v1814 = vpop.f32.mrf.mxu0
        %v1815 = vpop.f32.mrf.mxu0
        %v1816 = vadd.f32 %v1655, %v1815
        %v1817 = vpop.f32.mrf.mxu0
        %1818 = vmatprep.mubr.bf16.mxu0 %v634
        %1819 = vmatmul.mubr.bf16.gmra.mxu0 %v912
        %v1820 = vpop.f32.mrf.mxu0
        %v1821 = vadd.f32 %v1660, %v1820
        %v1822 = vpop.f32.mrf.mxu0
        %v1823 = vpop.f32.mrf.mxu0
        %v1824 = vadd.f32 %v1663, %v1823
        %v1825 = vpop.f32.mrf.mxu0
        %1826 = vmatprep.mubr.bf16.mxu0 %v635
        %1827 = vmatmul.mubr.bf16.gmra.mxu0 %v915
        %v1828 = vpop.f32.mrf.mxu0
        %v1829 = vadd.f32 %v1668, %v1828
        %v1830 = vpop.f32.mrf.mxu0
        %v1831 = vpop.f32.mrf.mxu0
        %v1832 = vadd.f32 %v1671, %v1831
        %v1833 = vpop.f32.mrf.mxu0
        %1834 = vmatprep.mubr.bf16.mxu0 %v636
        %1835 = vmatmul.mubr.bf16.gmra.mxu0 %v918
        %v1836 = vpop.f32.mrf.mxu0
        %v1837 = vadd.f32 %v1676, %v1836
        %v1838 = vpop.f32.mrf.mxu0
        %v1839 = vpop.f32.mrf.mxu0
        %v1840 = vadd.f32 %v1679, %v1839
        %v1841 = vpop.f32.mrf.mxu0
        %1842 = vmatprep.mubr.bf16.mxu0 %v637
        %1843 = vmatmul.mubr.bf16.gmra.mxu0 %v921
        %v1844 = vpop.f32.mrf.mxu0
        %v1845 = vadd.f32 %v1684, %v1844
        %v1846 = vpop.f32.mrf.mxu0
        %v1847 = vpop.f32.mrf.mxu0
        %v1848 = vadd.f32 %v1687, %v1847
        %v1849 = vpop.f32.mrf.mxu0
        %1850 = vmatprep.mubr.bf16.mxu0 %v638
        %1851 = vmatmul.mubr.bf16.gmra.mxu0 %v924
        %v1852 = vpop.f32.mrf.mxu0
        %v1853 = vadd.f32 %v1692, %v1852
        %v1854 = vpop.f32.mrf.mxu0
        %v1855 = vpop.f32.mrf.mxu0
        %v1856 = vadd.f32 %v1695, %v1855
        %v1857 = vpop.f32.mrf.mxu0
        %1858 = vmatprep.mubr.bf16.mxu0 %v639
        %1859 = vmatmul.mubr.bf16.gmra.mxu0 %v927
        %v1860 = vpop.f32.mrf.mxu0
        %v1861 = vadd.f32 %v1700, %v1860
        %v1862 = vpop.f32.mrf.mxu0
        %v1863 = vpop.f32.mrf.mxu0
        %v1864 = vadd.f32 %v1703, %v1863
        %v1865 = vpop.f32.mrf.mxu0
        %1866 = vdwg.mxu0
        %1867 = vmatprep.subr.bf16.mxu0 0
        %1868 = vmatpush1.bf16.msra.mxu0 %v1440
        %1869 = vmatprep.subr.bf16.mxu0 0
        %1870 = vmatpush1.bf16.msra.mxu0 %v1439
        %1871 = vmatprep.subr.bf16.mxu0 0
        %1872 = vmatpush1.bf16.msra.mxu0 %v1438
        %1873 = vmatprep.subr.bf16.mxu0 0
        %1874 = vmatpush1.bf16.msra.mxu0 %v1437
        %1875 = vmatprep.subr.bf16.mxu0 0
        %1876 = vmatpush1.bf16.msra.mxu0 %v1436
        %1877 = vmatprep.subr.bf16.mxu0 0
        %1878 = vmatpush1.bf16.msra.mxu0 %v1435
        %1879 = vmatprep.subr.bf16.mxu0 0
        %1880 = vmatpush1.bf16.msra.mxu0 %v1434
        %1881 = vmatprep.subr.bf16.mxu0 0
        %1882 = vmatpush1.bf16.msra.mxu0 %v1433
        %1883 = vmatprep.subr.bf16.mxu0 0
        %1884 = vmatpush2.bf16.msra.mxu0 %v1448
        %1885 = vmatprep.subr.bf16.mxu0 0
        %1886 = vmatpush2.bf16.msra.mxu0 %v1447
        %1887 = vmatprep.subr.bf16.mxu0 0
        %1888 = vmatpush2.bf16.msra.mxu0 %v1446
        %1889 = vmatprep.subr.bf16.mxu0 0
        %1890 = vmatpush2.bf16.msra.mxu0 %v1445
        %1891 = vmatprep.subr.bf16.mxu0 0
        %1892 = vmatpush2.bf16.msra.mxu0 %v1444
        %1893 = vmatprep.subr.bf16.mxu0 0
        %1894 = vmatpush2.bf16.msra.mxu0 %v1443
        %1895 = vmatprep.subr.bf16.mxu0 0
        %1896 = vmatpush2.bf16.msra.mxu0 %v1442
        %1897 = vmatprep.subr.bf16.mxu0 0
        %1898 = vmatpush2.bf16.msra.mxu0 %v1441
        %1899 = vmatprep.mubr.bf16.mxu0 %v888
        %1900 = vmatmul.mubr.bf16.gmra.mxu0 %v680
        %v1901 = vpop.f32.mrf.mxu0
        %v1902 = vadd.f32 %v1741, %v1901
        %v1903 = vpop.f32.mrf.mxu0
        %v1904 = vpop.f32.mrf.mxu0
        %v1905 = vadd.f32 %v1744, %v1904
        %v1906 = vpop.f32.mrf.mxu0
        %1907 = vmatprep.mubr.bf16.mxu0 %v885
        %1908 = vmatmul.mubr.bf16.gmra.mxu0 %v668
        %v1909 = vpop.f32.mrf.mxu0
        %v1910 = vadd.f32 %v1749, %v1909
        %v1911 = vpop.f32.mrf.mxu0
        %v1912 = vpop.f32.mrf.mxu0
        %v1913 = vadd.f32 %v1752, %v1912
        %v1914 = vpop.f32.mrf.mxu0
        %1915 = vmatprep.mubr.bf16.mxu0 %v891
        %1916 = vmatmul.mubr.bf16.gmra.mxu0 %v692
        %v1917 = vpop.f32.mrf.mxu0
        %v1918 = vadd.f32 %v1757, %v1917
        %v1919 = vpop.f32.mrf.mxu0
        %v1920 = vpop.f32.mrf.mxu0
        %v1921 = vadd.f32 %v1760, %v1920
        %v1922 = vpop.f32.mrf.mxu0
        %1923 = vmatprep.mubr.bf16.mxu0 %v894
        %1924 = vmatmul.mubr.bf16.gmra.mxu0 %v704
        %v1925 = vpop.f32.mrf.mxu0
        %v1926 = vadd.f32 %v1765, %v1925
        %v1927 = vpop.f32.mrf.mxu0
        %v1928 = vpop.f32.mrf.mxu0
        %v1929 = vadd.f32 %v1768, %v1928
        %v1930 = vpop.f32.mrf.mxu0
        %1931 = vmatprep.mubr.bf16.mxu0 %v897
        %1932 = vmatmul.mubr.bf16.gmra.mxu0 %v716
        %v1933 = vpop.f32.mrf.mxu0
        %v1934 = vadd.f32 %v1773, %v1933
        %v1935 = vpop.f32.mrf.mxu0
        %v1936 = vpop.f32.mrf.mxu0
        %v1937 = vadd.f32 %v1776, %v1936
        %v1938 = vpop.f32.mrf.mxu0
        %1939 = vmatprep.mubr.bf16.mxu0 %v900
        %1940 = vmatmul.mubr.bf16.gmra.mxu0 %v728
        %v1941 = vpop.f32.mrf.mxu0
        %v1942 = vadd.f32 %v1781, %v1941
        %v1943 = vpop.f32.mrf.mxu0
        %v1944 = vpop.f32.mrf.mxu0
        %v1945 = vadd.f32 %v1784, %v1944
        %v1946 = vpop.f32.mrf.mxu0
        %1947 = vmatprep.mubr.bf16.mxu0 %v903
        %1948 = vmatmul.mubr.bf16.gmra.mxu0 %v740
        %v1949 = vpop.f32.mrf.mxu0
        %v1950 = vadd.f32 %v1789, %v1949
        %v1951 = vpop.f32.mrf.mxu0
        %v1952 = vpop.f32.mrf.mxu0
        %v1953 = vadd.f32 %v1792, %v1952
        %v1954 = vpop.f32.mrf.mxu0
        %1955 = vmatprep.mubr.bf16.mxu0 %v906
        %1956 = vmatmul.mubr.bf16.gmra.mxu0 %v752
        %v1957 = vpop.f32.mrf.mxu0
        %v1958 = vadd.f32 %v1797, %v1957
        %v1959 = vpop.f32.mrf.mxu0
        %v1960 = vpop.f32.mrf.mxu0
        %v1961 = vadd.f32 %v1800, %v1960
        %v1962 = vpop.f32.mrf.mxu0
        %1963 = vmatprep.mubr.bf16.mxu0 %v909
        %1964 = vmatmul.mubr.bf16.gmra.mxu0 %v764
        %v1965 = vpop.f32.mrf.mxu0
        %v1966 = vadd.f32 %v1805, %v1965
        %v1967 = vpop.f32.mrf.mxu0
        %v1968 = vpop.f32.mrf.mxu0
        %v1969 = vadd.f32 %v1808, %v1968
        %v1970 = vpop.f32.mrf.mxu0
        %1971 = vmatprep.mubr.bf16.mxu0 %v912
        %1972 = vmatmul.mubr.bf16.gmra.mxu0 %v776
        %v1973 = vpop.f32.mrf.mxu0
        %v1974 = vadd.f32 %v1813, %v1973
        %v1975 = vpop.f32.mrf.mxu0
        %v1976 = vpop.f32.mrf.mxu0
        %v1977 = vadd.f32 %v1816, %v1976
        %v1978 = vpop.f32.mrf.mxu0
        %1979 = vmatprep.mubr.bf16.mxu0 %v915
        %1980 = vmatmul.mubr.bf16.gmra.mxu0 %v788
        %v1981 = vpop.f32.mrf.mxu0
        %v1982 = vadd.f32 %v1821, %v1981
        %v1983 = vpop.f32.mrf.mxu0
        %v1984 = vpop.f32.mrf.mxu0
        %v1985 = vadd.f32 %v1824, %v1984
        %v1986 = vpop.f32.mrf.mxu0
        %1987 = vmatprep.mubr.bf16.mxu0 %v918
        %1988 = vmatmul.mubr.bf16.gmra.mxu0 %v800
        %v1989 = vpop.f32.mrf.mxu0
        %v1990 = vadd.f32 %v1829, %v1989
        %v1991 = vpop.f32.mrf.mxu0
        %v1992 = vpop.f32.mrf.mxu0
        %v1993 = vadd.f32 %v1832, %v1992
        %v1994 = vpop.f32.mrf.mxu0
        %1995 = vmatprep.mubr.bf16.mxu0 %v921
        %1996 = vmatmul.mubr.bf16.gmra.mxu0 %v812
        %v1997 = vpop.f32.mrf.mxu0
        %v1998 = vadd.f32 %v1837, %v1997
        %v1999 = vpop.f32.mrf.mxu0
        %v2000 = vpop.f32.mrf.mxu0
        %v2001 = vadd.f32 %v1840, %v2000
        %v2002 = vpop.f32.mrf.mxu0
        %2003 = vmatprep.mubr.bf16.mxu0 %v924
        %2004 = vmatmul.mubr.bf16.gmra.mxu0 %v824
        %v2005 = vpop.f32.mrf.mxu0
        %v2006 = vadd.f32 %v1845, %v2005
        %v2007 = vpop.f32.mrf.mxu0
        %v2008 = vpop.f32.mrf.mxu0
        %v2009 = vadd.f32 %v1848, %v2008
        %v2010 = vpop.f32.mrf.mxu0
        %2011 = vmatprep.mubr.bf16.mxu0 %v927
        %2012 = vmatmul.mubr.bf16.gmra.mxu0 %v836
        %v2013 = vpop.f32.mrf.mxu0
        %v2014 = vadd.f32 %v1853, %v2013
        %v2015 = vpop.f32.mrf.mxu0
        %v2016 = vpop.f32.mrf.mxu0
        %v2017 = vadd.f32 %v1856, %v2016
        %v2018 = vpop.f32.mrf.mxu0
        %2019 = vmatprep.mubr.bf16.mxu0 %v960
        %2020 = vmatmul.mubr.bf16.gmra.mxu0 %v954
        %v2021 = vpop.f32.mrf.mxu0
        %v2022 = vadd.f32 %v1861, %v2021
        %v2023 = vpop.f32.mrf.mxu0
        %v2024 = vpop.f32.mrf.mxu0
        %v2025 = vadd.f32 %v1864, %v2024
        %v2026 = vpop.f32.mrf.mxu0
        %2027 = vdwg.mxu0
        %2028 = vmatprep.subr.bf16.mxu0 0
        %2029 = vmatpush1.bf16.msra.mxu0 %v1456
        %2030 = vmatprep.subr.bf16.mxu0 0
        %2031 = vmatpush1.bf16.msra.mxu0 %v1455
        %2032 = vmatprep.subr.bf16.mxu0 0
        %2033 = vmatpush1.bf16.msra.mxu0 %v1454
        %2034 = vmatprep.subr.bf16.mxu0 0
        %2035 = vmatpush1.bf16.msra.mxu0 %v1453
        %2036 = vmatprep.subr.bf16.mxu0 0
        %2037 = vmatpush1.bf16.msra.mxu0 %v1452
        %2038 = vmatprep.subr.bf16.mxu0 0
        %2039 = vmatpush1.bf16.msra.mxu0 %v1451
        %2040 = vmatprep.subr.bf16.mxu0 0
        %2041 = vmatpush1.bf16.msra.mxu0 %v1450
        %2042 = vmatprep.subr.bf16.mxu0 0
        %2043 = vmatpush1.bf16.msra.mxu0 %v1449
        %2044 = vmatprep.subr.bf16.mxu0 0
        %2045 = vmatpush2.bf16.msra.mxu0 %v1464
        %2046 = vmatprep.subr.bf16.mxu0 0
        %2047 = vmatpush2.bf16.msra.mxu0 %v1463
        %2048 = vmatprep.subr.bf16.mxu0 0
        %2049 = vmatpush2.bf16.msra.mxu0 %v1462
        %2050 = vmatprep.subr.bf16.mxu0 0
        %2051 = vmatpush2.bf16.msra.mxu0 %v1461
        %2052 = vmatprep.subr.bf16.mxu0 0
        %2053 = vmatpush2.bf16.msra.mxu0 %v1460
        %2054 = vmatprep.subr.bf16.mxu0 0
        %2055 = vmatpush2.bf16.msra.mxu0 %v1459
        %2056 = vmatprep.subr.bf16.mxu0 0
        %2057 = vmatpush2.bf16.msra.mxu0 %v1458
        %2058 = vmatprep.subr.bf16.mxu0 0
        %2059 = vmatpush2.bf16.msra.mxu0 %v1457
        %2060 = vmatprep.mubr.bf16.mxu0 %v668
        %2061 = vmatmul.mubr.bf16.gmra.mxu0 %v624
        %v2062 = vpop.f32.mrf.mxu0
        %v2063 = vadd.f32 %v1902, %v2062
        %v2064 = vpop.f32.mrf.mxu0
        %v2065 = vpop.f32.mrf.mxu0
        %v2066 = vadd.f32 %v1905, %v2065
        %v2067 = vpop.f32.mrf.mxu0
        %2068 = vmatprep.mubr.bf16.mxu0 %v692
        %2069 = vmatmul.mubr.bf16.gmra.mxu0 %v626
        %v2070 = vpop.f32.mrf.mxu0
        %v2071 = vadd.f32 %v1910, %v2070
        %v2072 = vpop.f32.mrf.mxu0
        %v2073 = vpop.f32.mrf.mxu0
        %v2074 = vadd.f32 %v1913, %v2073
        %v2075 = vpop.f32.mrf.mxu0
        %2076 = vmatprep.mubr.bf16.mxu0 %v704
        %2077 = vmatmul.mubr.bf16.gmra.mxu0 %v627
        %v2078 = vpop.f32.mrf.mxu0
        %v2079 = vadd.f32 %v1918, %v2078
        %v2080 = vpop.f32.mrf.mxu0
        %v2081 = vpop.f32.mrf.mxu0
        %v2082 = vadd.f32 %v1921, %v2081
        %v2083 = vpop.f32.mrf.mxu0
        %2084 = vmatprep.mubr.bf16.mxu0 %v716
        %2085 = vmatmul.mubr.bf16.gmra.mxu0 %v628
        %v2086 = vpop.f32.mrf.mxu0
        %v2087 = vadd.f32 %v1926, %v2086
        %v2088 = vpop.f32.mrf.mxu0
        %v2089 = vpop.f32.mrf.mxu0
        %v2090 = vadd.f32 %v1929, %v2089
        %v2091 = vpop.f32.mrf.mxu0
        %2092 = vmatprep.mubr.bf16.mxu0 %v728
        %2093 = vmatmul.mubr.bf16.gmra.mxu0 %v629
        %v2094 = vpop.f32.mrf.mxu0
        %v2095 = vadd.f32 %v1934, %v2094
        %v2096 = vpop.f32.mrf.mxu0
        %v2097 = vpop.f32.mrf.mxu0
        %v2098 = vadd.f32 %v1937, %v2097
        %v2099 = vpop.f32.mrf.mxu0
        %2100 = vmatprep.mubr.bf16.mxu0 %v740
        %2101 = vmatmul.mubr.bf16.gmra.mxu0 %v630
        %v2102 = vpop.f32.mrf.mxu0
        %v2103 = vadd.f32 %v1942, %v2102
        %v2104 = vpop.f32.mrf.mxu0
        %v2105 = vpop.f32.mrf.mxu0
        %v2106 = vadd.f32 %v1945, %v2105
        %v2107 = vpop.f32.mrf.mxu0
        %2108 = vmatprep.mubr.bf16.mxu0 %v752
        %2109 = vmatmul.mubr.bf16.gmra.mxu0 %v631
        %v2110 = vpop.f32.mrf.mxu0
        %v2111 = vadd.f32 %v1950, %v2110
        %v2112 = vpop.f32.mrf.mxu0
        %v2113 = vpop.f32.mrf.mxu0
        %v2114 = vadd.f32 %v1953, %v2113
        %v2115 = vpop.f32.mrf.mxu0
        %2116 = vmatprep.mubr.bf16.mxu0 %v764
        %2117 = vmatmul.mubr.bf16.gmra.mxu0 %v632
        %v2118 = vpop.f32.mrf.mxu0
        %v2119 = vadd.f32 %v1958, %v2118
        %v2120 = vpop.f32.mrf.mxu0
        %v2121 = vpop.f32.mrf.mxu0
        %v2122 = vadd.f32 %v1961, %v2121
        %v2123 = vpop.f32.mrf.mxu0
        %2124 = vmatprep.mubr.bf16.mxu0 %v776
        %2125 = vmatmul.mubr.bf16.gmra.mxu0 %v633
        %v2126 = vpop.f32.mrf.mxu0
        %v2127 = vadd.f32 %v1966, %v2126
        %v2128 = vpop.f32.mrf.mxu0
        %v2129 = vpop.f32.mrf.mxu0
        %v2130 = vadd.f32 %v1969, %v2129
        %v2131 = vpop.f32.mrf.mxu0
        %2132 = vmatprep.mubr.bf16.mxu0 %v788
        %2133 = vmatmul.mubr.bf16.gmra.mxu0 %v634
        %v2134 = vpop.f32.mrf.mxu0
        %v2135 = vadd.f32 %v1974, %v2134
        %v2136 = vpop.f32.mrf.mxu0
        %v2137 = vpop.f32.mrf.mxu0
        %v2138 = vadd.f32 %v1977, %v2137
        %v2139 = vpop.f32.mrf.mxu0
        %2140 = vmatprep.mubr.bf16.mxu0 %v800
        %2141 = vmatmul.mubr.bf16.gmra.mxu0 %v635
        %v2142 = vpop.f32.mrf.mxu0
        %v2143 = vadd.f32 %v1982, %v2142
        %v2144 = vpop.f32.mrf.mxu0
        %v2145 = vpop.f32.mrf.mxu0
        %v2146 = vadd.f32 %v1985, %v2145
        %v2147 = vpop.f32.mrf.mxu0
        %2148 = vmatprep.mubr.bf16.mxu0 %v812
        %2149 = vmatmul.mubr.bf16.gmra.mxu0 %v636
        %v2150 = vpop.f32.mrf.mxu0
        %v2151 = vadd.f32 %v1990, %v2150
        %v2152 = vpop.f32.mrf.mxu0
        %v2153 = vpop.f32.mrf.mxu0
        %v2154 = vadd.f32 %v1993, %v2153
        %v2155 = vpop.f32.mrf.mxu0
        %2156 = vmatprep.mubr.bf16.mxu0 %v824
        %2157 = vmatmul.mubr.bf16.gmra.mxu0 %v637
        %v2158 = vpop.f32.mrf.mxu0
        %v2159 = vadd.f32 %v1998, %v2158
        %v2160 = vpop.f32.mrf.mxu0
        %v2161 = vpop.f32.mrf.mxu0
        %v2162 = vadd.f32 %v2001, %v2161
        %v2163 = vpop.f32.mrf.mxu0
        %2164 = vmatprep.mubr.bf16.mxu0 %v836
        %2165 = vmatmul.mubr.bf16.gmra.mxu0 %v638
        %v2166 = vpop.f32.mrf.mxu0
        %v2167 = vadd.f32 %v2006, %v2166
        %v2168 = vpop.f32.mrf.mxu0
        %v2169 = vpop.f32.mrf.mxu0
        %v2170 = vadd.f32 %v2009, %v2169
        %v2171 = vpop.f32.mrf.mxu0
        %2172 = vmatprep.mubr.bf16.mxu0 %v954
        %2173 = vmatmul.mubr.bf16.gmra.mxu0 %v639
        %v2174 = vpop.f32.mrf.mxu0
        %v2175 = vadd.f32 %v2014, %v2174
        %v2176 = vpop.f32.mrf.mxu0
        %v2177 = vpop.f32.mrf.mxu0
        %v2178 = vadd.f32 %v2017, %v2177
        %v2179 = vpop.f32.mrf.mxu0
        %2180 = vmatprep.mubr.bf16.mxu0 %v836
        %2181 = vmatmul.mubr.bf16.gmra.mxu0 %v638
        %v2182 = vpop.f32.mrf.mxu0
        %v2183 = vadd.f32 %v2022, %v2182
        %v2184 = vpop.f32.mrf.mxu0
        %v2185 = vpop.f32.mrf.mxu0
        %v2186 = vadd.f32 %v2025, %v2185
        %v2187 = vpop.f32.mrf.mxu0
        %2188 = vdwg.mxu0
        %2189 = vmatprep.subr.bf16.mxu0 0
        %2190 = vmatpush1.bf16.msra.mxu0 %v1472
        %2191 = vmatprep.subr.bf16.mxu0 0
        %2192 = vmatpush1.bf16.msra.mxu0 %v1471
        %2193 = vmatprep.subr.bf16.mxu0 0
        %2194 = vmatpush1.bf16.msra.mxu0 %v1470
        %2195 = vmatprep.subr.bf16.mxu0 0
        %2196 = vmatpush1.bf16.msra.mxu0 %v1469
        %2197 = vmatprep.subr.bf16.mxu0 0
        %2198 = vmatpush1.bf16.msra.mxu0 %v1468
        %2199 = vmatprep.subr.bf16.mxu0 0
        %2200 = vmatpush1.bf16.msra.mxu0 %v1467
        %2201 = vmatprep.subr.bf16.mxu0 0
        %2202 = vmatpush1.bf16.msra.mxu0 %v1466
        %2203 = vmatprep.subr.bf16.mxu0 0
        %2204 = vmatpush1.bf16.msra.mxu0 %v1465
        %2205 = vmatprep.subr.bf16.mxu0 0
        %2206 = vmatpush2.bf16.msra.mxu0 0
        %2207 = vmatprep.subr.bf16.mxu0 0
        %2208 = vmatpush2.bf16.msra.mxu0 0
        %2209 = vmatprep.subr.bf16.mxu0 0
        %2210 = vmatpush2.bf16.msra.mxu0 0
        %2211 = vmatprep.subr.bf16.mxu0 0
        %2212 = vmatpush2.bf16.msra.mxu0 0
        %2213 = vmatprep.subr.bf16.mxu0 0
        %2214 = vmatpush2.bf16.msra.mxu0 0
        %2215 = vmatprep.subr.bf16.mxu0 0
        %2216 = vmatpush2.bf16.msra.mxu0 0
        %2217 = vmatprep.subr.bf16.mxu0 0
        %2218 = vmatpush2.bf16.msra.mxu0 0
        %2219 = vmatprep.subr.bf16.mxu0 0
        %2220 = vmatpush2.bf16.msra.mxu0 0
        %2221 = vmatprep.mubr.bf16.mxu0 0
        %2222 = vmatmul.mubr.bf16.gmra.mxu0 %v885
        %v2223 = vpop.f32.mrf.mxu0
        %v2224 = vadd.f32 %v2063, %v2223
        %v2225 = vpop.f32.mrf.mxu0
        %v2226 = vpop.f32.mrf.mxu0
        %v2227 = vadd.f32 %v2066, %v2226
        %v2228 = vpop.f32.mrf.mxu0
        %2229 = vmatprep.mubr.bf16.mxu0 0
        %2230 = vmatmul.mubr.bf16.gmra.mxu0 %v891
        %v2231 = vpop.f32.mrf.mxu0
        %v2232 = vadd.f32 %v2071, %v2231
        %v2233 = vpop.f32.mrf.mxu0
        %v2234 = vpop.f32.mrf.mxu0
        %v2235 = vadd.f32 %v2074, %v2234
        %v2236 = vpop.f32.mrf.mxu0
        %2237 = vmatprep.mubr.bf16.mxu0 0
        %2238 = vmatmul.mubr.bf16.gmra.mxu0 %v894
        %v2239 = vpop.f32.mrf.mxu0
        %v2240 = vadd.f32 %v2079, %v2239
        %v2241 = vpop.f32.mrf.mxu0
        %v2242 = vpop.f32.mrf.mxu0
        %v2243 = vadd.f32 %v2082, %v2242
        %v2244 = vpop.f32.mrf.mxu0
        %2245 = vmatprep.mubr.bf16.mxu0 0
        %2246 = vmatmul.mubr.bf16.gmra.mxu0 %v897
        %v2247 = vpop.f32.mrf.mxu0
        %v2248 = vadd.f32 %v2087, %v2247
        %v2249 = vpop.f32.mrf.mxu0
        %v2250 = vpop.f32.mrf.mxu0
        %v2251 = vadd.f32 %v2090, %v2250
        %v2252 = vpop.f32.mrf.mxu0
        %2253 = vmatprep.mubr.bf16.mxu0 0
        %2254 = vmatmul.mubr.bf16.gmra.mxu0 %v900
        %v2255 = vpop.f32.mrf.mxu0
        %v2256 = vadd.f32 %v2095, %v2255
        %v2257 = vpop.f32.mrf.mxu0
        %v2258 = vpop.f32.mrf.mxu0
        %v2259 = vadd.f32 %v2098, %v2258
        %v2260 = vpop.f32.mrf.mxu0
        %2261 = vmatprep.mubr.bf16.mxu0 0
        %2262 = vmatmul.mubr.bf16.gmra.mxu0 %v903
        %v2263 = vpop.f32.mrf.mxu0
        %v2264 = vadd.f32 %v2103, %v2263
        %v2265 = vpop.f32.mrf.mxu0
        %v2266 = vpop.f32.mrf.mxu0
        %v2267 = vadd.f32 %v2106, %v2266
        %v2268 = vpop.f32.mrf.mxu0
        %2269 = vmatprep.mubr.bf16.mxu0 0
        %2270 = vmatmul.mubr.bf16.gmra.mxu0 %v906
        %v2271 = vpop.f32.mrf.mxu0
        %v2272 = vadd.f32 %v2111, %v2271
        %v2273 = vpop.f32.mrf.mxu0
        %v2274 = vpop.f32.mrf.mxu0
        %v2275 = vadd.f32 %v2114, %v2274
        %v2276 = vpop.f32.mrf.mxu0
        %2277 = vmatprep.mubr.bf16.mxu0 0
        %2278 = vmatmul.mubr.bf16.gmra.mxu0 %v909
        %v2279 = vpop.f32.mrf.mxu0
        %v2280 = vadd.f32 %v2119, %v2279
        %v2281 = vpop.f32.mrf.mxu0
        %v2282 = vpop.f32.mrf.mxu0
        %v2283 = vadd.f32 %v2122, %v2282
        %v2284 = vpop.f32.mrf.mxu0
        %2285 = vmatprep.mubr.bf16.mxu0 0
        %2286 = vmatmul.mubr.bf16.gmra.mxu0 %v912
        %v2287 = vpop.f32.mrf.mxu0
        %v2288 = vadd.f32 %v2127, %v2287
        %v2289 = vpop.f32.mrf.mxu0
        %v2290 = vpop.f32.mrf.mxu0
        %v2291 = vadd.f32 %v2130, %v2290
        %v2292 = vpop.f32.mrf.mxu0
        %2293 = vmatprep.mubr.bf16.mxu0 0
        %2294 = vmatmul.mubr.bf16.gmra.mxu0 %v915
        %v2295 = vpop.f32.mrf.mxu0
        %v2296 = vadd.f32 %v2135, %v2295
        %v2297 = vpop.f32.mrf.mxu0
        %v2298 = vpop.f32.mrf.mxu0
        %v2299 = vadd.f32 %v2138, %v2298
        %v2300 = vpop.f32.mrf.mxu0
        %2301 = vmatprep.mubr.bf16.mxu0 0
        %2302 = vmatmul.mubr.bf16.gmra.mxu0 %v918
        %v2303 = vpop.f32.mrf.mxu0
        %v2304 = vadd.f32 %v2143, %v2303
        %v2305 = vpop.f32.mrf.mxu0
        %v2306 = vpop.f32.mrf.mxu0
        %v2307 = vadd.f32 %v2146, %v2306
        %v2308 = vpop.f32.mrf.mxu0
        %2309 = vmatprep.mubr.bf16.mxu0 0
        %2310 = vmatmul.mubr.bf16.gmra.mxu0 %v921
        %v2311 = vpop.f32.mrf.mxu0
        %v2312 = vadd.f32 %v2151, %v2311
        %v2313 = vpop.f32.mrf.mxu0
        %v2314 = vpop.f32.mrf.mxu0
        %v2315 = vadd.f32 %v2154, %v2314
        %v2316 = vpop.f32.mrf.mxu0
        %2317 = vmatprep.mubr.bf16.mxu0 0
        %2318 = vmatmul.mubr.bf16.gmra.mxu0 %v924
        %v2319 = vpop.f32.mrf.mxu0
        %v2320 = vadd.f32 %v2159, %v2319
        %v2321 = vpop.f32.mrf.mxu0
        %v2322 = vpop.f32.mrf.mxu0
        %v2323 = vadd.f32 %v2162, %v2322
        %v2324 = vpop.f32.mrf.mxu0
        %2325 = vmatprep.mubr.bf16.mxu0 0
        %2326 = vmatmul.mubr.bf16.gmra.mxu0 %v927
        %v2327 = vpop.f32.mrf.mxu0
        %v2328 = vadd.f32 %v2167, %v2327
        %v2329 = vpop.f32.mrf.mxu0
        %v2330 = vpop.f32.mrf.mxu0
        %v2331 = vadd.f32 %v2170, %v2330
        %v2332 = vpop.f32.mrf.mxu0
        %2333 = vmatprep.mubr.bf16.mxu0 0
        %2334 = vmatmul.mubr.bf16.gmra.mxu0 %v960
        %v2335 = vpop.f32.mrf.mxu0
        %v2336 = vadd.f32 %v2175, %v2335
        %v2337 = vpop.f32.mrf.mxu0
        %v2338 = vpop.f32.mrf.mxu0
        %v2339 = vadd.f32 %v2178, %v2338
        %v2340 = vpop.f32.mrf.mxu0
        %2341 = vmatprep.mubr.bf16.mxu0 0
        %2342 = vmatmul.mubr.bf16.gmra.mxu0 %v927
        %v2343 = vpop.f32.mrf.mxu0
        %v2344 = vadd.f32 %v2183, %v2343
        %v2345 = vpop.f32.mrf.mxu0
        %v2346 = vpop.f32.mrf.mxu0
        %v2347 = vadd.f32 %v2186, %v2346
        %v2348 = vpop.f32.mrf.mxu0
        %2349 = vdwg.mxu0
        %v2350 = vadd.f32 %v2224, %v2227
        %v2351 = vadd.f32 %v2350, %v2232
        %v2352 = vadd.f32 %v2351, %v2235
        %v2353 = vadd.f32 %v2352, %v2240
        %v2354 = vadd.f32 %v2353, %v2243
        %v2355 = vadd.f32 %v2354, %v2248
        %v2356 = vadd.f32 %v2355, %v2251
        %v2357 = vadd.f32 %v2356, %v2256
        %v2358 = vadd.f32 %v2357, %v2259
        %v2359 = vadd.f32 %v2358, %v2264
        %v2360 = vadd.f32 %v2359, %v2267
        %v2361 = vadd.f32 %v2360, %v2272
        %v2362 = vadd.f32 %v2361, %v2275
        %v2363 = vadd.f32 %v2362, %v2280
        %v2364 = vadd.f32 %v2363, %v2283
        %v2365 = vadd.f32 %v2364, %v2288
        %v2366 = vadd.f32 %v2365, %v2291
        %v2367 = vadd.f32 %v2366, %v2296
        %v2368 = vadd.f32 %v2367, %v2299
        %v2369 = vadd.f32 %v2368, %v2304
        %v2370 = vadd.f32 %v2369, %v2307
        %v2371 = vadd.f32 %v2370, %v2312
        %v2372 = vadd.f32 %v2371, %v2315
        %v2373 = vadd.f32 %v2372, %v2320
        %v2374 = vadd.f32 %v2373, %v2323
        %v2375 = vadd.f32 %v2374, %v2328
        %v2376 = vadd.f32 %v2375, %v2331
        %v2377 = vadd.f32 %v2376, %v2336
        %v2378 = vadd.f32 %v2377, %v2339
        %v2379 = vadd.f32 %v2378, %v2344
        %v2380 = vadd.f32 %v2379, %v2347
        %v2381 = vrot.slane %v2380, 4
        %v2382 = vadd.f32 %v2380, %v2381
        %v2383 = vrot.slane %v2382, 2
        %v2384 = vadd.f32 %v2382, %v2383
        %v2385 = vrot.slane %v2384, 1
        %v2386 = vadd.f32 %v2384, %v2385
        %v2387 = vmul.f32 %v2386, 0.00390625
        %v2388 = vmul.f32 %v2224, %v2224
        %v2389 = vmul.f32 %v2227, %v2227
        %v2390 = vmul.f32 %v2232, %v2232
        %v2391 = vmul.f32 %v2235, %v2235
        %v2392 = vmul.f32 %v2240, %v2240
        %v2393 = vmul.f32 %v2243, %v2243
        %v2394 = vmul.f32 %v2248, %v2248
        %v2395 = vmul.f32 %v2251, %v2251
        %v2396 = vmul.f32 %v2256, %v2256
        %v2397 = vmul.f32 %v2259, %v2259
        %v2398 = vmul.f32 %v2264, %v2264
        %v2399 = vmul.f32 %v2267, %v2267
        %v2400 = vmul.f32 %v2272, %v2272
        %v2401 = vmul.f32 %v2275, %v2275
        %v2402 = vmul.f32 %v2280, %v2280
        %v2403 = vmul.f32 %v2283, %v2283
        %v2404 = vmul.f32 %v2288, %v2288
        %v2405 = vmul.f32 %v2291, %v2291
        %v2406 = vmul.f32 %v2296, %v2296
        %v2407 = vmul.f32 %v2299, %v2299
        %v2408 = vmul.f32 %v2304, %v2304
        %v2409 = vmul.f32 %v2307, %v2307
        %v2410 = vmul.f32 %v2312, %v2312
        %v2411 = vmul.f32 %v2315, %v2315
        %v2412 = vmul.f32 %v2320, %v2320
        %v2413 = vmul.f32 %v2323, %v2323
        %v2414 = vmul.f32 %v2328, %v2328
        %v2415 = vmul.f32 %v2331, %v2331
        %v2416 = vmul.f32 %v2336, %v2336
        %v2417 = vmul.f32 %v2339, %v2339
        %v2418 = vmul.f32 %v2344, %v2344
        %v2419 = vmul.f32 %v2347, %v2347
        %v2420 = vadd.f32 %v2388, %v2389
        %v2421 = vadd.f32 %v2420, %v2390
        %v2422 = vadd.f32 %v2421, %v2391
        %v2423 = vadd.f32 %v2422, %v2392
        %v2424 = vadd.f32 %v2423, %v2393
        %v2425 = vadd.f32 %v2424, %v2394
        %v2426 = vadd.f32 %v2425, %v2395
        %v2427 = vadd.f32 %v2426, %v2396
        %v2428 = vadd.f32 %v2427, %v2397
        %v2429 = vadd.f32 %v2428, %v2398
        %v2430 = vadd.f32 %v2429, %v2399
        %v2431 = vadd.f32 %v2430, %v2400
        %v2432 = vadd.f32 %v2431, %v2401
        %v2433 = vadd.f32 %v2432, %v2402
        %v2434 = vadd.f32 %v2433, %v2403
        %v2435 = vadd.f32 %v2434, %v2404
        %v2436 = vadd.f32 %v2435, %v2405
        %v2437 = vadd.f32 %v2436, %v2406
        %v2438 = vadd.f32 %v2437, %v2407
        %v2439 = vadd.f32 %v2438, %v2408
        %v2440 = vadd.f32 %v2439, %v2409
        %v2441 = vadd.f32 %v2440, %v2410
        %v2442 = vadd.f32 %v2441, %v2411
        %v2443 = vadd.f32 %v2442, %v2412
        %v2444 = vadd.f32 %v2443, %v2413
        %v2445 = vadd.f32 %v2444, %v2414
        %v2446 = vadd.f32 %v2445, %v2415
        %v2447 = vadd.f32 %v2446, %v2416
        %v2448 = vadd.f32 %v2447, %v2417
        %v2449 = vadd.f32 %v2448, %v2418
        %v2450 = vadd.f32 %v2449, %v2419
        %v2451 = vrot.slane %v2450, 4
        %v2452 = vadd.f32 %v2450, %v2451
        %v2453 = vrot.slane %v2452, 2
        %v2454 = vadd.f32 %v2452, %v2453
        %v2455 = vrot.slane %v2454, 1
        %v2456 = vadd.f32 %v2454, %v2455
        %v2457 = vmul.f32 %v2456, 0.00390625
        %v2458 = vmul.f32 %v2387, %v2387
        %v2459 = vsub.f32 %v2457, %v2458
        %v2460 = vmax.f32 %v2459, 0.0
        %v2461 = vsub.f32 %v2224, %v2387
        %v2462 = vsub.f32 %v2227, %v2387
        %v2463 = vsub.f32 %v2232, %v2387
        %v2464 = vsub.f32 %v2235, %v2387
        %v2465 = vsub.f32 %v2240, %v2387
        %v2466 = vsub.f32 %v2243, %v2387
        %v2467 = vsub.f32 %v2248, %v2387
        %v2468 = vsub.f32 %v2251, %v2387
        %v2469 = vsub.f32 %v2256, %v2387
        %v2470 = vsub.f32 %v2259, %v2387
        %v2471 = vsub.f32 %v2264, %v2387
        %v2472 = vsub.f32 %v2267, %v2387
        %v2473 = vsub.f32 %v2272, %v2387
        %v2474 = vsub.f32 %v2275, %v2387
        %v2475 = vsub.f32 %v2280, %v2387
        %v2476 = vsub.f32 %v2283, %v2387
        %v2477 = vsub.f32 %v2288, %v2387
        %v2478 = vsub.f32 %v2291, %v2387
        %v2479 = vsub.f32 %v2296, %v2387
        %v2480 = vsub.f32 %v2299, %v2387
        %v2481 = vsub.f32 %v2304, %v2387
        %v2482 = vsub.f32 %v2307, %v2387
        %v2483 = vsub.f32 %v2312, %v2387
        %v2484 = vsub.f32 %v2315, %v2387
        %v2485 = vsub.f32 %v2320, %v2387
        %v2486 = vsub.f32 %v2323, %v2387
        %v2487 = vsub.f32 %v2328, %v2387
        %v2488 = vsub.f32 %v2331, %v2387
        %v2489 = vsub.f32 %v2336, %v2387
        %v2490 = vsub.f32 %v2339, %v2387
        %v2491 = vsub.f32 %v2344, %v2387
        %v2492 = vsub.f32 %v2347, %v2387
        %v2493 = vadd.f32 %v2460, 1e-05
        %v2494 = vrsqrt.pop %v2493
        %v2495 = vmul.f32 %v2461, %v2494
        %v2496 = vmul.f32 %v2462, %v2494
        %v2497 = vmul.f32 %v2463, %v2494
        %v2498 = vmul.f32 %v2464, %v2494
        %v2499 = vmul.f32 %v2465, %v2494
        %v2500 = vmul.f32 %v2466, %v2494
        %v2501 = vmul.f32 %v2467, %v2494
        %v2502 = vmul.f32 %v2468, %v2494
        %v2503 = vmul.f32 %v2469, %v2494
        %v2504 = vmul.f32 %v2470, %v2494
        %v2505 = vmul.f32 %v2471, %v2494
        %v2506 = vmul.f32 %v2472, %v2494
        %v2507 = vmul.f32 %v2473, %v2494
        %v2508 = vmul.f32 %v2474, %v2494
        %v2509 = vmul.f32 %v2475, %v2494
        %v2510 = vmul.f32 %v2476, %v2494
        %v2511 = vmul.f32 %v2477, %v2494
        %v2512 = vmul.f32 %v2478, %v2494
        %v2513 = vmul.f32 %v2479, %v2494
        %v2514 = vmul.f32 %v2480, %v2494
        %v2515 = vmul.f32 %v2481, %v2494
        %v2516 = vmul.f32 %v2482, %v2494
        %v2517 = vmul.f32 %v2483, %v2494
        %v2518 = vmul.f32 %v2484, %v2494
        %v2519 = vmul.f32 %v2485, %v2494
        %v2520 = vmul.f32 %v2486, %v2494
        %v2521 = vmul.f32 %v2487, %v2494
        %v2522 = vmul.f32 %v2488, %v2494
        %v2523 = vmul.f32 %v2489, %v2494
        %v2524 = vmul.f32 %v2490, %v2494
        %v2525 = vmul.f32 %v2491, %v2494
        %v2526 = vmul.f32 %v2492, %v2494
        %v2527 = vld [vmem:[%s3] sm:$0x1]
        %v2529 = vlaneseq
        %v2530 = vshrl.u32 %v2529, 7
        %v2531 = vsub.s32 0, %v2530
        %v2532 = vrot.slane %v2527, %v2531
        %v2534 = vmul.f32 %v2495, %v2532
        %v2535 = vmul.f32 %v2496, %v2532
        %v2536 = vmul.f32 %v2497, %v2532
        %v2537 = vmul.f32 %v2498, %v2532
        %v2538 = vmul.f32 %v2499, %v2532
        %v2539 = vmul.f32 %v2500, %v2532
        %v2540 = vmul.f32 %v2501, %v2532
        %v2541 = vmul.f32 %v2502, %v2532
        %v2542 = vmul.f32 %v2503, %v2532
        %v2543 = vmul.f32 %v2504, %v2532
        %v2544 = vmul.f32 %v2505, %v2532
        %v2545 = vmul.f32 %v2506, %v2532
        %v2546 = vmul.f32 %v2507, %v2532
        %v2547 = vmul.f32 %v2508, %v2532
        %v2548 = vmul.f32 %v2509, %v2532
        %v2549 = vmul.f32 %v2510, %v2532
        %v2550 = vmul.f32 %v2511, %v2532
        %v2551 = vmul.f32 %v2512, %v2532
        %v2552 = vmul.f32 %v2513, %v2532
        %v2553 = vmul.f32 %v2514, %v2532
        %v2554 = vmul.f32 %v2515, %v2532
        %v2555 = vmul.f32 %v2516, %v2532
        %v2556 = vmul.f32 %v2517, %v2532
        %v2557 = vmul.f32 %v2518, %v2532
        %v2558 = vmul.f32 %v2519, %v2532
        %v2559 = vmul.f32 %v2520, %v2532
        %v2560 = vmul.f32 %v2521, %v2532
        %v2561 = vmul.f32 %v2522, %v2532
        %v2562 = vmul.f32 %v2523, %v2532
        %v2563 = vmul.f32 %v2524, %v2532
        %v2564 = vmul.f32 %v2525, %v2532
        %v2565 = vmul.f32 %v2526, %v2532
        %v2566 = vld [vmem:[%s4] sm:$0x1]
        %v2568 = vlaneseq
        %v2569 = vshrl.u32 %v2568, 7
        %v2570 = vsub.s32 0, %v2569
        %v2571 = vrot.slane %v2566, %v2570
        %v2573 = vadd.f32 %v2534, %v2571
        %v2574 = vadd.f32 %v2535, %v2571
        %v2575 = vadd.f32 %v2536, %v2571
        %v2576 = vadd.f32 %v2537, %v2571
        %v2577 = vadd.f32 %v2538, %v2571
        %v2578 = vadd.f32 %v2539, %v2571
        %v2579 = vadd.f32 %v2540, %v2571
        %v2580 = vadd.f32 %v2541, %v2571
        %v2581 = vadd.f32 %v2542, %v2571
        %v2582 = vadd.f32 %v2543, %v2571
        %v2583 = vadd.f32 %v2544, %v2571
        %v2584 = vadd.f32 %v2545, %v2571
        %v2585 = vadd.f32 %v2546, %v2571
        %v2586 = vadd.f32 %v2547, %v2571
        %v2587 = vadd.f32 %v2548, %v2571
        %v2588 = vadd.f32 %v2549, %v2571
        %v2589 = vadd.f32 %v2550, %v2571
        %v2590 = vadd.f32 %v2551, %v2571
        %v2591 = vadd.f32 %v2552, %v2571
        %v2592 = vadd.f32 %v2553, %v2571
        %v2593 = vadd.f32 %v2554, %v2571
        %v2594 = vadd.f32 %v2555, %v2571
        %v2595 = vadd.f32 %v2556, %v2571
        %v2596 = vadd.f32 %v2557, %v2571
        %v2597 = vadd.f32 %v2558, %v2571
        %v2598 = vadd.f32 %v2559, %v2571
        %v2599 = vadd.f32 %v2560, %v2571
        %v2600 = vadd.f32 %v2561, %v2571
        %v2601 = vadd.f32 %v2562, %v2571
        %v2602 = vadd.f32 %v2563, %v2571
        %v2603 = vadd.f32 %v2564, %v2571
        %v2604 = vadd.f32 %v2565, %v2571
        %v2605 = vmax.f32 %v2573, 0.0
        %v2606 = vmax.f32 %v2574, 0.0
        %v2607 = vmax.f32 %v2575, 0.0
        %v2608 = vmax.f32 %v2576, 0.0
        %v2609 = vmax.f32 %v2577, 0.0
        %v2610 = vmax.f32 %v2578, 0.0
        %v2611 = vmax.f32 %v2579, 0.0
        %v2612 = vmax.f32 %v2580, 0.0
        %v2613 = vmax.f32 %v2581, 0.0
        %v2614 = vmax.f32 %v2582, 0.0
        %v2615 = vmax.f32 %v2583, 0.0
        %v2616 = vmax.f32 %v2584, 0.0
        %v2617 = vmax.f32 %v2585, 0.0
        %v2618 = vmax.f32 %v2586, 0.0
        %v2619 = vmax.f32 %v2587, 0.0
        %v2620 = vmax.f32 %v2588, 0.0
        %v2621 = vmax.f32 %v2589, 0.0
        %v2622 = vmax.f32 %v2590, 0.0
        %v2623 = vmax.f32 %v2591, 0.0
        %v2624 = vmax.f32 %v2592, 0.0
        %v2625 = vmax.f32 %v2593, 0.0
        %v2626 = vmax.f32 %v2594, 0.0
        %v2627 = vmax.f32 %v2595, 0.0
        %v2628 = vmax.f32 %v2596, 0.0
        %v2629 = vmax.f32 %v2597, 0.0
        %v2630 = vmax.f32 %v2598, 0.0
        %v2631 = vmax.f32 %v2599, 0.0
        %v2632 = vmax.f32 %v2600, 0.0
        %v2633 = vmax.f32 %v2601, 0.0
        %v2634 = vmax.f32 %v2602, 0.0
        %v2635 = vmax.f32 %v2603, 0.0
        %v2636 = vmax.f32 %v2604, 0.0
        %v2637 = vpack.c.bf16 %v2606, %v2605
        %v2638 = vpack.c.bf16 %v2608, %v2607
        %v2639 = vpack.c.bf16 %v2610, %v2609
        %v2640 = vpack.c.bf16 %v2612, %v2611
        %v2641 = vpack.c.bf16 %v2614, %v2613
        %v2642 = vpack.c.bf16 %v2616, %v2615
        %v2643 = vpack.c.bf16 %v2618, %v2617
        %v2644 = vpack.c.bf16 %v2620, %v2619
        %v2645 = vpack.c.bf16 %v2622, %v2621
        %v2646 = vpack.c.bf16 %v2624, %v2623
        %v2647 = vpack.c.bf16 %v2626, %v2625
        %v2648 = vpack.c.bf16 %v2628, %v2627
        %v2649 = vpack.c.bf16 %v2630, %v2629
        %v2650 = vpack.c.bf16 %v2632, %v2631
        %v2651 = vpack.c.bf16 %v2634, %v2633
        %v2652 = vpack.c.bf16 %v2636, %v2635
        %v2654 = vshrl.u32 %v2638, 16
        %v2657 = vshrl.u32 %v2637, 16
        %v2660 = vshrl.u32 %v2639, 16
        %v2663 = vshrl.u32 %v2640, 16
        %v2666 = vshrl.u32 %v2641, 16
        %v2669 = vshrl.u32 %v2642, 16
        %v2672 = vshrl.u32 %v2643, 16
        %v2675 = vshrl.u32 %v2644, 16
        %v2678 = vshrl.u32 %v2645, 16
        %v2681 = vshrl.u32 %v2646, 16
        %v2684 = vshrl.u32 %v2647, 16
        %v2687 = vshrl.u32 %v2648, 16
        %v2690 = vshrl.u32 %v2649, 16
        %v2693 = vshrl.u32 %v2650, 16
        %v2696 = vshrl.u32 %v2651, 16
        %v2699 = vshrl.u32 %v2652, 16
        %v2717 = vrot.slane %v2654, 7
        %v2718 = vshll.u32 %v2638, 16
        %v2720 = vor.u32 %v2717, %v2718
        %v2721 = vrot.slane %v2657, 7
        %v2722 = vshll.u32 %v2637, 16
        %v2724 = vor.u32 %v2721, %v2722
        %v2725 = vrot.slane %v2660, 7
        %v2726 = vshll.u32 %v2639, 16
        %v2728 = vor.u32 %v2725, %v2726
        %v2729 = vrot.slane %v2663, 7
        %v2730 = vshll.u32 %v2640, 16
        %v2732 = vor.u32 %v2729, %v2730
        %v2733 = vrot.slane %v2666, 7
        %v2734 = vshll.u32 %v2641, 16
        %v2736 = vor.u32 %v2733, %v2734
        %v2737 = vrot.slane %v2669, 7
        %v2738 = vshll.u32 %v2642, 16
        %v2740 = vor.u32 %v2737, %v2738
        %v2741 = vrot.slane %v2672, 7
        %v2742 = vshll.u32 %v2643, 16
        %v2744 = vor.u32 %v2741, %v2742
        %v2745 = vrot.slane %v2675, 7
        %v2746 = vshll.u32 %v2644, 16
        %v2748 = vor.u32 %v2745, %v2746
        %v2749 = vrot.slane %v2678, 7
        %v2750 = vshll.u32 %v2645, 16
        %v2752 = vor.u32 %v2749, %v2750
        %v2753 = vrot.slane %v2681, 7
        %v2754 = vshll.u32 %v2646, 16
        %v2756 = vor.u32 %v2753, %v2754
        %v2757 = vrot.slane %v2684, 7
        %v2758 = vshll.u32 %v2647, 16
        %v2760 = vor.u32 %v2757, %v2758
        %v2761 = vrot.slane %v2687, 7
        %v2762 = vshll.u32 %v2648, 16
        %v2764 = vor.u32 %v2761, %v2762
        %v2765 = vrot.slane %v2690, 7
        %v2766 = vshll.u32 %v2649, 16
        %v2768 = vor.u32 %v2765, %v2766
        %v2769 = vrot.slane %v2693, 7
        %v2770 = vshll.u32 %v2650, 16
        %v2772 = vor.u32 %v2769, %v2770
        %v2773 = vrot.slane %v2696, 7
        %v2774 = vshll.u32 %v2651, 16
        %v2776 = vor.u32 %v2773, %v2774
        %v2777 = vrot.slane %v2699, 7
        %v2778 = vshll.u32 %v2652, 16
        %v2780 = vor.u32 %v2777, %v2778
        %v2813 = vrot.slane %v2718, 7
        %v2814 = vrot.slane %v2722, 7
        %v2815 = vrot.slane %v2726, 7
        %v2816 = vrot.slane %v2730, 7
        %v2817 = vrot.slane %v2734, 7
        %v2818 = vrot.slane %v2738, 7
        %v2819 = vrot.slane %v2742, 7
        %v2820 = vrot.slane %v2746, 7
        %v2821 = vrot.slane %v2750, 7
        %v2822 = vrot.slane %v2754, 7
        %v2823 = vrot.slane %v2758, 7
        %v2824 = vrot.slane %v2762, 7
        %v2825 = vrot.slane %v2766, 7
        %v2826 = vrot.slane %v2770, 7
        %v2827 = vrot.slane %v2774, 7
        %v2828 = vrot.slane %v2778, 7
        %v2845 = vsel %vm623, %v2654, %v2720
        %v2846 = vsel %vm623, %v2657, %v2724
        %v2847 = vsel %vm623, %v2660, %v2728
        %v2848 = vsel %vm623, %v2663, %v2732
        %v2849 = vsel %vm623, %v2666, %v2736
        %v2850 = vsel %vm623, %v2669, %v2740
        %v2851 = vsel %vm623, %v2672, %v2744
        %v2852 = vsel %vm623, %v2675, %v2748
        %v2853 = vsel %vm623, %v2678, %v2752
        %v2854 = vsel %vm623, %v2681, %v2756
        %v2855 = vsel %vm623, %v2684, %v2760
        %v2856 = vsel %vm623, %v2687, %v2764
        %v2857 = vsel %vm623, %v2690, %v2768
        %v2858 = vsel %vm623, %v2693, %v2772
        %v2859 = vsel %vm623, %v2696, %v2776
        %v2860 = vsel %vm623, %v2699, %v2780
        %v2861 = vsel %vm623, %v2717, %v2813
        %v2862 = vsel %vm623, %v2721, %v2814
        %v2863 = vsel %vm623, %v2725, %v2815
        %v2864 = vsel %vm623, %v2729, %v2816
        %v2865 = vsel %vm623, %v2733, %v2817
        %v2866 = vsel %vm623, %v2737, %v2818
        %v2867 = vsel %vm623, %v2741, %v2819
        %v2868 = vsel %vm623, %v2745, %v2820
        %v2869 = vsel %vm623, %v2749, %v2821
        %v2870 = vsel %vm623, %v2753, %v2822
        %v2871 = vsel %vm623, %v2757, %v2823
        %v2872 = vsel %vm623, %v2761, %v2824
        %v2873 = vsel %vm623, %v2765, %v2825
        %v2874 = vsel %vm623, %v2769, %v2826
        %v2875 = vsel %vm623, %v2773, %v2827
        %v2876 = vsel %vm623, %v2777, %v2828
        %v2878 = vshrl.u32 %v2845, 16
        %v2880 = vshll.u32 %v2845, 16
        %v2882 = vrot.slane %v2880, 1
        %v2883 = vor.u32 %v2878, %v2882
        %v2885 = vshll.u32 %v2861, 16
        %v2887 = vrot.slane %v2885, 1
        %v2888 = vsel %vm656, %v2883, %v2887
        %v2890 = vshrl.u32 %v2846, 16
        %v2892 = vshll.u32 %v2846, 16
        %v2894 = vrot.slane %v2892, 1
        %v2895 = vor.u32 %v2890, %v2894
        %v2897 = vshll.u32 %v2862, 16
        %v2899 = vrot.slane %v2897, 1
        %v2900 = vsel %vm656, %v2895, %v2899
        %v2902 = vshrl.u32 %v2847, 16
        %v2904 = vshll.u32 %v2847, 16
        %v2906 = vrot.slane %v2904, 1
        %v2907 = vor.u32 %v2902, %v2906
        %v2909 = vshll.u32 %v2863, 16
        %v2911 = vrot.slane %v2909, 1
        %v2912 = vsel %vm656, %v2907, %v2911
        %v2914 = vshrl.u32 %v2848, 16
        %v2916 = vshll.u32 %v2848, 16
        %v2918 = vrot.slane %v2916, 1
        %v2919 = vor.u32 %v2914, %v2918
        %v2921 = vshll.u32 %v2864, 16
        %v2923 = vrot.slane %v2921, 1
        %v2924 = vsel %vm656, %v2919, %v2923
        %v2926 = vshrl.u32 %v2849, 16
        %v2928 = vshll.u32 %v2849, 16
        %v2930 = vrot.slane %v2928, 1
        %v2931 = vor.u32 %v2926, %v2930
        %v2933 = vshll.u32 %v2865, 16
        %v2935 = vrot.slane %v2933, 1
        %v2936 = vsel %vm656, %v2931, %v2935
        %v2938 = vshrl.u32 %v2850, 16
        %v2940 = vshll.u32 %v2850, 16
        %v2942 = vrot.slane %v2940, 1
        %v2943 = vor.u32 %v2938, %v2942
        %v2945 = vshll.u32 %v2866, 16
        %v2947 = vrot.slane %v2945, 1
        %v2948 = vsel %vm656, %v2943, %v2947
        %v2950 = vshrl.u32 %v2851, 16
        %v2952 = vshll.u32 %v2851, 16
        %v2954 = vrot.slane %v2952, 1
        %v2955 = vor.u32 %v2950, %v2954
        %v2957 = vshll.u32 %v2867, 16
        %v2959 = vrot.slane %v2957, 1
        %v2960 = vsel %vm656, %v2955, %v2959
        %v2962 = vshrl.u32 %v2852, 16
        %v2964 = vshll.u32 %v2852, 16
        %v2966 = vrot.slane %v2964, 1
        %v2967 = vor.u32 %v2962, %v2966
        %v2969 = vshll.u32 %v2868, 16
        %v2971 = vrot.slane %v2969, 1
        %v2972 = vsel %vm656, %v2967, %v2971
        %v2974 = vshrl.u32 %v2853, 16
        %v2976 = vshll.u32 %v2853, 16
        %v2978 = vrot.slane %v2976, 1
        %v2979 = vor.u32 %v2974, %v2978
        %v2981 = vshll.u32 %v2869, 16
        %v2983 = vrot.slane %v2981, 1
        %v2984 = vsel %vm656, %v2979, %v2983
        %v2986 = vshrl.u32 %v2854, 16
        %v2988 = vshll.u32 %v2854, 16
        %v2990 = vrot.slane %v2988, 1
        %v2991 = vor.u32 %v2986, %v2990
        %v2993 = vshll.u32 %v2870, 16
        %v2995 = vrot.slane %v2993, 1
        %v2996 = vsel %vm656, %v2991, %v2995
        %v2998 = vshrl.u32 %v2855, 16
        %v3000 = vshll.u32 %v2855, 16
        %v3002 = vrot.slane %v3000, 1
        %v3003 = vor.u32 %v2998, %v3002
        %v3005 = vshll.u32 %v2871, 16
        %v3007 = vrot.slane %v3005, 1
        %v3008 = vsel %vm656, %v3003, %v3007
        %v3010 = vshrl.u32 %v2856, 16
        %v3012 = vshll.u32 %v2856, 16
        %v3014 = vrot.slane %v3012, 1
        %v3015 = vor.u32 %v3010, %v3014
        %v3017 = vshll.u32 %v2872, 16
        %v3019 = vrot.slane %v3017, 1
        %v3020 = vsel %vm656, %v3015, %v3019
        %v3022 = vshrl.u32 %v2857, 16
        %v3024 = vshll.u32 %v2857, 16
        %v3026 = vrot.slane %v3024, 1
        %v3027 = vor.u32 %v3022, %v3026
        %v3029 = vshll.u32 %v2873, 16
        %v3031 = vrot.slane %v3029, 1
        %v3032 = vsel %vm656, %v3027, %v3031
        %v3034 = vshrl.u32 %v2858, 16
        %v3036 = vshll.u32 %v2858, 16
        %v3038 = vrot.slane %v3036, 1
        %v3039 = vor.u32 %v3034, %v3038
        %v3041 = vshll.u32 %v2874, 16
        %v3043 = vrot.slane %v3041, 1
        %v3044 = vsel %vm656, %v3039, %v3043
        %v3046 = vshrl.u32 %v2859, 16
        %v3048 = vshll.u32 %v2859, 16
        %v3050 = vrot.slane %v3048, 1
        %v3051 = vor.u32 %v3046, %v3050
        %v3053 = vshll.u32 %v2875, 16
        %v3055 = vrot.slane %v3053, 1
        %v3056 = vsel %vm656, %v3051, %v3055
        %v3102 = vrot.slane %v2845, 1
        %v3103 = vrot.slane %v2861, 1
        %v3104 = vsel %vm882, %v3102, %v3103
        %v3105 = vrot.slane %v2846, 1
        %v3106 = vrot.slane %v2862, 1
        %v3107 = vsel %vm882, %v3105, %v3106
        %v3108 = vrot.slane %v2847, 1
        %v3109 = vrot.slane %v2863, 1
        %v3110 = vsel %vm882, %v3108, %v3109
        %v3111 = vrot.slane %v2848, 1
        %v3112 = vrot.slane %v2864, 1
        %v3113 = vsel %vm882, %v3111, %v3112
        %v3114 = vrot.slane %v2849, 1
        %v3115 = vrot.slane %v2865, 1
        %v3116 = vsel %vm882, %v3114, %v3115
        %v3117 = vrot.slane %v2850, 1
        %v3118 = vrot.slane %v2866, 1
        %v3119 = vsel %vm882, %v3117, %v3118
        %v3120 = vrot.slane %v2851, 1
        %v3121 = vrot.slane %v2867, 1
        %v3122 = vsel %vm882, %v3120, %v3121
        %v3123 = vrot.slane %v2852, 1
        %v3124 = vrot.slane %v2868, 1
        %v3125 = vsel %vm882, %v3123, %v3124
        %v3126 = vrot.slane %v2853, 1
        %v3127 = vrot.slane %v2869, 1
        %v3128 = vsel %vm882, %v3126, %v3127
        %v3129 = vrot.slane %v2854, 1
        %v3130 = vrot.slane %v2870, 1
        %v3131 = vsel %vm882, %v3129, %v3130
        %v3132 = vrot.slane %v2855, 1
        %v3133 = vrot.slane %v2871, 1
        %v3134 = vsel %vm882, %v3132, %v3133
        %v3135 = vrot.slane %v2856, 1
        %v3136 = vrot.slane %v2872, 1
        %v3137 = vsel %vm882, %v3135, %v3136
        %v3138 = vrot.slane %v2857, 1
        %v3139 = vrot.slane %v2873, 1
        %v3140 = vsel %vm882, %v3138, %v3139
        %v3141 = vrot.slane %v2858, 1
        %v3142 = vrot.slane %v2874, 1
        %v3143 = vsel %vm882, %v3141, %v3142
        %v3144 = vrot.slane %v2859, 1
        %v3145 = vrot.slane %v2875, 1
        %v3146 = vsel %vm882, %v3144, %v3145
        %v3163 = vshrl.u32 %v2860, 16
        %v3165 = vshll.u32 %v2860, 16
        %v3167 = vrot.slane %v3165, 1
        %v3168 = vor.u32 %v3163, %v3167
        %v3170 = vshll.u32 %v2876, 16
        %v3172 = vrot.slane %v3170, 1
        %v3173 = vsel %vm656, %v3168, %v3172
        %v3177 = vrot.slane %v2860, 1
        %v3178 = vrot.slane %v2876, 1
        %v3179 = vsel %vm882, %v3177, %v3178
        %v3181 = vld [vmem:[#allocation7] sm:$0xf]
        %v3182 = vld [vmem:[#allocation7 + $0x4] sm:$0xf]
        %v3183 = vld [vmem:[#allocation7 + $0x8] sm:$0xf]
        %v3184 = vld [vmem:[#allocation7 + $0xc] sm:$0xf]
        %v3185 = vld [vmem:[#allocation7 + $0x10] sm:$0xf]
        %v3186 = vld [vmem:[#allocation7 + $0x14] sm:$0xf]
        %v3187 = vld [vmem:[#allocation7 + $0x18] sm:$0xf]
        %v3188 = vld [vmem:[#allocation7 + $0x1c] sm:$0xf]
        %v3189 = vld [vmem:[#allocation7 + $0x20] sm:$0xf]
        %v3190 = vld [vmem:[#allocation7 + $0x24] sm:$0xf]
        %v3191 = vld [vmem:[#allocation7 + $0x28] sm:$0xf]
        %v3192 = vld [vmem:[#allocation7 + $0x2c] sm:$0xf]
        %v3193 = vld [vmem:[#allocation7 + $0x30] sm:$0xf]
        %v3194 = vld [vmem:[#allocation7 + $0x34] sm:$0xf]
        %v3195 = vld [vmem:[#allocation7 + $0x38] sm:$0xf]
        %v3196 = vld [vmem:[#allocation7 + $0x3c] sm:$0xf]
        %v3197 = vld [vmem:[#allocation7 + $0x40] sm:$0xf]
        %v3198 = vld [vmem:[#allocation7 + $0x44] sm:$0xf]
        %v3199 = vld [vmem:[#allocation7 + $0x48] sm:$0xf]
        %v3200 = vld [vmem:[#allocation7 + $0x4c] sm:$0xf]
        %v3201 = vld [vmem:[#allocation7 + $0x50] sm:$0xf]
        %v3202 = vld [vmem:[#allocation7 + $0x54] sm:$0xf]
        %v3203 = vld [vmem:[#allocation7 + $0x58] sm:$0xf]
        %v3204 = vld [vmem:[#allocation7 + $0x5c] sm:$0xf]
        %v3205 = vld [vmem:[#allocation7 + $0x60] sm:$0xf]
        %v3206 = vld [vmem:[#allocation7 + $0x64] sm:$0xf]
        %v3207 = vld [vmem:[#allocation7 + $0x68] sm:$0xf]
        %v3208 = vld [vmem:[#allocation7 + $0x6c] sm:$0xf]
        %v3209 = vld [vmem:[#allocation7 + $0x70] sm:$0xf]
        %v3210 = vld [vmem:[#allocation7 + $0x74] sm:$0xf]
        %v3211 = vld [vmem:[#allocation7 + $0x78] sm:$0xf]
        %v3212 = vld [vmem:[#allocation7 + $0x7c] sm:$0xf]
        %v3213 = vld [vmem:[#allocation7 + $0x80] sm:$0xf]
        %v3214 = vld [vmem:[#allocation7 + $0x84] sm:$0xf]
        %v3215 = vld [vmem:[#allocation7 + $0x88] sm:$0xf]
        %v3216 = vld [vmem:[#allocation7 + $0x8c] sm:$0xf]
        %v3217 = vld [vmem:[#allocation7 + $0x90] sm:$0xf]
        %v3218 = vld [vmem:[#allocation7 + $0x94] sm:$0xf]
        %v3219 = vld [vmem:[#allocation7 + $0x98] sm:$0xf]
        %v3220 = vld [vmem:[#allocation7 + $0x9c] sm:$0xf]
        %v3221 = vld [vmem:[#allocation7 + $0xa0] sm:$0xf]
        %v3222 = vld [vmem:[#allocation7 + $0xa4] sm:$0xf]
        %v3223 = vld [vmem:[#allocation7 + $0xa8] sm:$0xf]
        %v3224 = vld [vmem:[#allocation7 + $0xac] sm:$0xf]
        %v3225 = vld [vmem:[#allocation7 + $0xb0] sm:$0xf]
        %v3226 = vld [vmem:[#allocation7 + $0xb4] sm:$0xf]
        %v3227 = vld [vmem:[#allocation7 + $0xb8] sm:$0xf]
        %v3228 = vld [vmem:[#allocation7 + $0xbc] sm:$0xf]
        %v3229 = vld [vmem:[#allocation7 + $0xc0] sm:$0xf]
        %v3230 = vld [vmem:[#allocation7 + $0xc4] sm:$0xf]
        %v3231 = vld [vmem:[#allocation7 + $0xc8] sm:$0xf]
        %v3232 = vld [vmem:[#allocation7 + $0xcc] sm:$0xf]
        %v3233 = vld [vmem:[#allocation7 + $0xd0] sm:$0xf]
        %v3234 = vld [vmem:[#allocation7 + $0xd4] sm:$0xf]
        %v3235 = vld [vmem:[#allocation7 + $0xd8] sm:$0xf]
        %v3236 = vld [vmem:[#allocation7 + $0xdc] sm:$0xf]
        %v3237 = vld [vmem:[#allocation7 + $0xe0] sm:$0xf]
        %v3238 = vld [vmem:[#allocation7 + $0xe4] sm:$0xf]
        %v3239 = vld [vmem:[#allocation7 + $0xe8] sm:$0xf]
        %v3240 = vld [vmem:[#allocation7 + $0xec] sm:$0xf]
        %v3241 = vld [vmem:[#allocation7 + $0xf0] sm:$0xf]
        %v3242 = vld [vmem:[#allocation7 + $0xf4] sm:$0xf]
        %v3243 = vld [vmem:[#allocation7 + $0xf8] sm:$0xf]
        %v3244 = vld [vmem:[#allocation7 + $0xfc] sm:$0xf]
        %v3245 = vld [vmem:[#allocation7 + $0x100] sm:$0xf]
        %v3246 = vld [vmem:[#allocation7 + $0x104] sm:$0xf]
        %v3247 = vld [vmem:[#allocation7 + $0x108] sm:$0xf]
        %v3248 = vld [vmem:[#allocation7 + $0x10c] sm:$0xf]
        %v3249 = vld [vmem:[#allocation7 + $0x110] sm:$0xf]
        %v3250 = vld [vmem:[#allocation7 + $0x114] sm:$0xf]
        %v3251 = vld [vmem:[#allocation7 + $0x118] sm:$0xf]
        %v3252 = vld [vmem:[#allocation7 + $0x11c] sm:$0xf]
        %v3253 = vld [vmem:[#allocation7 + $0x120] sm:$0xf]
        %v3254 = vld [vmem:[#allocation7 + $0x124] sm:$0xf]
        %v3255 = vld [vmem:[#allocation7 + $0x128] sm:$0xf]
        %v3256 = vld [vmem:[#allocation7 + $0x12c] sm:$0xf]
        %v3257 = vld [vmem:[#allocation7 + $0x130] sm:$0xf]
        %v3258 = vld [vmem:[#allocation7 + $0x134] sm:$0xf]
        %v3259 = vld [vmem:[#allocation7 + $0x138] sm:$0xf]
        %v3260 = vld [vmem:[#allocation7 + $0x13c] sm:$0xf]
        %v3261 = vld [vmem:[#allocation7 + $0x140] sm:$0xf]
        %v3262 = vld [vmem:[#allocation7 + $0x144] sm:$0xf]
        %v3263 = vld [vmem:[#allocation7 + $0x148] sm:$0xf]
        %v3264 = vld [vmem:[#allocation7 + $0x14c] sm:$0xf]
        %v3265 = vld [vmem:[#allocation7 + $0x150] sm:$0xf]
        %v3266 = vld [vmem:[#allocation7 + $0x154] sm:$0xf]
        %v3267 = vld [vmem:[#allocation7 + $0x158] sm:$0xf]
        %v3268 = vld [vmem:[#allocation7 + $0x15c] sm:$0xf]
        %v3269 = vld [vmem:[#allocation7 + $0x160] sm:$0xf]
        %v3270 = vld [vmem:[#allocation7 + $0x164] sm:$0xf]
        %v3271 = vld [vmem:[#allocation7 + $0x168] sm:$0xf]
        %v3272 = vld [vmem:[#allocation7 + $0x16c] sm:$0xf]
        %v3273 = vld [vmem:[#allocation7 + $0x170] sm:$0xf]
        %v3274 = vld [vmem:[#allocation7 + $0x174] sm:$0xf]
        %v3275 = vld [vmem:[#allocation7 + $0x178] sm:$0xf]
        %v3276 = vld [vmem:[#allocation7 + $0x17c] sm:$0xf]
        %v3277 = vld [vmem:[#allocation7 + $0x180] sm:$0xf]
        %v3278 = vld [vmem:[#allocation7 + $0x184] sm:$0xf]
        %v3279 = vld [vmem:[#allocation7 + $0x188] sm:$0xf]
        %v3280 = vld [vmem:[#allocation7 + $0x18c] sm:$0xf]
        %v3281 = vld [vmem:[#allocation7 + $0x190] sm:$0xf]
        %v3282 = vld [vmem:[#allocation7 + $0x194] sm:$0xf]
        %v3283 = vld [vmem:[#allocation7 + $0x198] sm:$0xf]
        %v3284 = vld [vmem:[#allocation7 + $0x19c] sm:$0xf]
        %v3285 = vld [vmem:[#allocation7 + $0x1a0] sm:$0xf]
        %v3286 = vld [vmem:[#allocation7 + $0x1a4] sm:$0xf]
        %v3287 = vld [vmem:[#allocation7 + $0x1a8] sm:$0xf]
        %v3288 = vld [vmem:[#allocation7 + $0x1ac] sm:$0xf]
        %v3289 = vld [vmem:[#allocation7 + $0x1b0] sm:$0xf]
        %v3290 = vld [vmem:[#allocation7 + $0x1b4] sm:$0xf]
        %v3291 = vld [vmem:[#allocation7 + $0x1b8] sm:$0xf]
        %v3292 = vld [vmem:[#allocation7 + $0x1bc] sm:$0xf]
        %v3293 = vld [vmem:[#allocation7 + $0x1c0] sm:$0xf]
        %v3294 = vld [vmem:[#allocation7 + $0x1c4] sm:$0xf]
        %v3295 = vld [vmem:[#allocation7 + $0x1c8] sm:$0xf]
        %v3296 = vld [vmem:[#allocation7 + $0x1cc] sm:$0xf]
        %v3297 = vld [vmem:[#allocation7 + $0x1d0] sm:$0xf]
        %v3298 = vld [vmem:[#allocation7 + $0x1d4] sm:$0xf]
        %v3299 = vld [vmem:[#allocation7 + $0x1d8] sm:$0xf]
        %v3300 = vld [vmem:[#allocation7 + $0x1dc] sm:$0xf]
        %v3301 = vld [vmem:[#allocation7 + $0x1e0] sm:$0xf]
        %v3302 = vld [vmem:[#allocation7 + $0x1e4] sm:$0xf]
        %v3303 = vld [vmem:[#allocation7 + $0x1e8] sm:$0xf]
        %v3304 = vld [vmem:[#allocation7 + $0x1ec] sm:$0xf]
        %v3305 = vld [vmem:[#allocation7 + $0x1f0] sm:$0xf]
        %v3306 = vld [vmem:[#allocation7 + $0x1f4] sm:$0xf]
        %v3307 = vld [vmem:[#allocation7 + $0x1f8] sm:$0xf]
        %v3308 = vld [vmem:[#allocation7 + $0x1fc] sm:$0xf]
        %v3309 = vld [vmem:[#allocation7 + $0x200] sm:$0xf]
        %v3310 = vld [vmem:[#allocation7 + $0x204] sm:$0xf]
        %v3311 = vld [vmem:[#allocation7 + $0x208] sm:$0xf]
        %v3312 = vld [vmem:[#allocation7 + $0x20c] sm:$0xf]
        %v3313 = vld [vmem:[#allocation7 + $0x210] sm:$0xf]
        %v3314 = vld [vmem:[#allocation7 + $0x214] sm:$0xf]
        %v3315 = vld [vmem:[#allocation7 + $0x218] sm:$0xf]
        %v3316 = vld [vmem:[#allocation7 + $0x21c] sm:$0xf]
        %v3317 = vld [vmem:[#allocation7 + $0x220] sm:$0xf]
        %v3318 = vld [vmem:[#allocation7 + $0x224] sm:$0xf]
        %v3319 = vld [vmem:[#allocation7 + $0x228] sm:$0xf]
        %v3320 = vld [vmem:[#allocation7 + $0x22c] sm:$0xf]
        %v3321 = vld [vmem:[#allocation7 + $0x230] sm:$0xf]
        %v3322 = vld [vmem:[#allocation7 + $0x234] sm:$0xf]
        %v3323 = vld [vmem:[#allocation7 + $0x238] sm:$0xf]
        %v3324 = vld [vmem:[#allocation7 + $0x23c] sm:$0xf]
        %v3325 = vld [vmem:[%s6] sm:$0x1]
        %v3327 = vlaneseq
        %v3328 = vshrl.u32 %v3327, 7
        %v3329 = vsub.s32 0, %v3328
        %v3330 = vrot.slane %v3325, %v3329
        %v3476 = vunpack.c.l.b16 %v3181
        %v3477 = vunpack.c.l.b16 %v3182
        %v3478 = vunpack.c.l.b16 %v3183
        %v3479 = vunpack.c.l.b16 %v3184
        %v3480 = vunpack.c.l.b16 %v3185
        %v3481 = vunpack.c.l.b16 %v3186
        %v3482 = vunpack.c.l.b16 %v3187
        %v3483 = vunpack.c.l.b16 %v3188
        %v3484 = vunpack.c.l.b16 %v3189
        %v3485 = vunpack.c.l.b16 %v3190
        %v3486 = vunpack.c.l.b16 %v3191
        %v3487 = vunpack.c.l.b16 %v3192
        %v3488 = vunpack.c.l.b16 %v3193
        %v3489 = vunpack.c.l.b16 %v3194
        %v3490 = vunpack.c.l.b16 %v3195
        %v3491 = vunpack.c.l.b16 %v3196
        %v3492 = vunpack.c.l.b16 %v3197
        %v3493 = vunpack.c.l.b16 %v3198
        %v3494 = vunpack.c.l.b16 %v3199
        %v3495 = vunpack.c.l.b16 %v3200
        %v3496 = vunpack.c.l.b16 %v3201
        %v3497 = vunpack.c.l.b16 %v3202
        %v3498 = vunpack.c.l.b16 %v3203
        %v3499 = vunpack.c.l.b16 %v3204
        %v3500 = vunpack.c.l.b16 %v3205
        %v3501 = vunpack.c.l.b16 %v3206
        %v3502 = vunpack.c.l.b16 %v3207
        %v3503 = vunpack.c.l.b16 %v3208
        %v3504 = vunpack.c.l.b16 %v3209
        %v3505 = vunpack.c.l.b16 %v3210
        %v3506 = vunpack.c.l.b16 %v3211
        %v3507 = vunpack.c.l.b16 %v3212
        %v3508 = vunpack.c.l.b16 %v3213
        %v3509 = vunpack.c.l.b16 %v3214
        %v3510 = vunpack.c.l.b16 %v3215
        %v3511 = vunpack.c.l.b16 %v3216
        %v3512 = vunpack.c.l.b16 %v3217
        %v3513 = vunpack.c.l.b16 %v3218
        %v3514 = vunpack.c.l.b16 %v3219
        %v3515 = vunpack.c.l.b16 %v3220
        %v3516 = vunpack.c.l.b16 %v3221
        %v3517 = vunpack.c.l.b16 %v3222
        %v3518 = vunpack.c.l.b16 %v3223
        %v3519 = vunpack.c.l.b16 %v3224
        %v3520 = vunpack.c.l.b16 %v3225
        %v3521 = vunpack.c.l.b16 %v3226
        %v3522 = vunpack.c.l.b16 %v3227
        %v3523 = vunpack.c.l.b16 %v3228
        %v3524 = vunpack.c.l.b16 %v3229
        %v3525 = vunpack.c.l.b16 %v3230
        %v3526 = vunpack.c.l.b16 %v3231
        %v3527 = vunpack.c.l.b16 %v3232
        %v3528 = vunpack.c.l.b16 %v3233
        %v3529 = vunpack.c.l.b16 %v3234
        %v3530 = vunpack.c.l.b16 %v3235
        %v3531 = vunpack.c.l.b16 %v3236
        %v3532 = vunpack.c.l.b16 %v3237
        %v3533 = vunpack.c.l.b16 %v3238
        %v3534 = vunpack.c.l.b16 %v3239
        %v3535 = vunpack.c.l.b16 %v3240
        %v3536 = vunpack.c.l.b16 %v3241
        %v3537 = vunpack.c.l.b16 %v3242
        %v3538 = vunpack.c.l.b16 %v3243
        %v3539 = vunpack.c.l.b16 %v3244
        %v3540 = vunpack.c.l.b16 %v3245
        %v3541 = vunpack.c.l.b16 %v3246
        %v3542 = vunpack.c.l.b16 %v3247
        %v3543 = vunpack.c.l.b16 %v3248
        %v3544 = vunpack.c.l.b16 %v3249
        %v3545 = vunpack.c.l.b16 %v3250
        %v3546 = vunpack.c.l.b16 %v3251
        %v3547 = vunpack.c.l.b16 %v3252
        %v3548 = vunpack.c.l.b16 %v3253
        %v3549 = vunpack.c.l.b16 %v3254
        %v3550 = vunpack.c.l.b16 %v3255
        %v3551 = vunpack.c.l.b16 %v3256
        %v3552 = vunpack.c.l.b16 %v3257
        %v3553 = vunpack.c.l.b16 %v3258
        %v3554 = vunpack.c.l.b16 %v3259
        %v3555 = vunpack.c.l.b16 %v3260
        %v3556 = vunpack.c.l.b16 %v3261
        %v3557 = vunpack.c.l.b16 %v3262
        %v3558 = vunpack.c.l.b16 %v3263
        %v3559 = vunpack.c.l.b16 %v3264
        %v3560 = vunpack.c.l.b16 %v3265
        %v3561 = vunpack.c.l.b16 %v3266
        %v3562 = vunpack.c.l.b16 %v3267
        %v3563 = vunpack.c.l.b16 %v3268
        %v3564 = vunpack.c.l.b16 %v3269
        %v3565 = vunpack.c.l.b16 %v3270
        %v3566 = vunpack.c.l.b16 %v3271
        %v3567 = vunpack.c.l.b16 %v3272
        %v3568 = vunpack.c.l.b16 %v3273
        %v3569 = vunpack.c.l.b16 %v3274
        %v3570 = vunpack.c.l.b16 %v3275
        %v3571 = vunpack.c.l.b16 %v3276
        %v3572 = vunpack.c.l.b16 %v3277
        %v3573 = vunpack.c.l.b16 %v3278
        %v3574 = vunpack.c.l.b16 %v3279
        %v3575 = vunpack.c.l.b16 %v3280
        %v3576 = vunpack.c.l.b16 %v3281
        %v3577 = vunpack.c.l.b16 %v3282
        %v3578 = vunpack.c.l.b16 %v3283
        %v3579 = vunpack.c.l.b16 %v3284
        %v3580 = vunpack.c.l.b16 %v3285
        %v3581 = vunpack.c.l.b16 %v3286
        %v3582 = vunpack.c.l.b16 %v3287
        %v3583 = vunpack.c.l.b16 %v3288
        %v3584 = vunpack.c.l.b16 %v3289
        %v3585 = vunpack.c.l.b16 %v3290
        %v3586 = vunpack.c.l.b16 %v3291
        %v3587 = vunpack.c.l.b16 %v3292
        %v3588 = vunpack.c.l.b16 %v3293
        %v3589 = vunpack.c.l.b16 %v3294
        %v3590 = vunpack.c.l.b16 %v3295
        %v3591 = vunpack.c.l.b16 %v3296
        %v3592 = vunpack.c.l.b16 %v3297
        %v3593 = vunpack.c.l.b16 %v3298
        %v3594 = vunpack.c.l.b16 %v3299
        %v3595 = vunpack.c.l.b16 %v3300
        %v3596 = vunpack.c.l.b16 %v3301
        %v3597 = vunpack.c.l.b16 %v3302
        %v3598 = vunpack.c.l.b16 %v3303
        %v3599 = vunpack.c.l.b16 %v3304
        %v3600 = vunpack.c.l.b16 %v3305
        %v3601 = vunpack.c.l.b16 %v3306
        %v3602 = vunpack.c.l.b16 %v3307
        %v3603 = vunpack.c.l.b16 %v3308
        %v3604 = vunpack.c.l.b16 %v3309
        %v3605 = vunpack.c.l.b16 %v3310
        %v3606 = vunpack.c.l.b16 %v3311
        %v3607 = vunpack.c.l.b16 %v3312
        %v3608 = vunpack.c.l.b16 %v3313
        %v3609 = vunpack.c.l.b16 %v3314
        %v3610 = vunpack.c.l.b16 %v3315
        %v3611 = vunpack.c.l.b16 %v3316
        %v3612 = vunpack.c.l.b16 %v3317
        %v3613 = vunpack.c.l.b16 %v3318
        %v3614 = vunpack.c.l.b16 %v3319
        %v3615 = vunpack.c.l.b16 %v3320
        %v3616 = vunpack.c.l.b16 %v3321
        %v3617 = vunpack.c.l.b16 %v3322
        %v3618 = vunpack.c.l.b16 %v3323
        %v3619 = vunpack.c.l.b16 %v3324
        %v3620 = vpack.c.b16 %v3477, %v3476
        %v3621 = vpack.c.b16 %v3479, %v3478
        %v3622 = vpack.c.b16 %v3481, %v3480
        %v3623 = vpack.c.b16 %v3483, %v3482
        %v3624 = vpack.c.b16 %v3485, %v3484
        %v3625 = vpack.c.b16 %v3487, %v3486
        %v3626 = vpack.c.b16 %v3489, %v3488
        %v3627 = vpack.c.b16 %v3491, %v3490
        %v3628 = vpack.c.b16 %v3493, %v3492
        %v3629 = vpack.c.b16 %v3495, %v3494
        %v3630 = vpack.c.b16 %v3497, %v3496
        %v3631 = vpack.c.b16 %v3499, %v3498
        %v3632 = vpack.c.b16 %v3501, %v3500
        %v3633 = vpack.c.b16 %v3503, %v3502
        %v3634 = vpack.c.b16 %v3505, %v3504
        %v3635 = vpack.c.b16 %v3507, %v3506
        %v3636 = vpack.c.b16 %v3509, %v3508
        %v3637 = vpack.c.b16 %v3511, %v3510
        %v3638 = vpack.c.b16 %v3513, %v3512
        %v3639 = vpack.c.b16 %v3515, %v3514
        %v3640 = vpack.c.b16 %v3517, %v3516
        %v3641 = vpack.c.b16 %v3519, %v3518
        %v3642 = vpack.c.b16 %v3521, %v3520
        %v3643 = vpack.c.b16 %v3523, %v3522
        %v3644 = vpack.c.b16 %v3525, %v3524
        %v3645 = vpack.c.b16 %v3527, %v3526
        %v3646 = vpack.c.b16 %v3529, %v3528
        %v3647 = vpack.c.b16 %v3531, %v3530
        %v3648 = vpack.c.b16 %v3533, %v3532
        %v3649 = vpack.c.b16 %v3535, %v3534
        %v3650 = vpack.c.b16 %v3537, %v3536
        %v3651 = vpack.c.b16 %v3539, %v3538
        %v3652 = vpack.c.b16 %v3541, %v3540
        %v3653 = vpack.c.b16 %v3543, %v3542
        %v3654 = vpack.c.b16 %v3545, %v3544
        %v3655 = vpack.c.b16 %v3547, %v3546
        %v3656 = vpack.c.b16 %v3549, %v3548
        %v3657 = vpack.c.b16 %v3551, %v3550
        %v3658 = vpack.c.b16 %v3553, %v3552
        %v3659 = vpack.c.b16 %v3555, %v3554
        %v3660 = vpack.c.b16 %v3557, %v3556
        %v3661 = vpack.c.b16 %v3559, %v3558
        %v3662 = vpack.c.b16 %v3561, %v3560
        %v3663 = vpack.c.b16 %v3563, %v3562
        %v3664 = vpack.c.b16 %v3565, %v3564
        %v3665 = vpack.c.b16 %v3567, %v3566
        %v3666 = vpack.c.b16 %v3569, %v3568
        %v3667 = vpack.c.b16 %v3571, %v3570
        %v3668 = vpack.c.b16 %v3573, %v3572
        %v3669 = vpack.c.b16 %v3575, %v3574
        %v3670 = vpack.c.b16 %v3577, %v3576
        %v3671 = vpack.c.b16 %v3579, %v3578
        %v3672 = vpack.c.b16 %v3581, %v3580
        %v3673 = vpack.c.b16 %v3583, %v3582
        %v3674 = vpack.c.b16 %v3585, %v3584
        %v3675 = vpack.c.b16 %v3587, %v3586
        %v3676 = vpack.c.b16 %v3589, %v3588
        %v3677 = vpack.c.b16 %v3591, %v3590
        %v3678 = vpack.c.b16 %v3593, %v3592
        %v3679 = vpack.c.b16 %v3595, %v3594
        %v3680 = vpack.c.b16 %v3597, %v3596
        %v3681 = vpack.c.b16 %v3599, %v3598
        %v3682 = vpack.c.b16 %v3601, %v3600
        %v3683 = vpack.c.b16 %v3603, %v3602
        %v3684 = vpack.c.b16 %v3605, %v3604
        %v3685 = vpack.c.b16 %v3607, %v3606
        %v3686 = vpack.c.b16 %v3609, %v3608
        %v3687 = vpack.c.b16 %v3611, %v3610
        %v3688 = vpack.c.b16 %v3613, %v3612
        %v3689 = vpack.c.b16 %v3615, %v3614
        %v3690 = vpack.c.b16 %v3617, %v3616
        %v3691 = vpack.c.b16 %v3619, %v3618
        %3764 = vmatprep.subr.bf16.mxu0 0
        %3765 = vmatpush1.bf16.msra.mxu0 %v3627
        %3766 = vmatprep.subr.bf16.mxu0 0
        %3767 = vmatpush1.bf16.msra.mxu0 %v3626
        %3768 = vmatprep.subr.bf16.mxu0 0
        %3769 = vmatpush1.bf16.msra.mxu0 %v3625
        %3770 = vmatprep.subr.bf16.mxu0 0
        %3771 = vmatpush1.bf16.msra.mxu0 %v3624
        %3772 = vmatprep.subr.bf16.mxu0 0
        %3773 = vmatpush1.bf16.msra.mxu0 %v3623
        %3774 = vmatprep.subr.bf16.mxu0 0
        %3775 = vmatpush1.bf16.msra.mxu0 %v3622
        %3776 = vmatprep.subr.bf16.mxu0 0
        %3777 = vmatpush1.bf16.msra.mxu0 %v3621
        %3778 = vmatprep.subr.bf16.mxu0 0
        %3779 = vmatpush1.bf16.msra.mxu0 %v3620
        %3780 = vmatprep.subr.bf16.mxu0 0
        %3781 = vmatpush2.bf16.msra.mxu0 %v3635
        %3782 = vmatprep.subr.bf16.mxu0 0
        %3783 = vmatpush2.bf16.msra.mxu0 %v3634
        %3784 = vmatprep.subr.bf16.mxu0 0
        %3785 = vmatpush2.bf16.msra.mxu0 %v3633
        %3786 = vmatprep.subr.bf16.mxu0 0
        %3787 = vmatpush2.bf16.msra.mxu0 %v3632
        %3788 = vmatprep.subr.bf16.mxu0 0
        %3789 = vmatpush2.bf16.msra.mxu0 %v3631
        %3790 = vmatprep.subr.bf16.mxu0 0
        %3791 = vmatpush2.bf16.msra.mxu0 %v3630
        %3792 = vmatprep.subr.bf16.mxu0 0
        %3793 = vmatpush2.bf16.msra.mxu0 %v3629
        %3794 = vmatprep.subr.bf16.mxu0 0
        %3795 = vmatpush2.bf16.msra.mxu0 %v3628
        %3796 = vmatprep.mubr.bf16.mxu0 %v2888
        %3797 = vmatmul.mubr.bf16.gmra.mxu0 %v2845
        %v3798 = vpop.f32.mrf.mxu0
        %v3799 = vadd.f32 %v3330, %v3798
        %v3800 = vpop.f32.mrf.mxu0
        %v3801 = vpop.f32.mrf.mxu0
        %v3802 = vadd.f32 %v3330, %v3801
        %v3803 = vpop.f32.mrf.mxu0
        %3804 = vmatprep.mubr.bf16.mxu0 %v2900
        %3805 = vmatmul.mubr.bf16.gmra.mxu0 %v2846
        %v3806 = vpop.f32.mrf.mxu0
        %v3807 = vadd.f32 %v3330, %v3806
        %v3808 = vpop.f32.mrf.mxu0
        %v3809 = vpop.f32.mrf.mxu0
        %v3810 = vadd.f32 %v3330, %v3809
        %v3811 = vpop.f32.mrf.mxu0
        %3812 = vmatprep.mubr.bf16.mxu0 %v2888
        %3813 = vmatmul.mubr.bf16.gmra.mxu0 %v2845
        %v3814 = vpop.f32.mrf.mxu0
        %v3815 = vadd.f32 %v3330, %v3814
        %v3816 = vpop.f32.mrf.mxu0
        %v3817 = vpop.f32.mrf.mxu0
        %v3818 = vadd.f32 %v3330, %v3817
        %v3819 = vpop.f32.mrf.mxu0
        %3820 = vmatprep.mubr.bf16.mxu0 %v2912
        %3821 = vmatmul.mubr.bf16.gmra.mxu0 %v2847
        %v3822 = vpop.f32.mrf.mxu0
        %v3823 = vadd.f32 %v3330, %v3822
        %v3824 = vpop.f32.mrf.mxu0
        %v3825 = vpop.f32.mrf.mxu0
        %v3826 = vadd.f32 %v3330, %v3825
        %v3827 = vpop.f32.mrf.mxu0
        %3828 = vmatprep.mubr.bf16.mxu0 %v2924
        %3829 = vmatmul.mubr.bf16.gmra.mxu0 %v2848
        %v3830 = vpop.f32.mrf.mxu0
        %v3831 = vadd.f32 %v3330, %v3830
        %v3832 = vpop.f32.mrf.mxu0
        %v3833 = vpop.f32.mrf.mxu0
        %v3834 = vadd.f32 %v3330, %v3833
        %v3835 = vpop.f32.mrf.mxu0
        %3836 = vmatprep.mubr.bf16.mxu0 %v2936
        %3837 = vmatmul.mubr.bf16.gmra.mxu0 %v2849
        %v3838 = vpop.f32.mrf.mxu0
        %v3839 = vadd.f32 %v3330, %v3838
        %v3840 = vpop.f32.mrf.mxu0
        %v3841 = vpop.f32.mrf.mxu0
        %v3842 = vadd.f32 %v3330, %v3841
        %v3843 = vpop.f32.mrf.mxu0
        %3844 = vmatprep.mubr.bf16.mxu0 %v2948
        %3845 = vmatmul.mubr.bf16.gmra.mxu0 %v2850
        %v3846 = vpop.f32.mrf.mxu0
        %v3847 = vadd.f32 %v3330, %v3846
        %v3848 = vpop.f32.mrf.mxu0
        %v3849 = vpop.f32.mrf.mxu0
        %v3850 = vadd.f32 %v3330, %v3849
        %v3851 = vpop.f32.mrf.mxu0
        %3852 = vmatprep.mubr.bf16.mxu0 %v2960
        %3853 = vmatmul.mubr.bf16.gmra.mxu0 %v2851
        %v3854 = vpop.f32.mrf.mxu0
        %v3855 = vadd.f32 %v3330, %v3854
        %v3856 = vpop.f32.mrf.mxu0
        %v3857 = vpop.f32.mrf.mxu0
        %v3858 = vadd.f32 %v3330, %v3857
        %v3859 = vpop.f32.mrf.mxu0
        %3860 = vmatprep.mubr.bf16.mxu0 %v2972
        %3861 = vmatmul.mubr.bf16.gmra.mxu0 %v2852
        %v3862 = vpop.f32.mrf.mxu0
        %v3863 = vadd.f32 %v3330, %v3862
        %v3864 = vpop.f32.mrf.mxu0
        %v3865 = vpop.f32.mrf.mxu0
        %v3866 = vadd.f32 %v3330, %v3865
        %v3867 = vpop.f32.mrf.mxu0
        %3868 = vmatprep.mubr.bf16.mxu0 %v2984
        %3869 = vmatmul.mubr.bf16.gmra.mxu0 %v2853
        %v3870 = vpop.f32.mrf.mxu0
        %v3871 = vadd.f32 %v3330, %v3870
        %v3872 = vpop.f32.mrf.mxu0
        %v3873 = vpop.f32.mrf.mxu0
        %v3874 = vadd.f32 %v3330, %v3873
        %v3875 = vpop.f32.mrf.mxu0
        %3876 = vmatprep.mubr.bf16.mxu0 %v2996
        %3877 = vmatmul.mubr.bf16.gmra.mxu0 %v2854
        %v3878 = vpop.f32.mrf.mxu0
        %v3879 = vadd.f32 %v3330, %v3878
        %v3880 = vpop.f32.mrf.mxu0
        %v3881 = vpop.f32.mrf.mxu0
        %v3882 = vadd.f32 %v3330, %v3881
        %v3883 = vpop.f32.mrf.mxu0
        %3884 = vmatprep.mubr.bf16.mxu0 %v3008
        %3885 = vmatmul.mubr.bf16.gmra.mxu0 %v2855
        %v3886 = vpop.f32.mrf.mxu0
        %v3887 = vadd.f32 %v3330, %v3886
        %v3888 = vpop.f32.mrf.mxu0
        %v3889 = vpop.f32.mrf.mxu0
        %v3890 = vadd.f32 %v3330, %v3889
        %v3891 = vpop.f32.mrf.mxu0
        %3892 = vmatprep.mubr.bf16.mxu0 %v3020
        %3893 = vmatmul.mubr.bf16.gmra.mxu0 %v2856
        %v3894 = vpop.f32.mrf.mxu0
        %v3895 = vadd.f32 %v3330, %v3894
        %v3896 = vpop.f32.mrf.mxu0
        %v3897 = vpop.f32.mrf.mxu0
        %v3898 = vadd.f32 %v3330, %v3897
        %v3899 = vpop.f32.mrf.mxu0
        %3900 = vmatprep.mubr.bf16.mxu0 %v3032
        %3901 = vmatmul.mubr.bf16.gmra.mxu0 %v2857
        %v3902 = vpop.f32.mrf.mxu0
        %v3903 = vadd.f32 %v3330, %v3902
        %v3904 = vpop.f32.mrf.mxu0
        %v3905 = vpop.f32.mrf.mxu0
        %v3906 = vadd.f32 %v3330, %v3905
        %v3907 = vpop.f32.mrf.mxu0
        %3908 = vmatprep.mubr.bf16.mxu0 %v3044
        %3909 = vmatmul.mubr.bf16.gmra.mxu0 %v2858
        %v3910 = vpop.f32.mrf.mxu0
        %v3911 = vadd.f32 %v3330, %v3910
        %v3912 = vpop.f32.mrf.mxu0
        %v3913 = vpop.f32.mrf.mxu0
        %v3914 = vadd.f32 %v3330, %v3913
        %v3915 = vpop.f32.mrf.mxu0
        %3916 = vmatprep.mubr.bf16.mxu0 %v3056
        %3917 = vmatmul.mubr.bf16.gmra.mxu0 %v2859
        %v3918 = vpop.f32.mrf.mxu0
        %v3919 = vadd.f32 %v3330, %v3918
        %v3920 = vpop.f32.mrf.mxu0
        %v3921 = vpop.f32.mrf.mxu0
        %v3922 = vadd.f32 %v3330, %v3921
        %v3923 = vpop.f32.mrf.mxu0
        %3924 = vdwg.mxu0
        %3925 = vmatprep.subr.bf16.mxu0 0
        %3926 = vmatpush1.bf16.msra.mxu0 %v3643
        %3927 = vmatprep.subr.bf16.mxu0 0
        %3928 = vmatpush1.bf16.msra.mxu0 %v3642
        %3929 = vmatprep.subr.bf16.mxu0 0
        %3930 = vmatpush1.bf16.msra.mxu0 %v3641
        %3931 = vmatprep.subr.bf16.mxu0 0
        %3932 = vmatpush1.bf16.msra.mxu0 %v3640
        %3933 = vmatprep.subr.bf16.mxu0 0
        %3934 = vmatpush1.bf16.msra.mxu0 %v3639
        %3935 = vmatprep.subr.bf16.mxu0 0
        %3936 = vmatpush1.bf16.msra.mxu0 %v3638
        %3937 = vmatprep.subr.bf16.mxu0 0
        %3938 = vmatpush1.bf16.msra.mxu0 %v3637
        %3939 = vmatprep.subr.bf16.mxu0 0
        %3940 = vmatpush1.bf16.msra.mxu0 %v3636
        %3941 = vmatprep.subr.bf16.mxu0 0
        %3942 = vmatpush2.bf16.msra.mxu0 %v3651
        %3943 = vmatprep.subr.bf16.mxu0 0
        %3944 = vmatpush2.bf16.msra.mxu0 %v3650
        %3945 = vmatprep.subr.bf16.mxu0 0
        %3946 = vmatpush2.bf16.msra.mxu0 %v3649
        %3947 = vmatprep.subr.bf16.mxu0 0
        %3948 = vmatpush2.bf16.msra.mxu0 %v3648
        %3949 = vmatprep.subr.bf16.mxu0 0
        %3950 = vmatpush2.bf16.msra.mxu0 %v3647
        %3951 = vmatprep.subr.bf16.mxu0 0
        %3952 = vmatpush2.bf16.msra.mxu0 %v3646
        %3953 = vmatprep.subr.bf16.mxu0 0
        %3954 = vmatpush2.bf16.msra.mxu0 %v3645
        %3955 = vmatprep.subr.bf16.mxu0 0
        %3956 = vmatpush2.bf16.msra.mxu0 %v3644
        %3957 = vmatprep.mubr.bf16.mxu0 %v2846
        %3958 = vmatmul.mubr.bf16.gmra.mxu0 %v3104
        %v3959 = vpop.f32.mrf.mxu0
        %v3960 = vadd.f32 %v3799, %v3959
        %v3961 = vpop.f32.mrf.mxu0
        %v3962 = vpop.f32.mrf.mxu0
        %v3963 = vadd.f32 %v3802, %v3962
        %v3964 = vpop.f32.mrf.mxu0
        %3965 = vmatprep.mubr.bf16.mxu0 %v2845
        %3966 = vmatmul.mubr.bf16.gmra.mxu0 %v3107
        %v3967 = vpop.f32.mrf.mxu0
        %v3968 = vadd.f32 %v3807, %v3967
        %v3969 = vpop.f32.mrf.mxu0
        %v3970 = vpop.f32.mrf.mxu0
        %v3971 = vadd.f32 %v3810, %v3970
        %v3972 = vpop.f32.mrf.mxu0
        %3973 = vmatprep.mubr.bf16.mxu0 %v2847
        %3974 = vmatmul.mubr.bf16.gmra.mxu0 %v3104
        %v3975 = vpop.f32.mrf.mxu0
        %v3976 = vadd.f32 %v3815, %v3975
        %v3977 = vpop.f32.mrf.mxu0
        %v3978 = vpop.f32.mrf.mxu0
        %v3979 = vadd.f32 %v3818, %v3978
        %v3980 = vpop.f32.mrf.mxu0
        %3981 = vmatprep.mubr.bf16.mxu0 %v2848
        %3982 = vmatmul.mubr.bf16.gmra.mxu0 %v3110
        %v3983 = vpop.f32.mrf.mxu0
        %v3984 = vadd.f32 %v3823, %v3983
        %v3985 = vpop.f32.mrf.mxu0
        %v3986 = vpop.f32.mrf.mxu0
        %v3987 = vadd.f32 %v3826, %v3986
        %v3988 = vpop.f32.mrf.mxu0
        %3989 = vmatprep.mubr.bf16.mxu0 %v2849
        %3990 = vmatmul.mubr.bf16.gmra.mxu0 %v3113
        %v3991 = vpop.f32.mrf.mxu0
        %v3992 = vadd.f32 %v3831, %v3991
        %v3993 = vpop.f32.mrf.mxu0
        %v3994 = vpop.f32.mrf.mxu0
        %v3995 = vadd.f32 %v3834, %v3994
        %v3996 = vpop.f32.mrf.mxu0
        %3997 = vmatprep.mubr.bf16.mxu0 %v2850
        %3998 = vmatmul.mubr.bf16.gmra.mxu0 %v3116
        %v3999 = vpop.f32.mrf.mxu0
        %v4000 = vadd.f32 %v3839, %v3999
        %v4001 = vpop.f32.mrf.mxu0
        %v4002 = vpop.f32.mrf.mxu0
        %v4003 = vadd.f32 %v3842, %v4002
        %v4004 = vpop.f32.mrf.mxu0
        %4005 = vmatprep.mubr.bf16.mxu0 %v2851
        %4006 = vmatmul.mubr.bf16.gmra.mxu0 %v3119
        %v4007 = vpop.f32.mrf.mxu0
        %v4008 = vadd.f32 %v3847, %v4007
        %v4009 = vpop.f32.mrf.mxu0
        %v4010 = vpop.f32.mrf.mxu0
        %v4011 = vadd.f32 %v3850, %v4010
        %v4012 = vpop.f32.mrf.mxu0
        %4013 = vmatprep.mubr.bf16.mxu0 %v2852
        %4014 = vmatmul.mubr.bf16.gmra.mxu0 %v3122
        %v4015 = vpop.f32.mrf.mxu0
        %v4016 = vadd.f32 %v3855, %v4015
        %v4017 = vpop.f32.mrf.mxu0
        %v4018 = vpop.f32.mrf.mxu0
        %v4019 = vadd.f32 %v3858, %v4018
        %v4020 = vpop.f32.mrf.mxu0
        %4021 = vmatprep.mubr.bf16.mxu0 %v2853
        %4022 = vmatmul.mubr.bf16.gmra.mxu0 %v3125
        %v4023 = vpop.f32.mrf.mxu0
        %v4024 = vadd.f32 %v3863, %v4023
        %v4025 = vpop.f32.mrf.mxu0
        %v4026 = vpop.f32.mrf.mxu0
        %v4027 = vadd.f32 %v3866, %v4026
        %v4028 = vpop.f32.mrf.mxu0
        %4029 = vmatprep.mubr.bf16.mxu0 %v2854
        %4030 = vmatmul.mubr.bf16.gmra.mxu0 %v3128
        %v4031 = vpop.f32.mrf.mxu0
        %v4032 = vadd.f32 %v3871, %v4031
        %v4033 = vpop.f32.mrf.mxu0
        %v4034 = vpop.f32.mrf.mxu0
        %v4035 = vadd.f32 %v3874, %v4034
        %v4036 = vpop.f32.mrf.mxu0
        %4037 = vmatprep.mubr.bf16.mxu0 %v2855
        %4038 = vmatmul.mubr.bf16.gmra.mxu0 %v3131
        %v4039 = vpop.f32.mrf.mxu0
        %v4040 = vadd.f32 %v3879, %v4039
        %v4041 = vpop.f32.mrf.mxu0
        %v4042 = vpop.f32.mrf.mxu0
        %v4043 = vadd.f32 %v3882, %v4042
        %v4044 = vpop.f32.mrf.mxu0
        %4045 = vmatprep.mubr.bf16.mxu0 %v2856
        %4046 = vmatmul.mubr.bf16.gmra.mxu0 %v3134
        %v4047 = vpop.f32.mrf.mxu0
        %v4048 = vadd.f32 %v3887, %v4047
        %v4049 = vpop.f32.mrf.mxu0
        %v4050 = vpop.f32.mrf.mxu0
        %v4051 = vadd.f32 %v3890, %v4050
        %v4052 = vpop.f32.mrf.mxu0
        %4053 = vmatprep.mubr.bf16.mxu0 %v2857
        %4054 = vmatmul.mubr.bf16.gmra.mxu0 %v3137
        %v4055 = vpop.f32.mrf.mxu0
        %v4056 = vadd.f32 %v3895, %v4055
        %v4057 = vpop.f32.mrf.mxu0
        %v4058 = vpop.f32.mrf.mxu0
        %v4059 = vadd.f32 %v3898, %v4058
        %v4060 = vpop.f32.mrf.mxu0
        %4061 = vmatprep.mubr.bf16.mxu0 %v2858
        %4062 = vmatmul.mubr.bf16.gmra.mxu0 %v3140
        %v4063 = vpop.f32.mrf.mxu0
        %v4064 = vadd.f32 %v3903, %v4063
        %v4065 = vpop.f32.mrf.mxu0
        %v4066 = vpop.f32.mrf.mxu0
        %v4067 = vadd.f32 %v3906, %v4066
        %v4068 = vpop.f32.mrf.mxu0
        %4069 = vmatprep.mubr.bf16.mxu0 %v2859
        %4070 = vmatmul.mubr.bf16.gmra.mxu0 %v3143
        %v4071 = vpop.f32.mrf.mxu0
        %v4072 = vadd.f32 %v3911, %v4071
        %v4073 = vpop.f32.mrf.mxu0
        %v4074 = vpop.f32.mrf.mxu0
        %v4075 = vadd.f32 %v3914, %v4074
        %v4076 = vpop.f32.mrf.mxu0
        %4077 = vmatprep.mubr.bf16.mxu0 %v2860
        %4078 = vmatmul.mubr.bf16.gmra.mxu0 %v3146
        %v4079 = vpop.f32.mrf.mxu0
        %v4080 = vadd.f32 %v3919, %v4079
        %v4081 = vpop.f32.mrf.mxu0
        %v4082 = vpop.f32.mrf.mxu0
        %v4083 = vadd.f32 %v3922, %v4082
        %v4084 = vpop.f32.mrf.mxu0
        %4085 = vdwg.mxu0
        %4086 = vmatprep.subr.bf16.mxu0 0
        %4087 = vmatpush1.bf16.msra.mxu0 %v3659
        %4088 = vmatprep.subr.bf16.mxu0 0
        %4089 = vmatpush1.bf16.msra.mxu0 %v3658
        %4090 = vmatprep.subr.bf16.mxu0 0
        %4091 = vmatpush1.bf16.msra.mxu0 %v3657
        %4092 = vmatprep.subr.bf16.mxu0 0
        %4093 = vmatpush1.bf16.msra.mxu0 %v3656
        %4094 = vmatprep.subr.bf16.mxu0 0
        %4095 = vmatpush1.bf16.msra.mxu0 %v3655
        %4096 = vmatprep.subr.bf16.mxu0 0
        %4097 = vmatpush1.bf16.msra.mxu0 %v3654
        %4098 = vmatprep.subr.bf16.mxu0 0
        %4099 = vmatpush1.bf16.msra.mxu0 %v3653
        %4100 = vmatprep.subr.bf16.mxu0 0
        %4101 = vmatpush1.bf16.msra.mxu0 %v3652
        %4102 = vmatprep.subr.bf16.mxu0 0
        %4103 = vmatpush2.bf16.msra.mxu0 %v3667
        %4104 = vmatprep.subr.bf16.mxu0 0
        %4105 = vmatpush2.bf16.msra.mxu0 %v3666
        %4106 = vmatprep.subr.bf16.mxu0 0
        %4107 = vmatpush2.bf16.msra.mxu0 %v3665
        %4108 = vmatprep.subr.bf16.mxu0 0
        %4109 = vmatpush2.bf16.msra.mxu0 %v3664
        %4110 = vmatprep.subr.bf16.mxu0 0
        %4111 = vmatpush2.bf16.msra.mxu0 %v3663
        %4112 = vmatprep.subr.bf16.mxu0 0
        %4113 = vmatpush2.bf16.msra.mxu0 %v3662
        %4114 = vmatprep.subr.bf16.mxu0 0
        %4115 = vmatpush2.bf16.msra.mxu0 %v3661
        %4116 = vmatprep.subr.bf16.mxu0 0
        %4117 = vmatpush2.bf16.msra.mxu0 %v3660
        %4118 = vmatprep.mubr.bf16.mxu0 %v3107
        %4119 = vmatmul.mubr.bf16.gmra.mxu0 %v2900
        %v4120 = vpop.f32.mrf.mxu0
        %v4121 = vadd.f32 %v3960, %v4120
        %v4122 = vpop.f32.mrf.mxu0
        %v4123 = vpop.f32.mrf.mxu0
        %v4124 = vadd.f32 %v3963, %v4123
        %v4125 = vpop.f32.mrf.mxu0
        %4126 = vmatprep.mubr.bf16.mxu0 %v3104
        %4127 = vmatmul.mubr.bf16.gmra.mxu0 %v2888
        %v4128 = vpop.f32.mrf.mxu0
        %v4129 = vadd.f32 %v3968, %v4128
        %v4130 = vpop.f32.mrf.mxu0
        %v4131 = vpop.f32.mrf.mxu0
        %v4132 = vadd.f32 %v3971, %v4131
        %v4133 = vpop.f32.mrf.mxu0
        %4134 = vmatprep.mubr.bf16.mxu0 %v3110
        %4135 = vmatmul.mubr.bf16.gmra.mxu0 %v2912
        %v4136 = vpop.f32.mrf.mxu0
        %v4137 = vadd.f32 %v3976, %v4136
        %v4138 = vpop.f32.mrf.mxu0
        %v4139 = vpop.f32.mrf.mxu0
        %v4140 = vadd.f32 %v3979, %v4139
        %v4141 = vpop.f32.mrf.mxu0
        %4142 = vmatprep.mubr.bf16.mxu0 %v3113
        %4143 = vmatmul.mubr.bf16.gmra.mxu0 %v2924
        %v4144 = vpop.f32.mrf.mxu0
        %v4145 = vadd.f32 %v3984, %v4144
        %v4146 = vpop.f32.mrf.mxu0
        %v4147 = vpop.f32.mrf.mxu0
        %v4148 = vadd.f32 %v3987, %v4147
        %v4149 = vpop.f32.mrf.mxu0
        %4150 = vmatprep.mubr.bf16.mxu0 %v3116
        %4151 = vmatmul.mubr.bf16.gmra.mxu0 %v2936
        %v4152 = vpop.f32.mrf.mxu0
        %v4153 = vadd.f32 %v3992, %v4152
        %v4154 = vpop.f32.mrf.mxu0
        %v4155 = vpop.f32.mrf.mxu0
        %v4156 = vadd.f32 %v3995, %v4155
        %v4157 = vpop.f32.mrf.mxu0
        %4158 = vmatprep.mubr.bf16.mxu0 %v3119
        %4159 = vmatmul.mubr.bf16.gmra.mxu0 %v2948
        %v4160 = vpop.f32.mrf.mxu0
        %v4161 = vadd.f32 %v4000, %v4160
        %v4162 = vpop.f32.mrf.mxu0
        %v4163 = vpop.f32.mrf.mxu0
        %v4164 = vadd.f32 %v4003, %v4163
        %v4165 = vpop.f32.mrf.mxu0
        %4166 = vmatprep.mubr.bf16.mxu0 %v3122
        %4167 = vmatmul.mubr.bf16.gmra.mxu0 %v2960
        %v4168 = vpop.f32.mrf.mxu0
        %v4169 = vadd.f32 %v4008, %v4168
        %v4170 = vpop.f32.mrf.mxu0
        %v4171 = vpop.f32.mrf.mxu0
        %v4172 = vadd.f32 %v4011, %v4171
        %v4173 = vpop.f32.mrf.mxu0
        %4174 = vmatprep.mubr.bf16.mxu0 %v3125
        %4175 = vmatmul.mubr.bf16.gmra.mxu0 %v2972
        %v4176 = vpop.f32.mrf.mxu0
        %v4177 = vadd.f32 %v4016, %v4176
        %v4178 = vpop.f32.mrf.mxu0
        %v4179 = vpop.f32.mrf.mxu0
        %v4180 = vadd.f32 %v4019, %v4179
        %v4181 = vpop.f32.mrf.mxu0
        %4182 = vmatprep.mubr.bf16.mxu0 %v3128
        %4183 = vmatmul.mubr.bf16.gmra.mxu0 %v2984
        %v4184 = vpop.f32.mrf.mxu0
        %v4185 = vadd.f32 %v4024, %v4184
        %v4186 = vpop.f32.mrf.mxu0
        %v4187 = vpop.f32.mrf.mxu0
        %v4188 = vadd.f32 %v4027, %v4187
        %v4189 = vpop.f32.mrf.mxu0
        %4190 = vmatprep.mubr.bf16.mxu0 %v3131
        %4191 = vmatmul.mubr.bf16.gmra.mxu0 %v2996
        %v4192 = vpop.f32.mrf.mxu0
        %v4193 = vadd.f32 %v4032, %v4192
        %v4194 = vpop.f32.mrf.mxu0
        %v4195 = vpop.f32.mrf.mxu0
        %v4196 = vadd.f32 %v4035, %v4195
        %v4197 = vpop.f32.mrf.mxu0
        %4198 = vmatprep.mubr.bf16.mxu0 %v3134
        %4199 = vmatmul.mubr.bf16.gmra.mxu0 %v3008
        %v4200 = vpop.f32.mrf.mxu0
        %v4201 = vadd.f32 %v4040, %v4200
        %v4202 = vpop.f32.mrf.mxu0
        %v4203 = vpop.f32.mrf.mxu0
        %v4204 = vadd.f32 %v4043, %v4203
        %v4205 = vpop.f32.mrf.mxu0
        %4206 = vmatprep.mubr.bf16.mxu0 %v3137
        %4207 = vmatmul.mubr.bf16.gmra.mxu0 %v3020
        %v4208 = vpop.f32.mrf.mxu0
        %v4209 = vadd.f32 %v4048, %v4208
        %v4210 = vpop.f32.mrf.mxu0
        %v4211 = vpop.f32.mrf.mxu0
        %v4212 = vadd.f32 %v4051, %v4211
        %v4213 = vpop.f32.mrf.mxu0
        %4214 = vmatprep.mubr.bf16.mxu0 %v3140
        %4215 = vmatmul.mubr.bf16.gmra.mxu0 %v3032
        %v4216 = vpop.f32.mrf.mxu0
        %v4217 = vadd.f32 %v4056, %v4216
        %v4218 = vpop.f32.mrf.mxu0
        %v4219 = vpop.f32.mrf.mxu0
        %v4220 = vadd.f32 %v4059, %v4219
        %v4221 = vpop.f32.mrf.mxu0
        %4222 = vmatprep.mubr.bf16.mxu0 %v3143
        %4223 = vmatmul.mubr.bf16.gmra.mxu0 %v3044
        %v4224 = vpop.f32.mrf.mxu0
        %v4225 = vadd.f32 %v4064, %v4224
        %v4226 = vpop.f32.mrf.mxu0
        %v4227 = vpop.f32.mrf.mxu0
        %v4228 = vadd.f32 %v4067, %v4227
        %v4229 = vpop.f32.mrf.mxu0
        %4230 = vmatprep.mubr.bf16.mxu0 %v3146
        %4231 = vmatmul.mubr.bf16.gmra.mxu0 %v3056
        %v4232 = vpop.f32.mrf.mxu0
        %v4233 = vadd.f32 %v4072, %v4232
        %v4234 = vpop.f32.mrf.mxu0
        %v4235 = vpop.f32.mrf.mxu0
        %v4236 = vadd.f32 %v4075, %v4235
        %v4237 = vpop.f32.mrf.mxu0
        %4238 = vmatprep.mubr.bf16.mxu0 %v3179
        %4239 = vmatmul.mubr.bf16.gmra.mxu0 %v3173
        %v4240 = vpop.f32.mrf.mxu0
        %v4241 = vadd.f32 %v4080, %v4240
        %v4242 = vpop.f32.mrf.mxu0
        %v4243 = vpop.f32.mrf.mxu0
        %v4244 = vadd.f32 %v4083, %v4243
        %v4245 = vpop.f32.mrf.mxu0
        %4246 = vdwg.mxu0
        %4247 = vmatprep.subr.bf16.mxu0 0
        %4248 = vmatpush1.bf16.msra.mxu0 %v3675
        %4249 = vmatprep.subr.bf16.mxu0 0
        %4250 = vmatpush1.bf16.msra.mxu0 %v3674
        %4251 = vmatprep.subr.bf16.mxu0 0
        %4252 = vmatpush1.bf16.msra.mxu0 %v3673
        %4253 = vmatprep.subr.bf16.mxu0 0
        %4254 = vmatpush1.bf16.msra.mxu0 %v3672
        %4255 = vmatprep.subr.bf16.mxu0 0
        %4256 = vmatpush1.bf16.msra.mxu0 %v3671
        %4257 = vmatprep.subr.bf16.mxu0 0
        %4258 = vmatpush1.bf16.msra.mxu0 %v3670
        %4259 = vmatprep.subr.bf16.mxu0 0
        %4260 = vmatpush1.bf16.msra.mxu0 %v3669
        %4261 = vmatprep.subr.bf16.mxu0 0
        %4262 = vmatpush1.bf16.msra.mxu0 %v3668
        %4263 = vmatprep.subr.bf16.mxu0 0
        %4264 = vmatpush2.bf16.msra.mxu0 %v3683
        %4265 = vmatprep.subr.bf16.mxu0 0
        %4266 = vmatpush2.bf16.msra.mxu0 %v3682
        %4267 = vmatprep.subr.bf16.mxu0 0
        %4268 = vmatpush2.bf16.msra.mxu0 %v3681
        %4269 = vmatprep.subr.bf16.mxu0 0
        %4270 = vmatpush2.bf16.msra.mxu0 %v3680
        %4271 = vmatprep.subr.bf16.mxu0 0
        %4272 = vmatpush2.bf16.msra.mxu0 %v3679
        %4273 = vmatprep.subr.bf16.mxu0 0
        %4274 = vmatpush2.bf16.msra.mxu0 %v3678
        %4275 = vmatprep.subr.bf16.mxu0 0
        %4276 = vmatpush2.bf16.msra.mxu0 %v3677
        %4277 = vmatprep.subr.bf16.mxu0 0
        %4278 = vmatpush2.bf16.msra.mxu0 %v3676
        %4279 = vmatprep.mubr.bf16.mxu0 %v2888
        %4280 = vmatmul.mubr.bf16.gmra.mxu0 %v2845
        %v4281 = vpop.f32.mrf.mxu0
        %v4282 = vadd.f32 %v4121, %v4281
        %v4283 = vpop.f32.mrf.mxu0
        %v4284 = vpop.f32.mrf.mxu0
        %v4285 = vadd.f32 %v4124, %v4284
        %v4286 = vpop.f32.mrf.mxu0
        %4287 = vmatprep.mubr.bf16.mxu0 %v2912
        %4288 = vmatmul.mubr.bf16.gmra.mxu0 %v2847
        %v4289 = vpop.f32.mrf.mxu0
        %v4290 = vadd.f32 %v4129, %v4289
        %v4291 = vpop.f32.mrf.mxu0
        %v4292 = vpop.f32.mrf.mxu0
        %v4293 = vadd.f32 %v4132, %v4292
        %v4294 = vpop.f32.mrf.mxu0
        %4295 = vmatprep.mubr.bf16.mxu0 %v2924
        %4296 = vmatmul.mubr.bf16.gmra.mxu0 %v2848
        %v4297 = vpop.f32.mrf.mxu0
        %v4298 = vadd.f32 %v4137, %v4297
        %v4299 = vpop.f32.mrf.mxu0
        %v4300 = vpop.f32.mrf.mxu0
        %v4301 = vadd.f32 %v4140, %v4300
        %v4302 = vpop.f32.mrf.mxu0
        %4303 = vmatprep.mubr.bf16.mxu0 %v2936
        %4304 = vmatmul.mubr.bf16.gmra.mxu0 %v2849
        %v4305 = vpop.f32.mrf.mxu0
        %v4306 = vadd.f32 %v4145, %v4305
        %v4307 = vpop.f32.mrf.mxu0
        %v4308 = vpop.f32.mrf.mxu0
        %v4309 = vadd.f32 %v4148, %v4308
        %v4310 = vpop.f32.mrf.mxu0
        %4311 = vmatprep.mubr.bf16.mxu0 %v2948
        %4312 = vmatmul.mubr.bf16.gmra.mxu0 %v2850
        %v4313 = vpop.f32.mrf.mxu0
        %v4314 = vadd.f32 %v4153, %v4313
        %v4315 = vpop.f32.mrf.mxu0
        %v4316 = vpop.f32.mrf.mxu0
        %v4317 = vadd.f32 %v4156, %v4316
        %v4318 = vpop.f32.mrf.mxu0
        %4319 = vmatprep.mubr.bf16.mxu0 %v2960
        %4320 = vmatmul.mubr.bf16.gmra.mxu0 %v2851
        %v4321 = vpop.f32.mrf.mxu0
        %v4322 = vadd.f32 %v4161, %v4321
        %v4323 = vpop.f32.mrf.mxu0
        %v4324 = vpop.f32.mrf.mxu0
        %v4325 = vadd.f32 %v4164, %v4324
        %v4326 = vpop.f32.mrf.mxu0
        %4327 = vmatprep.mubr.bf16.mxu0 %v2972
        %4328 = vmatmul.mubr.bf16.gmra.mxu0 %v2852
        %v4329 = vpop.f32.mrf.mxu0
        %v4330 = vadd.f32 %v4169, %v4329
        %v4331 = vpop.f32.mrf.mxu0
        %v4332 = vpop.f32.mrf.mxu0
        %v4333 = vadd.f32 %v4172, %v4332
        %v4334 = vpop.f32.mrf.mxu0
        %4335 = vmatprep.mubr.bf16.mxu0 %v2984
        %4336 = vmatmul.mubr.bf16.gmra.mxu0 %v2853
        %v4337 = vpop.f32.mrf.mxu0
        %v4338 = vadd.f32 %v4177, %v4337
        %v4339 = vpop.f32.mrf.mxu0
        %v4340 = vpop.f32.mrf.mxu0
        %v4341 = vadd.f32 %v4180, %v4340
        %v4342 = vpop.f32.mrf.mxu0
        %4343 = vmatprep.mubr.bf16.mxu0 %v2996
        %4344 = vmatmul.mubr.bf16.gmra.mxu0 %v2854
        %v4345 = vpop.f32.mrf.mxu0
        %v4346 = vadd.f32 %v4185, %v4345
        %v4347 = vpop.f32.mrf.mxu0
        %v4348 = vpop.f32.mrf.mxu0
        %v4349 = vadd.f32 %v4188, %v4348
        %v4350 = vpop.f32.mrf.mxu0
        %4351 = vmatprep.mubr.bf16.mxu0 %v3008
        %4352 = vmatmul.mubr.bf16.gmra.mxu0 %v2855
        %v4353 = vpop.f32.mrf.mxu0
        %v4354 = vadd.f32 %v4193, %v4353
        %v4355 = vpop.f32.mrf.mxu0
        %v4356 = vpop.f32.mrf.mxu0
        %v4357 = vadd.f32 %v4196, %v4356
        %v4358 = vpop.f32.mrf.mxu0
        %4359 = vmatprep.mubr.bf16.mxu0 %v3020
        %4360 = vmatmul.mubr.bf16.gmra.mxu0 %v2856
        %v4361 = vpop.f32.mrf.mxu0
        %v4362 = vadd.f32 %v4201, %v4361
        %v4363 = vpop.f32.mrf.mxu0
        %v4364 = vpop.f32.mrf.mxu0
        %v4365 = vadd.f32 %v4204, %v4364
        %v4366 = vpop.f32.mrf.mxu0
        %4367 = vmatprep.mubr.bf16.mxu0 %v3032
        %4368 = vmatmul.mubr.bf16.gmra.mxu0 %v2857
        %v4369 = vpop.f32.mrf.mxu0
        %v4370 = vadd.f32 %v4209, %v4369
        %v4371 = vpop.f32.mrf.mxu0
        %v4372 = vpop.f32.mrf.mxu0
        %v4373 = vadd.f32 %v4212, %v4372
        %v4374 = vpop.f32.mrf.mxu0
        %4375 = vmatprep.mubr.bf16.mxu0 %v3044
        %4376 = vmatmul.mubr.bf16.gmra.mxu0 %v2858
        %v4377 = vpop.f32.mrf.mxu0
        %v4378 = vadd.f32 %v4217, %v4377
        %v4379 = vpop.f32.mrf.mxu0
        %v4380 = vpop.f32.mrf.mxu0
        %v4381 = vadd.f32 %v4220, %v4380
        %v4382 = vpop.f32.mrf.mxu0
        %4383 = vmatprep.mubr.bf16.mxu0 %v3056
        %4384 = vmatmul.mubr.bf16.gmra.mxu0 %v2859
        %v4385 = vpop.f32.mrf.mxu0
        %v4386 = vadd.f32 %v4225, %v4385
        %v4387 = vpop.f32.mrf.mxu0
        %v4388 = vpop.f32.mrf.mxu0
        %v4389 = vadd.f32 %v4228, %v4388
        %v4390 = vpop.f32.mrf.mxu0
        %4391 = vmatprep.mubr.bf16.mxu0 %v3173
        %4392 = vmatmul.mubr.bf16.gmra.mxu0 %v2860
        %v4393 = vpop.f32.mrf.mxu0
        %v4394 = vadd.f32 %v4233, %v4393
        %v4395 = vpop.f32.mrf.mxu0
        %v4396 = vpop.f32.mrf.mxu0
        %v4397 = vadd.f32 %v4236, %v4396
        %v4398 = vpop.f32.mrf.mxu0
        %4399 = vmatprep.mubr.bf16.mxu0 %v3056
        %4400 = vmatmul.mubr.bf16.gmra.mxu0 %v2859
        %v4401 = vpop.f32.mrf.mxu0
        %v4402 = vadd.f32 %v4241, %v4401
        %v4403 = vpop.f32.mrf.mxu0
        %v4404 = vpop.f32.mrf.mxu0
        %v4405 = vadd.f32 %v4244, %v4404
        %v4406 = vpop.f32.mrf.mxu0
        %4407 = vdwg.mxu0
        %4408 = vmatprep.subr.bf16.mxu0 0
        %4409 = vmatpush1.bf16.msra.mxu0 %v3691
        %4410 = vmatprep.subr.bf16.mxu0 0
        %4411 = vmatpush1.bf16.msra.mxu0 %v3690
        %4412 = vmatprep.subr.bf16.mxu0 0
        %4413 = vmatpush1.bf16.msra.mxu0 %v3689
        %4414 = vmatprep.subr.bf16.mxu0 0
        %4415 = vmatpush1.bf16.msra.mxu0 %v3688
        %4416 = vmatprep.subr.bf16.mxu0 0
        %4417 = vmatpush1.bf16.msra.mxu0 %v3687
        %4418 = vmatprep.subr.bf16.mxu0 0
        %4419 = vmatpush1.bf16.msra.mxu0 %v3686
        %4420 = vmatprep.subr.bf16.mxu0 0
        %4421 = vmatpush1.bf16.msra.mxu0 %v3685
        %4422 = vmatprep.subr.bf16.mxu0 0
        %4423 = vmatpush1.bf16.msra.mxu0 %v3684
        %4424 = vmatprep.subr.bf16.mxu0 0
        %4425 = vmatpush2.bf16.msra.mxu0 0
        %4426 = vmatprep.subr.bf16.mxu0 0
        %4427 = vmatpush2.bf16.msra.mxu0 0
        %4428 = vmatprep.subr.bf16.mxu0 0
        %4429 = vmatpush2.bf16.msra.mxu0 0
        %4430 = vmatprep.subr.bf16.mxu0 0
        %4431 = vmatpush2.bf16.msra.mxu0 0
        %4432 = vmatprep.subr.bf16.mxu0 0
        %4433 = vmatpush2.bf16.msra.mxu0 0
        %4434 = vmatprep.subr.bf16.mxu0 0
        %4435 = vmatpush2.bf16.msra.mxu0 0
        %4436 = vmatprep.subr.bf16.mxu0 0
        %4437 = vmatpush2.bf16.msra.mxu0 0
        %4438 = vmatprep.subr.bf16.mxu0 0
        %4439 = vmatpush2.bf16.msra.mxu0 0
        %4440 = vmatprep.mubr.bf16.mxu0 0
        %4441 = vmatmul.mubr.bf16.gmra.mxu0 %v3104
        %v4442 = vpop.f32.mrf.mxu0
        %v4443 = vadd.f32 %v4282, %v4442
        %v4444 = vpop.f32.mrf.mxu0
        %v4445 = vpop.f32.mrf.mxu0
        %v4446 = vadd.f32 %v4285, %v4445
        %v4447 = vpop.f32.mrf.mxu0
        %4448 = vmatprep.mubr.bf16.mxu0 0
        %4449 = vmatmul.mubr.bf16.gmra.mxu0 %v3110
        %v4450 = vpop.f32.mrf.mxu0
        %v4451 = vadd.f32 %v4290, %v4450
        %v4452 = vpop.f32.mrf.mxu0
        %v4453 = vpop.f32.mrf.mxu0
        %v4454 = vadd.f32 %v4293, %v4453
        %v4455 = vpop.f32.mrf.mxu0
        %4456 = vmatprep.mubr.bf16.mxu0 0
        %4457 = vmatmul.mubr.bf16.gmra.mxu0 %v3113
        %v4458 = vpop.f32.mrf.mxu0
        %v4459 = vadd.f32 %v4298, %v4458
        %v4460 = vpop.f32.mrf.mxu0
        %v4461 = vpop.f32.mrf.mxu0
        %v4462 = vadd.f32 %v4301, %v4461
        %v4463 = vpop.f32.mrf.mxu0
        %4464 = vmatprep.mubr.bf16.mxu0 0
        %4465 = vmatmul.mubr.bf16.gmra.mxu0 %v3116
        %v4466 = vpop.f32.mrf.mxu0
        %v4467 = vadd.f32 %v4306, %v4466
        %v4468 = vpop.f32.mrf.mxu0
        %v4469 = vpop.f32.mrf.mxu0
        %v4470 = vadd.f32 %v4309, %v4469
        %v4471 = vpop.f32.mrf.mxu0
        %4472 = vmatprep.mubr.bf16.mxu0 0
        %4473 = vmatmul.mubr.bf16.gmra.mxu0 %v3119
        %v4474 = vpop.f32.mrf.mxu0
        %v4475 = vadd.f32 %v4314, %v4474
        %v4476 = vpop.f32.mrf.mxu0
        %v4477 = vpop.f32.mrf.mxu0
        %v4478 = vadd.f32 %v4317, %v4477
        %v4479 = vpop.f32.mrf.mxu0
        %4480 = vmatprep.mubr.bf16.mxu0 0
        %4481 = vmatmul.mubr.bf16.gmra.mxu0 %v3122
        %v4482 = vpop.f32.mrf.mxu0
        %v4483 = vadd.f32 %v4322, %v4482
        %v4484 = vpop.f32.mrf.mxu0
        %v4485 = vpop.f32.mrf.mxu0
        %v4486 = vadd.f32 %v4325, %v4485
        %v4487 = vpop.f32.mrf.mxu0
        %4488 = vmatprep.mubr.bf16.mxu0 0
        %4489 = vmatmul.mubr.bf16.gmra.mxu0 %v3125
        %v4490 = vpop.f32.mrf.mxu0
        %v4491 = vadd.f32 %v4330, %v4490
        %v4492 = vpop.f32.mrf.mxu0
        %v4493 = vpop.f32.mrf.mxu0
        %v4494 = vadd.f32 %v4333, %v4493
        %v4495 = vpop.f32.mrf.mxu0
        %4496 = vmatprep.mubr.bf16.mxu0 0
        %4497 = vmatmul.mubr.bf16.gmra.mxu0 %v3128
        %v4498 = vpop.f32.mrf.mxu0
        %v4499 = vadd.f32 %v4338, %v4498
        %v4500 = vpop.f32.mrf.mxu0
        %v4501 = vpop.f32.mrf.mxu0
        %v4502 = vadd.f32 %v4341, %v4501
        %v4503 = vpop.f32.mrf.mxu0
        %4504 = vmatprep.mubr.bf16.mxu0 0
        %4505 = vmatmul.mubr.bf16.gmra.mxu0 %v3131
        %v4506 = vpop.f32.mrf.mxu0
        %v4507 = vadd.f32 %v4346, %v4506
        %v4508 = vpop.f32.mrf.mxu0
        %v4509 = vpop.f32.mrf.mxu0
        %v4510 = vadd.f32 %v4349, %v4509
        %v4511 = vpop.f32.mrf.mxu0
        %4512 = vmatprep.mubr.bf16.mxu0 0
        %4513 = vmatmul.mubr.bf16.gmra.mxu0 %v3134
        %v4514 = vpop.f32.mrf.mxu0
        %v4515 = vadd.f32 %v4354, %v4514
        %v4516 = vpop.f32.mrf.mxu0
        %v4517 = vpop.f32.mrf.mxu0
        %v4518 = vadd.f32 %v4357, %v4517
        %v4519 = vpop.f32.mrf.mxu0
        %4520 = vmatprep.mubr.bf16.mxu0 0
        %4521 = vmatmul.mubr.bf16.gmra.mxu0 %v3137
        %v4522 = vpop.f32.mrf.mxu0
        %v4523 = vadd.f32 %v4362, %v4522
        %v4524 = vpop.f32.mrf.mxu0
        %v4525 = vpop.f32.mrf.mxu0
        %v4526 = vadd.f32 %v4365, %v4525
        %v4527 = vpop.f32.mrf.mxu0
        %4528 = vmatprep.mubr.bf16.mxu0 0
        %4529 = vmatmul.mubr.bf16.gmra.mxu0 %v3140
        %v4530 = vpop.f32.mrf.mxu0
        %v4531 = vadd.f32 %v4370, %v4530
        %v4532 = vpop.f32.mrf.mxu0
        %v4533 = vpop.f32.mrf.mxu0
        %v4534 = vadd.f32 %v4373, %v4533
        %v4535 = vpop.f32.mrf.mxu0
        %4536 = vmatprep.mubr.bf16.mxu0 0
        %4537 = vmatmul.mubr.bf16.gmra.mxu0 %v3143
        %v4538 = vpop.f32.mrf.mxu0
        %v4539 = vadd.f32 %v4378, %v4538
        %v4540 = vpop.f32.mrf.mxu0
        %v4541 = vpop.f32.mrf.mxu0
        %v4542 = vadd.f32 %v4381, %v4541
        %v4543 = vpop.f32.mrf.mxu0
        %4544 = vmatprep.mubr.bf16.mxu0 0
        %4545 = vmatmul.mubr.bf16.gmra.mxu0 %v3146
        %v4546 = vpop.f32.mrf.mxu0
        %v4547 = vadd.f32 %v4386, %v4546
        %v4548 = vpop.f32.mrf.mxu0
        %v4549 = vpop.f32.mrf.mxu0
        %v4550 = vadd.f32 %v4389, %v4549
        %v4551 = vpop.f32.mrf.mxu0
        %4552 = vmatprep.mubr.bf16.mxu0 0
        %4553 = vmatmul.mubr.bf16.gmra.mxu0 %v3179
        %v4554 = vpop.f32.mrf.mxu0
        %v4555 = vadd.f32 %v4394, %v4554
        %v4556 = vpop.f32.mrf.mxu0
        %v4557 = vpop.f32.mrf.mxu0
        %v4558 = vadd.f32 %v4397, %v4557
        %v4559 = vpop.f32.mrf.mxu0
        %4560 = vmatprep.mubr.bf16.mxu0 0
        %4561 = vmatmul.mubr.bf16.gmra.mxu0 %v3146
        %v4562 = vpop.f32.mrf.mxu0
        %v4563 = vadd.f32 %v4402, %v4562
        %v4564 = vpop.f32.mrf.mxu0
        %v4565 = vpop.f32.mrf.mxu0
        %v4566 = vadd.f32 %v4405, %v4565
        %v4567 = vpop.f32.mrf.mxu0
        %4568 = vdwg.mxu0
        %v4569 = vadd.f32 %v4443, %v4446
        %v4570 = vadd.f32 %v4569, %v4451
        %v4571 = vadd.f32 %v4570, %v4454
        %v4572 = vadd.f32 %v4571, %v4459
        %v4573 = vadd.f32 %v4572, %v4462
        %v4574 = vadd.f32 %v4573, %v4467
        %v4575 = vadd.f32 %v4574, %v4470
        %v4576 = vadd.f32 %v4575, %v4475
        %v4577 = vadd.f32 %v4576, %v4478
        %v4578 = vadd.f32 %v4577, %v4483
        %v4579 = vadd.f32 %v4578, %v4486
        %v4580 = vadd.f32 %v4579, %v4491
        %v4581 = vadd.f32 %v4580, %v4494
        %v4582 = vadd.f32 %v4581, %v4499
        %v4583 = vadd.f32 %v4582, %v4502
        %v4584 = vadd.f32 %v4583, %v4507
        %v4585 = vadd.f32 %v4584, %v4510
        %v4586 = vadd.f32 %v4585, %v4515
        %v4587 = vadd.f32 %v4586, %v4518
        %v4588 = vadd.f32 %v4587, %v4523
        %v4589 = vadd.f32 %v4588, %v4526
        %v4590 = vadd.f32 %v4589, %v4531
        %v4591 = vadd.f32 %v4590, %v4534
        %v4592 = vadd.f32 %v4591, %v4539
        %v4593 = vadd.f32 %v4592, %v4542
        %v4594 = vadd.f32 %v4593, %v4547
        %v4595 = vadd.f32 %v4594, %v4550
        %v4596 = vadd.f32 %v4595, %v4555
        %v4597 = vadd.f32 %v4596, %v4558
        %v4598 = vadd.f32 %v4597, %v4563
        %v4599 = vadd.f32 %v4598, %v4566
        %v4600 = vrot.slane %v4599, 4
        %v4601 = vadd.f32 %v4599, %v4600
        %v4602 = vrot.slane %v4601, 2
        %v4603 = vadd.f32 %v4601, %v4602
        %v4604 = vrot.slane %v4603, 1
        %v4605 = vadd.f32 %v4603, %v4604
        %v4606 = vmul.f32 %v4605, 0.00390625
        %v4607 = vmul.f32 %v4443, %v4443
        %v4608 = vmul.f32 %v4446, %v4446
        %v4609 = vmul.f32 %v4451, %v4451
        %v4610 = vmul.f32 %v4454, %v4454
        %v4611 = vmul.f32 %v4459, %v4459
        %v4612 = vmul.f32 %v4462, %v4462
        %v4613 = vmul.f32 %v4467, %v4467
        %v4614 = vmul.f32 %v4470, %v4470
        %v4615 = vmul.f32 %v4475, %v4475
        %v4616 = vmul.f32 %v4478, %v4478
        %v4617 = vmul.f32 %v4483, %v4483
        %v4618 = vmul.f32 %v4486, %v4486
        %v4619 = vmul.f32 %v4491, %v4491
        %v4620 = vmul.f32 %v4494, %v4494
        %v4621 = vmul.f32 %v4499, %v4499
        %v4622 = vmul.f32 %v4502, %v4502
        %v4623 = vmul.f32 %v4507, %v4507
        %v4624 = vmul.f32 %v4510, %v4510
        %v4625 = vmul.f32 %v4515, %v4515
        %v4626 = vmul.f32 %v4518, %v4518
        %v4627 = vmul.f32 %v4523, %v4523
        %v4628 = vmul.f32 %v4526, %v4526
        %v4629 = vmul.f32 %v4531, %v4531
        %v4630 = vmul.f32 %v4534, %v4534
        %v4631 = vmul.f32 %v4539, %v4539
        %v4632 = vmul.f32 %v4542, %v4542
        %v4633 = vmul.f32 %v4547, %v4547
        %v4634 = vmul.f32 %v4550, %v4550
        %v4635 = vmul.f32 %v4555, %v4555
        %v4636 = vmul.f32 %v4558, %v4558
        %v4637 = vmul.f32 %v4563, %v4563
        %v4638 = vmul.f32 %v4566, %v4566
        %v4639 = vadd.f32 %v4607, %v4608
        %v4640 = vadd.f32 %v4639, %v4609
        %v4641 = vadd.f32 %v4640, %v4610
        %v4642 = vadd.f32 %v4641, %v4611
        %v4643 = vadd.f32 %v4642, %v4612
        %v4644 = vadd.f32 %v4643, %v4613
        %v4645 = vadd.f32 %v4644, %v4614
        %v4646 = vadd.f32 %v4645, %v4615
        %v4647 = vadd.f32 %v4646, %v4616
        %v4648 = vadd.f32 %v4647, %v4617
        %v4649 = vadd.f32 %v4648, %v4618
        %v4650 = vadd.f32 %v4649, %v4619
        %v4651 = vadd.f32 %v4650, %v4620
        %v4652 = vadd.f32 %v4651, %v4621
        %v4653 = vadd.f32 %v4652, %v4622
        %v4654 = vadd.f32 %v4653, %v4623
        %v4655 = vadd.f32 %v4654, %v4624
        %v4656 = vadd.f32 %v4655, %v4625
        %v4657 = vadd.f32 %v4656, %v4626
        %v4658 = vadd.f32 %v4657, %v4627
        %v4659 = vadd.f32 %v4658, %v4628
        %v4660 = vadd.f32 %v4659, %v4629
        %v4661 = vadd.f32 %v4660, %v4630
        %v4662 = vadd.f32 %v4661, %v4631
        %v4663 = vadd.f32 %v4662, %v4632
        %v4664 = vadd.f32 %v4663, %v4633
        %v4665 = vadd.f32 %v4664, %v4634
        %v4666 = vadd.f32 %v4665, %v4635
        %v4667 = vadd.f32 %v4666, %v4636
        %v4668 = vadd.f32 %v4667, %v4637
        %v4669 = vadd.f32 %v4668, %v4638
        %v4670 = vrot.slane %v4669, 4
        %v4671 = vadd.f32 %v4669, %v4670
        %v4672 = vrot.slane %v4671, 2
        %v4673 = vadd.f32 %v4671, %v4672
        %v4674 = vrot.slane %v4673, 1
        %v4675 = vadd.f32 %v4673, %v4674
        %v4676 = vmul.f32 %v4675, 0.00390625
        %v4677 = vmul.f32 %v4606, %v4606
        %v4678 = vsub.f32 %v4676, %v4677
        %v4679 = vmax.f32 %v4678, 0.0
        %v4680 = vsub.f32 %v4443, %v4606
        %v4681 = vsub.f32 %v4446, %v4606
        %v4682 = vsub.f32 %v4451, %v4606
        %v4683 = vsub.f32 %v4454, %v4606
        %v4684 = vsub.f32 %v4459, %v4606
        %v4685 = vsub.f32 %v4462, %v4606
        %v4686 = vsub.f32 %v4467, %v4606
        %v4687 = vsub.f32 %v4470, %v4606
        %v4688 = vsub.f32 %v4475, %v4606
        %v4689 = vsub.f32 %v4478, %v4606
        %v4690 = vsub.f32 %v4483, %v4606
        %v4691 = vsub.f32 %v4486, %v4606
        %v4692 = vsub.f32 %v4491, %v4606
        %v4693 = vsub.f32 %v4494, %v4606
        %v4694 = vsub.f32 %v4499, %v4606
        %v4695 = vsub.f32 %v4502, %v4606
        %v4696 = vsub.f32 %v4507, %v4606
        %v4697 = vsub.f32 %v4510, %v4606
        %v4698 = vsub.f32 %v4515, %v4606
        %v4699 = vsub.f32 %v4518, %v4606
        %v4700 = vsub.f32 %v4523, %v4606
        %v4701 = vsub.f32 %v4526, %v4606
        %v4702 = vsub.f32 %v4531, %v4606
        %v4703 = vsub.f32 %v4534, %v4606
        %v4704 = vsub.f32 %v4539, %v4606
        %v4705 = vsub.f32 %v4542, %v4606
        %v4706 = vsub.f32 %v4547, %v4606
        %v4707 = vsub.f32 %v4550, %v4606
        %v4708 = vsub.f32 %v4555, %v4606
        %v4709 = vsub.f32 %v4558, %v4606
        %v4710 = vsub.f32 %v4563, %v4606
        %v4711 = vsub.f32 %v4566, %v4606
        %v4712 = vadd.f32 %v4679, 1e-05
        %v4713 = vrsqrt.pop %v4712
        %v4714 = vmul.f32 %v4680, %v4713
        %v4715 = vmul.f32 %v4681, %v4713
        %v4716 = vmul.f32 %v4682, %v4713
        %v4717 = vmul.f32 %v4683, %v4713
        %v4718 = vmul.f32 %v4684, %v4713
        %v4719 = vmul.f32 %v4685, %v4713
        %v4720 = vmul.f32 %v4686, %v4713
        %v4721 = vmul.f32 %v4687, %v4713
        %v4722 = vmul.f32 %v4688, %v4713
        %v4723 = vmul.f32 %v4689, %v4713
        %v4724 = vmul.f32 %v4690, %v4713
        %v4725 = vmul.f32 %v4691, %v4713
        %v4726 = vmul.f32 %v4692, %v4713
        %v4727 = vmul.f32 %v4693, %v4713
        %v4728 = vmul.f32 %v4694, %v4713
        %v4729 = vmul.f32 %v4695, %v4713
        %v4730 = vmul.f32 %v4696, %v4713
        %v4731 = vmul.f32 %v4697, %v4713
        %v4732 = vmul.f32 %v4698, %v4713
        %v4733 = vmul.f32 %v4699, %v4713
        %v4734 = vmul.f32 %v4700, %v4713
        %v4735 = vmul.f32 %v4701, %v4713
        %v4736 = vmul.f32 %v4702, %v4713
        %v4737 = vmul.f32 %v4703, %v4713
        %v4738 = vmul.f32 %v4704, %v4713
        %v4739 = vmul.f32 %v4705, %v4713
        %v4740 = vmul.f32 %v4706, %v4713
        %v4741 = vmul.f32 %v4707, %v4713
        %v4742 = vmul.f32 %v4708, %v4713
        %v4743 = vmul.f32 %v4709, %v4713
        %v4744 = vmul.f32 %v4710, %v4713
        %v4745 = vmul.f32 %v4711, %v4713
        %v4746 = vld [vmem:[%s7] sm:$0x1]
        %v4748 = vlaneseq
        %v4749 = vshrl.u32 %v4748, 7
        %v4750 = vsub.s32 0, %v4749
        %v4751 = vrot.slane %v4746, %v4750
        %v4753 = vmul.f32 %v4714, %v4751
        %v4754 = vmul.f32 %v4715, %v4751
        %v4755 = vmul.f32 %v4716, %v4751
        %v4756 = vmul.f32 %v4717, %v4751
        %v4757 = vmul.f32 %v4718, %v4751
        %v4758 = vmul.f32 %v4719, %v4751
        %v4759 = vmul.f32 %v4720, %v4751
        %v4760 = vmul.f32 %v4721, %v4751
        %v4761 = vmul.f32 %v4722, %v4751
        %v4762 = vmul.f32 %v4723, %v4751
        %v4763 = vmul.f32 %v4724, %v4751
        %v4764 = vmul.f32 %v4725, %v4751
        %v4765 = vmul.f32 %v4726, %v4751
        %v4766 = vmul.f32 %v4727, %v4751
        %v4767 = vmul.f32 %v4728, %v4751
        %v4768 = vmul.f32 %v4729, %v4751
        %v4769 = vmul.f32 %v4730, %v4751
        %v4770 = vmul.f32 %v4731, %v4751
        %v4771 = vmul.f32 %v4732, %v4751
        %v4772 = vmul.f32 %v4733, %v4751
        %v4773 = vmul.f32 %v4734, %v4751
        %v4774 = vmul.f32 %v4735, %v4751
        %v4775 = vmul.f32 %v4736, %v4751
        %v4776 = vmul.f32 %v4737, %v4751
        %v4777 = vmul.f32 %v4738, %v4751
        %v4778 = vmul.f32 %v4739, %v4751
        %v4779 = vmul.f32 %v4740, %v4751
        %v4780 = vmul.f32 %v4741, %v4751
        %v4781 = vmul.f32 %v4742, %v4751
        %v4782 = vmul.f32 %v4743, %v4751
        %v4783 = vmul.f32 %v4744, %v4751
        %v4784 = vmul.f32 %v4745, %v4751
        %v4785 = vld [vmem:[%s8] sm:$0x1]
        %v4787 = vlaneseq
        %v4788 = vshrl.u32 %v4787, 7
        %v4789 = vsub.s32 0, %v4788
        %v4790 = vrot.slane %v4785, %v4789
        %v4792 = vadd.f32 %v4753, %v4790
        %v4793 = vadd.f32 %v4754, %v4790
        %v4794 = vadd.f32 %v4755, %v4790
        %v4795 = vadd.f32 %v4756, %v4790
        %v4796 = vadd.f32 %v4757, %v4790
        %v4797 = vadd.f32 %v4758, %v4790
        %v4798 = vadd.f32 %v4759, %v4790
        %v4799 = vadd.f32 %v4760, %v4790
        %v4800 = vadd.f32 %v4761, %v4790
        %v4801 = vadd.f32 %v4762, %v4790
        %v4802 = vadd.f32 %v4763, %v4790
        %v4803 = vadd.f32 %v4764, %v4790
        %v4804 = vadd.f32 %v4765, %v4790
        %v4805 = vadd.f32 %v4766, %v4790
        %v4806 = vadd.f32 %v4767, %v4790
        %v4807 = vadd.f32 %v4768, %v4790
        %v4808 = vadd.f32 %v4769, %v4790
        %v4809 = vadd.f32 %v4770, %v4790
        %v4810 = vadd.f32 %v4771, %v4790
        %v4811 = vadd.f32 %v4772, %v4790
        %v4812 = vadd.f32 %v4773, %v4790
        %v4813 = vadd.f32 %v4774, %v4790
        %v4814 = vadd.f32 %v4775, %v4790
        %v4815 = vadd.f32 %v4776, %v4790
        %v4816 = vadd.f32 %v4777, %v4790
        %v4817 = vadd.f32 %v4778, %v4790
        %v4818 = vadd.f32 %v4779, %v4790
        %v4819 = vadd.f32 %v4780, %v4790
        %v4820 = vadd.f32 %v4781, %v4790
        %v4821 = vadd.f32 %v4782, %v4790
        %v4822 = vadd.f32 %v4783, %v4790
        %v4823 = vadd.f32 %v4784, %v4790
        %v4824 = vadd.f32 %v4792, %v381
        %v4825 = vadd.f32 %v4793, %v382
        %v4826 = vadd.f32 %v4794, %v383
        %v4827 = vadd.f32 %v4795, %v384
        %v4828 = vadd.f32 %v4796, %v385
        %v4829 = vadd.f32 %v4797, %v386
        %v4830 = vadd.f32 %v4798, %v387
        %v4831 = vadd.f32 %v4799, %v388
        %v4832 = vadd.f32 %v4800, %v389
        %v4833 = vadd.f32 %v4801, %v390
        %v4834 = vadd.f32 %v4802, %v391
        %v4835 = vadd.f32 %v4803, %v392
        %v4836 = vadd.f32 %v4804, %v393
        %v4837 = vadd.f32 %v4805, %v394
        %v4838 = vadd.f32 %v4806, %v395
        %v4839 = vadd.f32 %v4807, %v396
        %v4840 = vadd.f32 %v4808, %v397
        %v4841 = vadd.f32 %v4809, %v398
        %v4842 = vadd.f32 %v4810, %v399
        %v4843 = vadd.f32 %v4811, %v400
        %v4844 = vadd.f32 %v4812, %v401
        %v4845 = vadd.f32 %v4813, %v402
        %v4846 = vadd.f32 %v4814, %v403
        %v4847 = vadd.f32 %v4815, %v404
        %v4848 = vadd.f32 %v4816, %v405
        %v4849 = vadd.f32 %v4817, %v406
        %v4850 = vadd.f32 %v4818, %v407
        %v4851 = vadd.f32 %v4819, %v408
        %v4852 = vadd.f32 %v4820, %v409
        %v4853 = vadd.f32 %v4821, %v410
        %v4854 = vadd.f32 %v4822, %v411
        %v4855 = vadd.f32 %v4823, %v412
        %4856 = vst [vmem:[%s379] sm:$0xff] %v4824
        %4857 = vst [vmem:[%s379 + $0x8] sm:$0xff] %v4825
        %4858 = vst [vmem:[%s379 + $0x10] sm:$0xff] %v4826
        %4859 = vst [vmem:[%s379 + $0x18] sm:$0xff] %v4827
        %4860 = vst [vmem:[%s379 + $0x20] sm:$0xff] %v4828
        %4861 = vst [vmem:[%s379 + $0x28] sm:$0xff] %v4829
        %4862 = vst [vmem:[%s379 + $0x30] sm:$0xff] %v4830
        %4863 = vst [vmem:[%s379 + $0x38] sm:$0xff] %v4831
        %4864 = vst [vmem:[%s379 + $0x40] sm:$0xff] %v4832
        %4865 = vst [vmem:[%s379 + $0x48] sm:$0xff] %v4833
        %4866 = vst [vmem:[%s379 + $0x50] sm:$0xff] %v4834
        %4867 = vst [vmem:[%s379 + $0x58] sm:$0xff] %v4835
        %4868 = vst [vmem:[%s379 + $0x60] sm:$0xff] %v4836
        %4869 = vst [vmem:[%s379 + $0x68] sm:$0xff] %v4837
        %4870 = vst [vmem:[%s379 + $0x70] sm:$0xff] %v4838
        %4871 = vst [vmem:[%s379 + $0x78] sm:$0xff] %v4839
        %4872 = vst [vmem:[%s379 + $0x80] sm:$0xff] %v4840
        %4873 = vst [vmem:[%s379 + $0x88] sm:$0xff] %v4841
        %4874 = vst [vmem:[%s379 + $0x90] sm:$0xff] %v4842
        %4875 = vst [vmem:[%s379 + $0x98] sm:$0xff] %v4843
        %4876 = vst [vmem:[%s379 + $0xa0] sm:$0xff] %v4844
        %4877 = vst [vmem:[%s379 + $0xa8] sm:$0xff] %v4845
        %4878 = vst [vmem:[%s379 + $0xb0] sm:$0xff] %v4846
        %4879 = vst [vmem:[%s379 + $0xb8] sm:$0xff] %v4847
        %4880 = vst [vmem:[%s379 + $0xc0] sm:$0xff] %v4848
        %4881 = vst [vmem:[%s379 + $0xc8] sm:$0xff] %v4849
        %4882 = vst [vmem:[%s379 + $0xd0] sm:$0xff] %v4850
        %4883 = vst [vmem:[%s379 + $0xd8] sm:$0xff] %v4851
        %4884 = vst [vmem:[%s379 + $0xe0] sm:$0xff] %v4852
        %4885 = vst [vmem:[%s379 + $0xe8] sm:$0xff] %v4853
        %4886 = vst [vmem:[%s379 + $0xf0] sm:$0xff] %v4854
        %4887 = vst [vmem:[%s379 + $0xf8] sm:$0xff] %v4855
        %s4888 = sand.u32 %s229, 1
        %s4889 = scalar_lea.sflag [#allocation4], %s4888
        %s4890 = sand.u32 %s229, 1
        %s4891 = smul.addr %s4890, 256
        %s4892 = scalar_lea.vmem [#allocation8], %s4891
        // Predicated region
        $region69: #{tpu_custom_call.1} parent=55 // pred_check
          %p4893 = pneg %p239
        $region70: #{tpu_custom_call.1} parent=55 // pred_check_branch
          %4895 = sbr.rel (%p4893) target = $region72
        $region71: #{tpu_custom_call.1} parent=55 // pred_region
          %s4897 = ssub.s32 4096, 4096
          %4898 = vsyncadd %s4889, %s4897
          %s4899 = smul.addr %s27, 32
          %s4900 = smul.addr %s4899, 128
          %s4901 = scalar_lea.hbm %s9, %s4900
          %s4902 = sshll.u32 %s4892, 4
          %s4903 = int_to_ptr.vmem [resolvable:$true] %s4902
          %4908 = dma.vmem_to_hbm [thread:$0]  %s4903, 4096, %s4901, %s4889, 128, 128, 8
        $region72: #{tpu_custom_call.1} parent=55 // pred_fallthru
          _
      $region56: #{tpu_custom_call.1} parent=5 // pred_fallthru
        _
      %p4909 = scmp.le.s32.totalorder 2, %s22
      // Predicated region
      $region73: #{tpu_custom_call.1} parent=5 // pred_check
        %p4910 = pneg %p4909
      $region74: #{tpu_custom_call.1} parent=5 // pred_check_branch
        %4912 = sbr.rel (%p4910) target = $region76
      $region75: #{tpu_custom_call.1} parent=5 // pred_region
        %s4913 = ssub.s32 %s22, 2
        // Predicated region
        $region77: #{tpu_custom_call.1} parent=75 // pred_check
          %p4914 = pneg %p245
        $region78: #{tpu_custom_call.1} parent=75 // pred_check_branch
          %4916 = sbr.rel (%p4914) target = $region80
        $region79: #{tpu_custom_call.1} parent=75 // pred_region
          %s4917 = sand.u32 %s230, 1
          %s4918 = scalar_lea.sflag [#allocation4], %s4917
          %s4919 = sand.u32 %s230, 1
          %s4920 = smul.addr %s4919, 256
          %s4921 = scalar_lea.vmem [#allocation8], %s4920
          %4922 = dma.done %s4918, 4096
        $region80: #{tpu_custom_call.1} parent=75 // pred_fallthru
          _
      $region76: #{tpu_custom_call.1} parent=5 // pred_fallthru
        _
    $region6: #{tpu_custom_call.1} parent=1 // loop_footer
      %s26 = sadd.s32 1, %s22
    $region7: #{tpu_custom_call.1} parent=1 // loop_footer_branch
      %21 = sbr.rel target = $region3
    $region8: #{tpu_custom_call.1} parent=1 // loop_exit
      _
    %4923 = vsyncpa [#allocation3], 1
    %s4924 = scalar_lea.sflag [#allocation3], 1
    %4925 = vsyncpa %s4924, 1
    %4926 = vsyncpa [#allocation6], 1
    %4927 = vsyncpa [#allocation4], 1
    %s4928 = scalar_lea.sflag [#allocation4], 1
    %4929 = vsyncpa %s4928, 1

</llo_original>
